<compile_context>
chip_gen: v5e
topology: v5e:2x2
jax: 0.10.0
libtpu: 0.0.40
codegen_flags: <defaults>
</compile_context>

<pallas_src>
import math
from functools import partial

import jax
import jax.numpy as jnp
from jax.experimental import pallas as pl
from jax.experimental.pallas import tpu as pltpu


def attention_block_kernel(x_ref,                       # (N, D) f32   (batch dim squeezed)
                           wqkv_ref, bqkv_ref,          # (D, 3D) bf16, (1, 3D) f32
                           wo_ref, bo_ref,              # (D, D) bf16,  (1, D) f32
                           w1_ref, b1_ref,              # (D, Hff) bf16, (1, Hff) f32
                           w2_ref, b2_ref,              # (Hff, D) bf16, (1, D) f32
                           o_ref,                       # (tq, D)
                           qkv_ref, ctx_ref,            # scratch: (N, 3D) bf16, (tq, D) bf16
                           *, num_heads, tq):
    f32 = jnp.float32
    bf16 = jnp.bfloat16
    N, D = x_ref.shape
    hd = D // num_heads
    qi = pl.program_id(1)

    def layernorm(v):                        # eps=1e-6, elementwise_affine=False, f32 stats
        mu = jnp.mean(v, axis=-1, keepdims=True)
        var = jnp.mean(jnp.square(v - mu), axis=-1, keepdims=True)
        return (v - mu) * jax.lax.rsqrt(var + 1e-6)

    # ---- once per batch element: fused lane-dense QKV projection of the full sequence ----
    @pl.when(qi == 0)
    def _():
        h = layernorm(x_ref[...].astype(f32)).astype(bf16)                    # (N, D)
        qkv = jnp.dot(h, wqkv_ref[...], preferred_element_type=f32) + bqkv_ref[...]
        qkv_ref[...] = qkv.astype(bf16)      # 1/sqrt(hd) already folded into q columns

    row0 = pl.multiple_of(qi * tq, tq)

    # ---- attention for this query tile: static (unrolled) head loop ----
    for hi in range(num_heads):
        c0 = hi * hd                                                          # static
        qh = qkv_ref[pl.ds(row0, tq), pl.ds(c0, hd)]                          # (tq, hd) bf16
        kh = qkv_ref[:, pl.ds(D + c0, hd)]                                    # (N,  hd) bf16
        vh = qkv_ref[:, pl.ds(2 * D + c0, hd)]                                # (N,  hd) bf16

        s = jax.lax.dot_general(qh, kh, (((1,), (1,)), ((), ())),
                                preferred_element_type=f32)                   # (tq, N) f32
        s = s - jnp.max(s, axis=-1, keepdims=True)
        p = jnp.exp(s)
        p = p * pl.reciprocal(jnp.sum(p, axis=-1, keepdims=True), approx=True)

        ctx = jnp.dot(p.astype(bf16), vh, preferred_element_type=f32)         # (tq, hd) f32
        ctx_ref[:, pl.ds(c0, hd)] = ctx.astype(bf16)

    # Single full-depth output projection over the concatenated heads.
    attn = jnp.dot(ctx_ref[...], wo_ref[...], preferred_element_type=f32) + bo_ref[...]
    x_t = x_ref[pl.ds(row0, tq), :].astype(f32)                               # residual rows
    x1 = x_t + attn

    # ---- feed-forward for this query tile ----
    h2 = layernorm(x1).astype(bf16)
    u = jnp.dot(h2, w1_ref[...], preferred_element_type=f32) + b1_ref[...]    # (tq, Hff) f32
    # exact GELU (PyTorch nn.GELU() default, approximate='none'), in f32
    u = 0.5 * u * (1.0 + jax.lax.erf(u * (1.0 / math.sqrt(2.0))))
    ff = jnp.dot(u.astype(bf16), w2_ref[...], preferred_element_type=f32) + b2_ref[...]

    o_ref[...] = (x1 + ff).astype(o_ref.dtype)


def prepare_params(wqkv, bqkv, wo, bo, w1, b1, w2, b2, num_heads):
    """Fold the softmax scale into the q projection and cast weights to bf16.

    Weights stay in lane-dense (in, out) layouts (no per-head reshaping)."""
    D = wqkv.shape[0]
    hd = D // num_heads
    scale = 1.0 / math.sqrt(hd)              # exact in bf16 when hd is a power of two
    col_scale = jnp.concatenate([jnp.full((D,), scale, jnp.float32),
                                 jnp.ones((2 * D,), jnp.float32)])
    wqkv = wqkv * col_scale[None, :]
    bqkv = bqkv * col_scale[None, :]

    bf = lambda a: a.astype(jnp.bfloat16)
    f32 = lambda a: a.astype(jnp.float32)
    return (bf(wqkv), f32(bqkv), bf(wo), f32(bo), bf(w1), f32(b1), bf(w2), f32(b2))


def attention_block(x, kernel_params, num_heads, tq=None):
    B, N, D = x.shape
    wqkv, bqkv, wo, bo, w1, b1, w2, b2 = kernel_params
    Hff = w1.shape[1]

    if tq is None:
        tq = min(N, 256)
    if N % tq != 0:
        tq = N                               # fallback: single query tile
    nq = N // tq

    # Constant-index weights/biases: single-buffered (no pointless double-buffering).
    def wspec(shape):
        n = len(shape)
        return pl.BlockSpec(shape, lambda b, q, _n=n: (0,) * _n,
                            pipeline_mode=pl.Buffered(1))

    # Rough VMEM budget (bytes): bf16 weights (single-buffered) + f32 biases +
    # x/out blocks (double-buffered) + qkv/ctx bf16 scratch + largest live f32
    # activations (scores, GELU buffer, LN temporaries).  Clamped to 64 MiB so the
    # same setting is valid on v7x (64 MiB physical) as well as v5e/v6e (128 MiB).
    est = (2 * (3 * D * D + D * D + 2 * D * Hff)
           + 4 * (5 * D + Hff)
           + 2 * 4 * N * D + 2 * 4 * tq * D
           + 2 * (3 * N * D + tq * D)
           + 4 * (tq * N + tq * Hff + 3 * N * D))
    vmem_limit = int(min(max(est * 3 // 2, 32 * 1024 * 1024), 64 * 1024 * 1024))

    return pl.pallas_call(
        partial(attention_block_kernel, num_heads=num_heads, tq=tq),
        out_shape=jax.ShapeDtypeStruct((B, N, D), x.dtype),
        grid=(B, nq),
        in_specs=[
            # Full sequence per batch element (block index constant across the query
            # tile axis -> DMA'd once per batch element).
            pl.BlockSpec((None, N, D), lambda b, q: (b, 0, 0)),
            wspec(wqkv.shape), wspec(bqkv.shape),
            wspec(wo.shape), wspec(bo.shape),
            wspec(w1.shape), wspec(b1.shape),
            wspec(w2.shape), wspec(b2.shape),
        ],
        out_specs=pl.BlockSpec((None, tq, D), lambda b, q: (b, q, 0)),
        scratch_shapes=[pltpu.VMEM((N, 3 * D), jnp.bfloat16),   # cached q|k|v (per batch elt)
                        pltpu.VMEM((tq, D), jnp.bfloat16)],     # per-tile head-context slab
        compiler_params=pltpu.CompilerParams(
            # batch axis parallel (megacore); query-tile axis sequential so the
            # qkv scratch written at qi==0 is valid for the remaining tiles.
            dimension_semantics=("parallel", "arbitrary"),
            vmem_limit_bytes=vmem_limit,
        ),
    )(x, wqkv, bqkv, wo, bo, w1, b1, w2, b2)


# ---------------- pure-JAX f32 reference (for correctness check) ----------------
def reference(x, params, num_heads):
    wqkv, bqkv, wo, bo, w1, b1, w2, b2 = params
    B, N, D = x.shape
    hd = D // num_heads

    def ln(v):
        mu = jnp.mean(v, -1, keepdims=True)
        var = jnp.mean((v - mu) ** 2, -1, keepdims=True)
        return (v - mu) / jnp.sqrt(var + 1e-6)

    h = ln(x)
    qkv = h @ wqkv + bqkv[0]
    q, k, v = jnp.split(qkv, 3, axis=-1)
    q = q.reshape(B, N, num_heads, hd).transpose(0, 2, 1, 3)
    k = k.reshape(B, N, num_heads, hd).transpose(0, 2, 1, 3)
    v = v.reshape(B, N, num_heads, hd).transpose(0, 2, 1, 3)
    s = jnp.einsum("bhnd,bhmd->bhnm", q, k) / math.sqrt(hd)
    p = jax.nn.softmax(s, axis=-1)
    a = jnp.einsum("bhnm,bhmd->bhnd", p, v).transpose(0, 2, 1, 3).reshape(B, N, D)
    x1 = x + (a @ wo + bo[0])
    h2 = ln(x1)
    u = h2 @ w1 + b1[0]
    u = 0.5 * u * (1.0 + jax.lax.erf(u / math.sqrt(2.0)))
    return x1 + (u @ w2 + b2[0])


if __name__ == "__main__":
    B, N, D, num_heads, mult = 2, 128, 64, 4, 4
    Hff = D * mult                                  # ffn hidden
    tq = 64                                         # 2 query tiles/batch elt -> exercises the grid

    key = jax.random.PRNGKey(0)
    ks = jax.random.split(key, 9)

    def lin_init(k, fan_in, shape):
        bound = 1.0 / math.sqrt(fan_in)
        return jax.random.uniform(k, shape, jnp.float32, -bound, bound)

    x = jax.random.normal(ks[0], (B, N, D), jnp.float32)

    wqkv = lin_init(ks[1], D, (D, 3 * D))           # (in, out) layout
    bqkv = lin_init(ks[2], D, (1, 3 * D))
    wo   = lin_init(ks[3], D, (D, D))
    bo   = lin_init(ks[4], D, (1, D))
    w1   = lin_init(ks[5], D, (D, Hff))
    b1   = lin_init(ks[6], D, (1, Hff))
    w2   = lin_init(ks[7], Hff, (Hff, D))
    b2   = lin_init(ks[8], Hff, (1, D))

    # Weights are stored bf16 in the kernel; use bf16-rounded values in the f32
    # reference so the comparison only measures activation-side rounding.
    bf16_round = lambda a: a.astype(jnp.bfloat16).astype(jnp.float32)
    wqkv, wo, w1, w2 = map(bf16_round, (wqkv, wo, w1, w2))

    ref_params = (wqkv, bqkv, wo, bo, w1, b1, w2, b2)
    kernel_params = prepare_params(*ref_params, num_heads)

    out = attention_block(x, kernel_params, num_heads, tq=tq)
    out = jax.block_until_ready(out)

    ref = reference(x, ref_params, num_heads)
    assert out.shape == (B, N, D)
    assert jnp.allclose(out, ref, atol=3e-2, rtol=3e-2), (
        "mismatch vs JAX reference: max abs err = "
        f"{float(jnp.max(jnp.abs(out - ref)))}")

    print("KERNEL_OK")
</pallas_src>

<mosaic_0001>
module attributes {stable_mosaic.version = 11 : i64} {
  func.func @attention_block_kernel(%arg0: i32, %arg1: i32, %arg2: memref<1x128x64xf32, #tpu.memory_space<vmem>>, %arg3: memref<64x192xbf16, #tpu.memory_space<vmem>>, %arg4: memref<1x192xf32, #tpu.memory_space<vmem>>, %arg5: memref<64x64xbf16, #tpu.memory_space<vmem>>, %arg6: memref<1x64xf32, #tpu.memory_space<vmem>>, %arg7: memref<64x256xbf16, #tpu.memory_space<vmem>>, %arg8: memref<1x256xf32, #tpu.memory_space<vmem>>, %arg9: memref<256x64xbf16, #tpu.memory_space<vmem>>, %arg10: memref<1x64xf32, #tpu.memory_space<vmem>>, %arg11: memref<1x64x64xf32, #tpu.memory_space<vmem>>, %arg12: memref<128x192xbf16, #tpu.memory_space<vmem>>, %arg13: memref<64x64xbf16, #tpu.memory_space<vmem>>) attributes {dimension_semantics = [#tpu.dimension_semantics<parallel>, #tpu.dimension_semantics<arbitrary>], iteration_bounds = array<i64: 2, 2>, scalar_prefetch = 0 : i64, scratch_operands = 2 : i64, tpu.core_type = #tpu.core_type<tc>, window_params = [{transform_indices = @transform_0, window_bounds = array<i64: 1, 128, 64>}, {pipeline_mode = #tpu.pipeline_mode<synchronous>, transform_indices = @transform_1, window_bounds = array<i64: 64, 192>}, {pipeline_mode = #tpu.pipeline_mode<synchronous>, transform_indices = @transform_2, window_bounds = array<i64: 1, 192>}, {pipeline_mode = #tpu.pipeline_mode<synchronous>, transform_indices = @transform_3, window_bounds = array<i64: 64, 64>}, {pipeline_mode = #tpu.pipeline_mode<synchronous>, transform_indices = @transform_4, window_bounds = array<i64: 1, 64>}, {pipeline_mode = #tpu.pipeline_mode<synchronous>, transform_indices = @transform_5, window_bounds = array<i64: 64, 256>}, {pipeline_mode = #tpu.pipeline_mode<synchronous>, transform_indices = @transform_6, window_bounds = array<i64: 1, 256>}, {pipeline_mode = #tpu.pipeline_mode<synchronous>, transform_indices = @transform_7, window_bounds = array<i64: 256, 64>}, {pipeline_mode = #tpu.pipeline_mode<synchronous>, transform_indices = @transform_8, window_bounds = array<i64: 1, 64>}, {transform_indices = @transform_9, window_bounds = array<i64: 1, 64, 64>}]} {
    %c0_i32 = arith.constant 0 : i32
    %0 = arith.cmpi eq, %arg1, %c0_i32 : i32
    %1 = arith.extui %0 : i1 to i32
    %c0_i32_0 = arith.constant 0 : i32
    %2 = arith.cmpi ne, %1, %c0_i32_0 : i32
    scf.if %2 {
      %c0_62 = arith.constant 0 : index
      %c0_63 = arith.constant 0 : index
      %c0_64 = arith.constant 0 : index
      %133 = vector.load %arg2[%c0_62, %c0_63, %c0_64] : memref<1x128x64xf32, #tpu.memory_space<vmem>>, vector<1x128x64xf32>
      %134 = vector.shape_cast %133 : vector<1x128x64xf32> to vector<128x64xf32>
      %cst_65 = arith.constant dense<0.000000e+00> : vector<128xf32>
      %135 = vector.multi_reduction <add>, %134, %cst_65 [1] : vector<128x64xf32> to vector<128xf32>
      %136 = vector.shape_cast %135 : vector<128xf32> to vector<128x1xf32>
      %cst_66 = arith.constant 6.400000e+01 : f32
      %137 = vector.broadcast %cst_66 : f32 to vector<128x1xf32>
      %138 = arith.divf %136, %137 : vector<128x1xf32>
      %139 = vector.broadcast %138 : vector<128x1xf32> to vector<128x64xf32>
      %140 = arith.subf %134, %139 : vector<128x64xf32>
      %141 = arith.mulf %140, %140 : vector<128x64xf32>
      %cst_67 = arith.constant dense<0.000000e+00> : vector<128xf32>
      %142 = vector.multi_reduction <add>, %141, %cst_67 [1] : vector<128x64xf32> to vector<128xf32>
      %143 = vector.shape_cast %142 : vector<128xf32> to vector<128x1xf32>
      %cst_68 = arith.constant 6.400000e+01 : f32
      %144 = vector.broadcast %cst_68 : f32 to vector<128x1xf32>
      %145 = arith.divf %143, %144 : vector<128x1xf32>
      %146 = vector.broadcast %138 : vector<128x1xf32> to vector<128x64xf32>
      %147 = arith.subf %134, %146 : vector<128x64xf32>
      %cst_69 = arith.constant 9.99999997E-7 : f32
      %148 = vector.broadcast %cst_69 : f32 to vector<128x1xf32>
      %149 = arith.addf %145, %148 : vector<128x1xf32>
      %150 = math.rsqrt %149 : vector<128x1xf32>
      %151 = vector.broadcast %150 : vector<128x1xf32> to vector<128x64xf32>
      %152 = arith.mulf %147, %151 : vector<128x64xf32>
      %153 = arith.truncf %152 : vector<128x64xf32> to vector<128x64xbf16>
      %c0_70 = arith.constant 0 : index
      %c0_71 = arith.constant 0 : index
      %154 = vector.load %arg3[%c0_70, %c0_71] : memref<64x192xbf16, #tpu.memory_space<vmem>>, vector<64x192xbf16>
      %cst_72 = arith.constant dense<0.000000e+00> : vector<128x192xf32>
      %155 = tpu.matmul %153, %154, %cst_72 {dimension_numbers = #tpu.dot_dimension_numbers<[1], [0], [0], [1], [0, 0, 1, 1], [], []>} : vector<128x64xbf16>, vector<64x192xbf16>, vector<128x192xf32> -> vector<128x192xf32>
      %c0_73 = arith.constant 0 : index
      %c0_74 = arith.constant 0 : index
      %156 = vector.load %arg4[%c0_73, %c0_74] : memref<1x192xf32, #tpu.memory_space<vmem>>, vector<1x192xf32>
      %157 = vector.broadcast %156 : vector<1x192xf32> to vector<128x192xf32>
      %158 = arith.addf %155, %157 : vector<128x192xf32>
      %159 = arith.truncf %158 : vector<128x192xf32> to vector<128x192xbf16>
      %c0_75 = arith.constant 0 : index
      %c0_76 = arith.constant 0 : index
      %160 = vector.load %arg12[%c0_75, %c0_76] : memref<128x192xbf16, #tpu.memory_space<vmem>>, vector<128x192xbf16>
      tpu.vector_store %arg12[%c0_75, %c0_76], %159 {strides = array<i32>} : memref<128x192xbf16, #tpu.memory_space<vmem>>, vector<128x192xbf16>,
    } else {
    }
    %c64_i32 = arith.constant 64 : i32
    %3 = arith.muli %arg1, %c64_i32 : i32
    %4 = tpu.assume_multiple %3, 64 : i32
    %5 = arith.index_cast %4 : i32 to index
    %c0 = arith.constant 0 : index
    %6 = vector.load %arg12[%5, %c0] : memref<128x192xbf16, #tpu.memory_space<vmem>>, vector<64x16xbf16>
    %c0_1 = arith.constant 0 : index
    %c64 = arith.constant 64 : index
    %7 = vector.load %arg12[%c0_1, %c64] : memref<128x192xbf16, #tpu.memory_space<vmem>>, vector<128x16xbf16>
    %c0_2 = arith.constant 0 : index
    %c128 = arith.constant 128 : index
    %8 = vector.load %arg12[%c0_2, %c128] : memref<128x192xbf16, #tpu.memory_space<vmem>>, vector<128x16xbf16>
    %cst = arith.constant dense<0.000000e+00> : vector<64x128xf32>
    %9 = tpu.matmul %6, %7, %cst {dimension_numbers = #tpu.dot_dimension_numbers<[1], [1], [0], [0], [0, 0, 1, 0], [], []>} : vector<64x16xbf16>, vector<128x16xbf16>, vector<64x128xf32> -> vector<64x128xf32>
    %cst_3 = arith.constant dense<0xFF800000> : vector<64xf32>
    %10 = vector.multi_reduction <maximumf>, %9, %cst_3 [1] : vector<64x128xf32> to vector<64xf32>
    %11 = vector.shape_cast %10 : vector<64xf32> to vector<64x1xf32>
    %12 = vector.broadcast %11 : vector<64x1xf32> to vector<64x128xf32>
    %13 = arith.subf %9, %12 : vector<64x128xf32>
    %14 = math.exp %13 : vector<64x128xf32>
    %cst_4 = arith.constant dense<0.000000e+00> : vector<64xf32>
    %15 = vector.multi_reduction <add>, %14, %cst_4 [1] : vector<64x128xf32> to vector<64xf32>
    %16 = vector.shape_cast %15 : vector<64xf32> to vector<64x1xf32>
    %17 = tpu.reciprocal %16 {approx = true} : vector<64x1xf32> -> vector<64x1xf32>
    %18 = vector.broadcast %17 : vector<64x1xf32> to vector<64x128xf32>
    %19 = arith.mulf %14, %18 : vector<64x128xf32>
    %20 = arith.truncf %19 : vector<64x128xf32> to vector<64x128xbf16>
    %cst_5 = arith.constant dense<0.000000e+00> : vector<64x16xf32>
    %21 = tpu.matmul %20, %8, %cst_5 {dimension_numbers = #tpu.dot_dimension_numbers<[1], [0], [0], [1], [0, 0, 1, 1], [], []>} : vector<64x128xbf16>, vector<128x16xbf16>, vector<64x16xf32> -> vector<64x16xf32>
    %22 = arith.truncf %21 : vector<64x16xf32> to vector<64x16xbf16>
    %c0_6 = arith.constant 0 : index
    %c0_7 = arith.constant 0 : index
    %23 = vector.load %arg13[%c0_6, %c0_7] : memref<64x64xbf16, #tpu.memory_space<vmem>>, vector<64x16xbf16>
    tpu.vector_store %arg13[%c0_6, %c0_7], %22 {strides = array<i32>} : memref<64x64xbf16, #tpu.memory_space<vmem>>, vector<64x16xbf16>,
    %24 = arith.index_cast %4 : i32 to index
    %c16 = arith.constant 16 : index
    %25 = vector.load %arg12[%24, %c16] : memref<128x192xbf16, #tpu.memory_space<vmem>>, vector<64x16xbf16>
    %c0_8 = arith.constant 0 : index
    %c80 = arith.constant 80 : index
    %26 = vector.load %arg12[%c0_8, %c80] : memref<128x192xbf16, #tpu.memory_space<vmem>>, vector<128x16xbf16>
    %c0_9 = arith.constant 0 : index
    %c144 = arith.constant 144 : index
    %27 = vector.load %arg12[%c0_9, %c144] : memref<128x192xbf16, #tpu.memory_space<vmem>>, vector<128x16xbf16>
    %cst_10 = arith.constant dense<0.000000e+00> : vector<64x128xf32>
    %28 = tpu.matmul %25, %26, %cst_10 {dimension_numbers = #tpu.dot_dimension_numbers<[1], [1], [0], [0], [0, 0, 1, 0], [], []>} : vector<64x16xbf16>, vector<128x16xbf16>, vector<64x128xf32> -> vector<64x128xf32>
    %cst_11 = arith.constant dense<0xFF800000> : vector<64xf32>
    %29 = vector.multi_reduction <maximumf>, %28, %cst_11 [1] : vector<64x128xf32> to vector<64xf32>
    %30 = vector.shape_cast %29 : vector<64xf32> to vector<64x1xf32>
    %31 = vector.broadcast %30 : vector<64x1xf32> to vector<64x128xf32>
    %32 = arith.subf %28, %31 : vector<64x128xf32>
    %33 = math.exp %32 : vector<64x128xf32>
    %cst_12 = arith.constant dense<0.000000e+00> : vector<64xf32>
    %34 = vector.multi_reduction <add>, %33, %cst_12 [1] : vector<64x128xf32> to vector<64xf32>
    %35 = vector.shape_cast %34 : vector<64xf32> to vector<64x1xf32>
    %36 = tpu.reciprocal %35 {approx = true} : vector<64x1xf32> -> vector<64x1xf32>
    %37 = vector.broadcast %36 : vector<64x1xf32> to vector<64x128xf32>
    %38 = arith.mulf %33, %37 : vector<64x128xf32>
    %39 = arith.truncf %38 : vector<64x128xf32> to vector<64x128xbf16>
    %cst_13 = arith.constant dense<0.000000e+00> : vector<64x16xf32>
    %40 = tpu.matmul %39, %27, %cst_13 {dimension_numbers = #tpu.dot_dimension_numbers<[1], [0], [0], [1], [0, 0, 1, 1], [], []>} : vector<64x128xbf16>, vector<128x16xbf16>, vector<64x16xf32> -> vector<64x16xf32>
    %41 = arith.truncf %40 : vector<64x16xf32> to vector<64x16xbf16>
    %c0_14 = arith.constant 0 : index
    %c16_15 = arith.constant 16 : index
    %42 = vector.load %arg13[%c0_14, %c16_15] : memref<64x64xbf16, #tpu.memory_space<vmem>>, vector<64x16xbf16>
    tpu.vector_store %arg13[%c0_14, %c16_15], %41 {strides = array<i32>} : memref<64x64xbf16, #tpu.memory_space<vmem>>, vector<64x16xbf16>,
    %43 = arith.index_cast %4 : i32 to index
    %c32 = arith.constant 32 : index
    %44 = vector.load %arg12[%43, %c32] : memref<128x192xbf16, #tpu.memory_space<vmem>>, vector<64x16xbf16>
    %c0_16 = arith.constant 0 : index
    %c96 = arith.constant 96 : index
    %45 = vector.load %arg12[%c0_16, %c96] : memref<128x192xbf16, #tpu.memory_space<vmem>>, vector<128x16xbf16>
    %c0_17 = arith.constant 0 : index
    %c160 = arith.constant 160 : index
    %46 = vector.load %arg12[%c0_17, %c160] : memref<128x192xbf16, #tpu.memory_space<vmem>>, vector<128x16xbf16>
    %cst_18 = arith.constant dense<0.000000e+00> : vector<64x128xf32>
    %47 = tpu.matmul %44, %45, %cst_18 {dimension_numbers = #tpu.dot_dimension_numbers<[1], [1], [0], [0], [0, 0, 1, 0], [], []>} : vector<64x16xbf16>, vector<128x16xbf16>, vector<64x128xf32> -> vector<64x128xf32>
    %cst_19 = arith.constant dense<0xFF800000> : vector<64xf32>
    %48 = vector.multi_reduction <maximumf>, %47, %cst_19 [1] : vector<64x128xf32> to vector<64xf32>
    %49 = vector.shape_cast %48 : vector<64xf32> to vector<64x1xf32>
    %50 = vector.broadcast %49 : vector<64x1xf32> to vector<64x128xf32>
    %51 = arith.subf %47, %50 : vector<64x128xf32>
    %52 = math.exp %51 : vector<64x128xf32>
    %cst_20 = arith.constant dense<0.000000e+00> : vector<64xf32>
    %53 = vector.multi_reduction <add>, %52, %cst_20 [1] : vector<64x128xf32> to vector<64xf32>
    %54 = vector.shape_cast %53 : vector<64xf32> to vector<64x1xf32>
    %55 = tpu.reciprocal %54 {approx = true} : vector<64x1xf32> -> vector<64x1xf32>
    %56 = vector.broadcast %55 : vector<64x1xf32> to vector<64x128xf32>
    %57 = arith.mulf %52, %56 : vector<64x128xf32>
    %58 = arith.truncf %57 : vector<64x128xf32> to vector<64x128xbf16>
    %cst_21 = arith.constant dense<0.000000e+00> : vector<64x16xf32>
    %59 = tpu.matmul %58, %46, %cst_21 {dimension_numbers = #tpu.dot_dimension_numbers<[1], [0], [0], [1], [0, 0, 1, 1], [], []>} : vector<64x128xbf16>, vector<128x16xbf16>, vector<64x16xf32> -> vector<64x16xf32>
    %60 = arith.truncf %59 : vector<64x16xf32> to vector<64x16xbf16>
    %c0_22 = arith.constant 0 : index
    %c32_23 = arith.constant 32 : index
    %61 = vector.load %arg13[%c0_22, %c32_23] : memref<64x64xbf16, #tpu.memory_space<vmem>>, vector<64x16xbf16>
    tpu.vector_store %arg13[%c0_22, %c32_23], %60 {strides = array<i32>} : memref<64x64xbf16, #tpu.memory_space<vmem>>, vector<64x16xbf16>,
    %62 = arith.index_cast %4 : i32 to index
    %c48 = arith.constant 48 : index
    %63 = vector.load %arg12[%62, %c48] : memref<128x192xbf16, #tpu.memory_space<vmem>>, vector<64x16xbf16>
    %c0_24 = arith.constant 0 : index
    %c112 = arith.constant 112 : index
    %64 = vector.load %arg12[%c0_24, %c112] : memref<128x192xbf16, #tpu.memory_space<vmem>>, vector<128x16xbf16>
    %c0_25 = arith.constant 0 : index
    %c176 = arith.constant 176 : index
    %65 = vector.load %arg12[%c0_25, %c176] : memref<128x192xbf16, #tpu.memory_space<vmem>>, vector<128x16xbf16>
    %cst_26 = arith.constant dense<0.000000e+00> : vector<64x128xf32>
    %66 = tpu.matmul %63, %64, %cst_26 {dimension_numbers = #tpu.dot_dimension_numbers<[1], [1], [0], [0], [0, 0, 1, 0], [], []>} : vector<64x16xbf16>, vector<128x16xbf16>, vector<64x128xf32> -> vector<64x128xf32>
    %cst_27 = arith.constant dense<0xFF800000> : vector<64xf32>
    %67 = vector.multi_reduction <maximumf>, %66, %cst_27 [1] : vector<64x128xf32> to vector<64xf32>
    %68 = vector.shape_cast %67 : vector<64xf32> to vector<64x1xf32>
    %69 = vector.broadcast %68 : vector<64x1xf32> to vector<64x128xf32>
    %70 = arith.subf %66, %69 : vector<64x128xf32>
    %71 = math.exp %70 : vector<64x128xf32>
    %cst_28 = arith.constant dense<0.000000e+00> : vector<64xf32>
    %72 = vector.multi_reduction <add>, %71, %cst_28 [1] : vector<64x128xf32> to vector<64xf32>
    %73 = vector.shape_cast %72 : vector<64xf32> to vector<64x1xf32>
    %74 = tpu.reciprocal %73 {approx = true} : vector<64x1xf32> -> vector<64x1xf32>
    %75 = vector.broadcast %74 : vector<64x1xf32> to vector<64x128xf32>
    %76 = arith.mulf %71, %75 : vector<64x128xf32>
    %77 = arith.truncf %76 : vector<64x128xf32> to vector<64x128xbf16>
    %cst_29 = arith.constant dense<0.000000e+00> : vector<64x16xf32>
    %78 = tpu.matmul %77, %65, %cst_29 {dimension_numbers = #tpu.dot_dimension_numbers<[1], [0], [0], [1], [0, 0, 1, 1], [], []>} : vector<64x128xbf16>, vector<128x16xbf16>, vector<64x16xf32> -> vector<64x16xf32>
    %79 = arith.truncf %78 : vector<64x16xf32> to vector<64x16xbf16>
    %c0_30 = arith.constant 0 : index
    %c48_31 = arith.constant 48 : index
    %80 = vector.load %arg13[%c0_30, %c48_31] : memref<64x64xbf16, #tpu.memory_space<vmem>>, vector<64x16xbf16>
    tpu.vector_store %arg13[%c0_30, %c48_31], %79 {strides = array<i32>} : memref<64x64xbf16, #tpu.memory_space<vmem>>, vector<64x16xbf16>,
    %c0_32 = arith.constant 0 : index
    %c0_33 = arith.constant 0 : index
    %81 = vector.load %arg13[%c0_32, %c0_33] : memref<64x64xbf16, #tpu.memory_space<vmem>>, vector<64x64xbf16>
    %c0_34 = arith.constant 0 : index
    %c0_35 = arith.constant 0 : index
    %82 = vector.load %arg5[%c0_34, %c0_35] : memref<64x64xbf16, #tpu.memory_space<vmem>>, vector<64x64xbf16>
    %cst_36 = arith.constant dense<0.000000e+00> : vector<64x64xf32>
    %83 = tpu.matmul %81, %82, %cst_36 {dimension_numbers = #tpu.dot_dimension_numbers<[1], [0], [0], [1], [0, 0, 1, 1], [], []>} : vector<64x64xbf16>, vector<64x64xbf16>, vector<64x64xf32> -> vector<64x64xf32>
    %c0_37 = arith.constant 0 : index
    %c0_38 = arith.constant 0 : index
    %84 = vector.load %arg6[%c0_37, %c0_38] : memref<1x64xf32, #tpu.memory_space<vmem>>, vector<1x64xf32>
    %85 = vector.broadcast %84 : vector<1x64xf32> to vector<64x64xf32>
    %86 = arith.addf %83, %85 : vector<64x64xf32>
    %c0_39 = arith.constant 0 : index
    %87 = arith.index_cast %4 : i32 to index
    %c0_40 = arith.constant 0 : index
    %88 = vector.load %arg2[%c0_39, %87, %c0_40] : memref<1x128x64xf32, #tpu.memory_space<vmem>>, vector<1x64x64xf32>
    %89 = vector.shape_cast %88 : vector<1x64x64xf32> to vector<64x64xf32>
    %90 = arith.addf %89, %86 : vector<64x64xf32>
    %cst_41 = arith.constant dense<0.000000e+00> : vector<64xf32>
    %91 = vector.multi_reduction <add>, %90, %cst_41 [1] : vector<64x64xf32> to vector<64xf32>
    %92 = vector.shape_cast %91 : vector<64xf32> to vector<64x1xf32>
    %cst_42 = arith.constant 6.400000e+01 : f32
    %93 = vector.broadcast %cst_42 : f32 to vector<64x1xf32>
    %94 = arith.divf %92, %93 : vector<64x1xf32>
    %95 = vector.broadcast %94 : vector<64x1xf32> to vector<64x64xf32>
    %96 = arith.subf %90, %95 : vector<64x64xf32>
    %97 = arith.mulf %96, %96 : vector<64x64xf32>
    %cst_43 = arith.constant dense<0.000000e+00> : vector<64xf32>
    %98 = vector.multi_reduction <add>, %97, %cst_43 [1] : vector<64x64xf32> to vector<64xf32>
    %99 = vector.shape_cast %98 : vector<64xf32> to vector<64x1xf32>
    %cst_44 = arith.constant 6.400000e+01 : f32
    %100 = vector.broadcast %cst_44 : f32 to vector<64x1xf32>
    %101 = arith.divf %99, %100 : vector<64x1xf32>
    %102 = vector.broadcast %94 : vector<64x1xf32> to vector<64x64xf32>
    %103 = arith.subf %90, %102 : vector<64x64xf32>
    %cst_45 = arith.constant 9.99999997E-7 : f32
    %104 = vector.broadcast %cst_45 : f32 to vector<64x1xf32>
    %105 = arith.addf %101, %104 : vector<64x1xf32>
    %106 = math.rsqrt %105 : vector<64x1xf32>
    %107 = vector.broadcast %106 : vector<64x1xf32> to vector<64x64xf32>
    %108 = arith.mulf %103, %107 : vector<64x64xf32>
    %109 = arith.truncf %108 : vector<64x64xf32> to vector<64x64xbf16>
    %c0_46 = arith.constant 0 : index
    %c0_47 = arith.constant 0 : index
    %110 = vector.load %arg7[%c0_46, %c0_47] : memref<64x256xbf16, #tpu.memory_space<vmem>>, vector<64x256xbf16>
    %cst_48 = arith.constant dense<0.000000e+00> : vector<64x256xf32>
    %111 = tpu.matmul %109, %110, %cst_48 {dimension_numbers = #tpu.dot_dimension_numbers<[1], [0], [0], [1], [0, 0, 1, 1], [], []>} : vector<64x64xbf16>, vector<64x256xbf16>, vector<64x256xf32> -> vector<64x256xf32>
    %c0_49 = arith.constant 0 : index
    %c0_50 = arith.constant 0 : index
    %112 = vector.load %arg8[%c0_49, %c0_50] : memref<1x256xf32, #tpu.memory_space<vmem>>, vector<1x256xf32>
    %113 = vector.broadcast %112 : vector<1x256xf32> to vector<64x256xf32>
    %114 = arith.addf %111, %113 : vector<64x256xf32>
    %cst_51 = arith.constant 5.000000e-01 : f32
    %115 = vector.broadcast %cst_51 : f32 to vector<64x256xf32>
    %116 = arith.mulf %115, %114 : vector<64x256xf32>
    %cst_52 = arith.constant 0.707106769 : f32
    %117 = vector.broadcast %cst_52 : f32 to vector<64x256xf32>
    %118 = arith.mulf %114, %117 : vector<64x256xf32>
    %119 = math.erf %118 : vector<64x256xf32>
    %cst_53 = arith.constant 1.000000e+00 : f32
    %120 = vector.broadcast %cst_53 : f32 to vector<64x256xf32>
    %121 = arith.addf %120, %119 : vector<64x256xf32>
    %122 = arith.mulf %116, %121 : vector<64x256xf32>
    %123 = arith.truncf %122 : vector<64x256xf32> to vector<64x256xbf16>
    %c0_54 = arith.constant 0 : index
    %c0_55 = arith.constant 0 : index
    %124 = vector.load %arg9[%c0_54, %c0_55] : memref<256x64xbf16, #tpu.memory_space<vmem>>, vector<256x64xbf16>
    %cst_56 = arith.constant dense<0.000000e+00> : vector<64x64xf32>
    %125 = tpu.matmul %123, %124, %cst_56 {dimension_numbers = #tpu.dot_dimension_numbers<[1], [0], [0], [1], [0, 0, 1, 1], [], []>} : vector<64x256xbf16>, vector<256x64xbf16>, vector<64x64xf32> -> vector<64x64xf32>
    %c0_57 = arith.constant 0 : index
    %c0_58 = arith.constant 0 : index
    %126 = vector.load %arg10[%c0_57, %c0_58] : memref<1x64xf32, #tpu.memory_space<vmem>>, vector<1x64xf32>
    %127 = vector.broadcast %126 : vector<1x64xf32> to vector<64x64xf32>
    %128 = arith.addf %125, %127 : vector<64x64xf32>
    %129 = arith.addf %90, %128 : vector<64x64xf32>
    %c0_59 = arith.constant 0 : index
    %c0_60 = arith.constant 0 : index
    %c0_61 = arith.constant 0 : index
    %130 = vector.load %arg11[%c0_59, %c0_60, %c0_61] : memref<1x64x64xf32, #tpu.memory_space<vmem>>, vector<1x64x64xf32>
    %131 = vector.shape_cast %130 : vector<1x64x64xf32> to vector<64x64xf32>
    %132 = vector.shape_cast %129 : vector<64x64xf32> to vector<1x64x64xf32>
    tpu.vector_store %arg11[%c0_59, %c0_60, %c0_61], %132 {strides = array<i32>} : memref<1x64x64xf32, #tpu.memory_space<vmem>>, vector<1x64x64xf32>,
    return
  }
  func.func @transform_0(%arg0: i32, %arg1: i32) -> (i32, i32, i32) {
    %c0_i32 = arith.constant 0 : i32
    %c0_i32_0 = arith.constant 0 : i32
    %c0_i32_1 = arith.constant 0 : i32
    return %arg0, %c0_i32, %c0_i32_0 : i32, i32, i32
  }
  func.func @transform_1(%arg0: i32, %arg1: i32) -> (i32, i32) {
    %c0_i32 = arith.constant 0 : i32
    %c0_i32_0 = arith.constant 0 : i32
    %c0_i32_1 = arith.constant 0 : i32
    return %c0_i32, %c0_i32_0 : i32, i32
  }
  func.func @transform_2(%arg0: i32, %arg1: i32) -> (i32, i32) {
    %c0_i32 = arith.constant 0 : i32
    %c0_i32_0 = arith.constant 0 : i32
    %c0_i32_1 = arith.constant 0 : i32
    return %c0_i32, %c0_i32_0 : i32, i32
  }
  func.func @transform_3(%arg0: i32, %arg1: i32) -> (i32, i32) {
    %c0_i32 = arith.constant 0 : i32
    %c0_i32_0 = arith.constant 0 : i32
    %c0_i32_1 = arith.constant 0 : i32
    return %c0_i32, %c0_i32_0 : i32, i32
  }
  func.func @transform_4(%arg0: i32, %arg1: i32) -> (i32, i32) {
    %c0_i32 = arith.constant 0 : i32
    %c0_i32_0 = arith.constant 0 : i32
    %c0_i32_1 = arith.constant 0 : i32
    return %c0_i32, %c0_i32_0 : i32, i32
  }
  func.func @transform_5(%arg0: i32, %arg1: i32) -> (i32, i32) {
    %c0_i32 = arith.constant 0 : i32
    %c0_i32_0 = arith.constant 0 : i32
    %c0_i32_1 = arith.constant 0 : i32
    return %c0_i32, %c0_i32_0 : i32, i32
  }
  func.func @transform_6(%arg0: i32, %arg1: i32) -> (i32, i32) {
    %c0_i32 = arith.constant 0 : i32
    %c0_i32_0 = arith.constant 0 : i32
    %c0_i32_1 = arith.constant 0 : i32
    return %c0_i32, %c0_i32_0 : i32, i32
  }
  func.func @transform_7(%arg0: i32, %arg1: i32) -> (i32, i32) {
    %c0_i32 = arith.constant 0 : i32
    %c0_i32_0 = arith.constant 0 : i32
    %c0_i32_1 = arith.constant 0 : i32
    return %c0_i32, %c0_i32_0 : i32, i32
  }
  func.func @transform_8(%arg0: i32, %arg1: i32) -> (i32, i32) {
    %c0_i32 = arith.constant 0 : i32
    %c0_i32_0 = arith.constant 0 : i32
    %c0_i32_1 = arith.constant 0 : i32
    return %c0_i32, %c0_i32_0 : i32, i32
  }
  func.func @transform_9(%arg0: i32, %arg1: i32) -> (i32, i32, i32) {
    %c0_i32 = arith.constant 0 : i32
    %c0_i32_0 = arith.constant 0 : i32
    return %arg0, %arg1, %c0_i32 : i32, i32, i32
  }
}

</mosaic_0001>

<llo_original>
// kernel: tpu_custom_call.1
$region0: #{tpu_custom_call.1}
  #allocation0 [shape = 'u32[]', space=smem, size = 0x4, offset = 0x4, fixed_abs, tag = 'smem constant byte address 0x4 - core index']
  #allocation1 [shape = 'u32[72,128]{1,0:T(1,128)}', space=vmem, size = 0x9000, scoped, tag = 'internal scratch']
  #allocation2 [shape = 'bf16[128,192]{1,0:T(8,128)(2,1)}', space=vmem, size = 0x10000, scoped, tag = 'scratch operand']
  #allocation3 [shape = 'bf16[64,64]{1,0:T(8,128)(2,1)}', space=vmem, size = 0x4000, scoped, tag = 'scratch operand']
  %s0 = inlined_call_operand.vmem [shape: f32[2,128,64], index: 0, kind: input, shape index: {}]
  %s1 = inlined_call_operand.vmem [shape: bf16[64,192], index: 1, kind: input, shape index: {}]
  %s2 = inlined_call_operand.vmem [shape: f32[1,192], index: 2, kind: input, shape index: {}]
  %s3 = inlined_call_operand.vmem [shape: bf16[64,64], index: 3, kind: input, shape index: {}]
  %s4 = inlined_call_operand.vmem [shape: f32[1,64], index: 4, kind: input, shape index: {}]
  %s5 = inlined_call_operand.vmem [shape: bf16[64,256], index: 5, kind: input, shape index: {}]
  %s6 = inlined_call_operand.vmem [shape: f32[1,256], index: 6, kind: input, shape index: {}]
  %s7 = inlined_call_operand.vmem [shape: bf16[256,64], index: 7, kind: input, shape index: {}]
  %s8 = inlined_call_operand.vmem [shape: f32[1,64], index: 8, kind: input, shape index: {}]
  %s9 = inlined_call_operand.vmem [shape: f32[2,128,64], index: 9, kind: output, shape index: {}]
  %s10 = sld [smem:[#allocation0]]
  $region73: #{tpu_custom_call.1} parent=0
    _
  %s12 = ssub.s32 1, %s10
  %s13 = scalar_select 0, %s12, %s10
  loop: start=0, step=1, limit=6
  $region2: #{tpu_custom_call.1} parent=0 // loop_pre_header
    _
  $region3: #{tpu_custom_call.1} parent=0 // loop_header
    %s15 = sphi 0, %s19
    %p16 = scmp.ge.s32.totalorder %s15, 6
    %s22 = sphi 0, %s34
    %s23 = sphi 0, %s30
    %s24 = sphi 0, %s22
    %s25 = sphi 0, %s23
    %s26 = sphi 0, %s24
    %s27 = sphi 0, %s25
    %s37 = sphi 0, %s39
    %s40 = sphi 0, %s37
    %s41 = sphi 0, %s40
    %s57 = sphi 0, %s41
    %s61 = sphi 0, %s61
    %s63 = sphi 0, %s61
    %s64 = sphi 0, %s63
    %s78 = sphi 0, %s64
    %s82 = sphi 0, %s82
    %s84 = sphi 0, %s82
    %s85 = sphi 0, %s84
    %s99 = sphi 0, %s85
    %s103 = sphi 0, %s103
    %s105 = sphi 0, %s103
    %s106 = sphi 0, %s105
    %s120 = sphi 0, %s106
    %s124 = sphi 0, %s124
    %s126 = sphi 0, %s124
    %s127 = sphi 0, %s126
    %s141 = sphi 0, %s127
    %s145 = sphi 0, %s145
    %s147 = sphi 0, %s145
    %s148 = sphi 0, %s147
    %s162 = sphi 0, %s148
    %s166 = sphi 0, %s166
    %s168 = sphi 0, %s166
    %s169 = sphi 0, %s168
    %s183 = sphi 0, %s169
    %s187 = sphi 0, %s187
    %s189 = sphi 0, %s187
    %s190 = sphi 0, %s189
    %s204 = sphi 0, %s190
    %s208 = sphi 0, %s208
    %s210 = sphi 0, %s208
    %s211 = sphi 0, %s210
    %s225 = sphi 0, %s211
    %s233 = sphi 0, %s235
    %s236 = sphi 0, %s233
    %s237 = sphi 0, %s236
    %s253 = sphi 0, %s237
  $region4: #{tpu_custom_call.1} parent=0 // loop_header_branch
    %18 = sbr.rel (%p16) target = $region8
  $region5: #{tpu_custom_call.1} parent=0 // loop_body
    %s20 = ssub.s32 %s15, 1
    %s21 = ssub.s32 %s15, 2
    %s28 = sadd.s32 1, %s23
    %p29 = scmp.ge.s32.totalorder %s28, 2
    %s30 = scalar_select %p29, 0, %s28
    %s31 = sadd.s32 1, %s22
    %s32 = scalar_select %p29, %s31, %s22
    %p33 = scmp.ge.s32.totalorder %s32, 2
    %s34 = scalar_select %p33, 0, %s32
    %s35 = ssub.s32 %s22, %s34
    %p36 = scmp.eq.s32.totalorder %s35, 0
    %s38 = sadd.s32 %s37, 1
    %s39 = scalar_select %p36, %s37, %s38
    %p42 = pneg %p36
    %p43 = scmp.eq.s32.totalorder %s15, 3
    %p44 = por %p42, %p43
    %p45 = scmp.ne.s32.totalorder %s37, %s40
    %p46 = scmp.eq.s32.totalorder %s15, 0
    %p47 = por %p45, %p46
    %p48 = scmp.ne.s32.totalorder %s37, %s40
    %p49 = scmp.eq.s32.totalorder %s20, 3
    %p50 = por %p48, %p49
    %p51 = scmp.ne.s32.totalorder %s40, %s41
    %p52 = scmp.eq.s32.totalorder %s20, 0
    %p53 = por %p51, %p52
    %p54 = scmp.ne.s32.totalorder %s40, %s41
    %p55 = scmp.eq.s32.totalorder %s21, 3
    %p56 = por %p54, %p55
    %p58 = scmp.ne.s32.totalorder %s41, %s57
    %p59 = scmp.eq.s32.totalorder %s21, 0
    %p60 = por %p58, %p59
    %s62 = sadd.s32 %s61, 1
    %p65 = scmp.eq.s32.totalorder %s15, 3
    %p66 = scmp.ne.s32.totalorder %s61, %s63
    %p67 = scmp.eq.s32.totalorder %s15, 0
    %p68 = por %p66, %p67
    %p69 = scmp.ne.s32.totalorder %s61, %s63
    %p70 = scmp.eq.s32.totalorder %s20, 3
    %p71 = por %p69, %p70
    %p72 = scmp.ne.s32.totalorder %s63, %s64
    %p73 = scmp.eq.s32.totalorder %s20, 0
    %p74 = por %p72, %p73
    %p75 = scmp.ne.s32.totalorder %s63, %s64
    %p76 = scmp.eq.s32.totalorder %s21, 3
    %p77 = por %p75, %p76
    %p79 = scmp.ne.s32.totalorder %s64, %s78
    %p80 = scmp.eq.s32.totalorder %s21, 0
    %p81 = por %p79, %p80
    %s83 = sadd.s32 %s82, 1
    %p86 = scmp.eq.s32.totalorder %s15, 3
    %p87 = scmp.ne.s32.totalorder %s82, %s84
    %p88 = scmp.eq.s32.totalorder %s15, 0
    %p89 = por %p87, %p88
    %p90 = scmp.ne.s32.totalorder %s82, %s84
    %p91 = scmp.eq.s32.totalorder %s20, 3
    %p92 = por %p90, %p91
    %p93 = scmp.ne.s32.totalorder %s84, %s85
    %p94 = scmp.eq.s32.totalorder %s20, 0
    %p95 = por %p93, %p94
    %p96 = scmp.ne.s32.totalorder %s84, %s85
    %p97 = scmp.eq.s32.totalorder %s21, 3
    %p98 = por %p96, %p97
    %p100 = scmp.ne.s32.totalorder %s85, %s99
    %p101 = scmp.eq.s32.totalorder %s21, 0
    %p102 = por %p100, %p101
    %s104 = sadd.s32 %s103, 1
    %p107 = scmp.eq.s32.totalorder %s15, 3
    %p108 = scmp.ne.s32.totalorder %s103, %s105
    %p109 = scmp.eq.s32.totalorder %s15, 0
    %p110 = por %p108, %p109
    %p111 = scmp.ne.s32.totalorder %s103, %s105
    %p112 = scmp.eq.s32.totalorder %s20, 3
    %p113 = por %p111, %p112
    %p114 = scmp.ne.s32.totalorder %s105, %s106
    %p115 = scmp.eq.s32.totalorder %s20, 0
    %p116 = por %p114, %p115
    %p117 = scmp.ne.s32.totalorder %s105, %s106
    %p118 = scmp.eq.s32.totalorder %s21, 3
    %p119 = por %p117, %p118
    %p121 = scmp.ne.s32.totalorder %s106, %s120
    %p122 = scmp.eq.s32.totalorder %s21, 0
    %p123 = por %p121, %p122
    %s125 = sadd.s32 %s124, 1
    %p128 = scmp.eq.s32.totalorder %s15, 3
    %p129 = scmp.ne.s32.totalorder %s124, %s126
    %p130 = scmp.eq.s32.totalorder %s15, 0
    %p131 = por %p129, %p130
    %p132 = scmp.ne.s32.totalorder %s124, %s126
    %p133 = scmp.eq.s32.totalorder %s20, 3
    %p134 = por %p132, %p133
    %p135 = scmp.ne.s32.totalorder %s126, %s127
    %p136 = scmp.eq.s32.totalorder %s20, 0
    %p137 = por %p135, %p136
    %p138 = scmp.ne.s32.totalorder %s126, %s127
    %p139 = scmp.eq.s32.totalorder %s21, 3
    %p140 = por %p138, %p139
    %p142 = scmp.ne.s32.totalorder %s127, %s141
    %p143 = scmp.eq.s32.totalorder %s21, 0
    %p144 = por %p142, %p143
    %s146 = sadd.s32 %s145, 1
    %p149 = scmp.eq.s32.totalorder %s15, 3
    %p150 = scmp.ne.s32.totalorder %s145, %s147
    %p151 = scmp.eq.s32.totalorder %s15, 0
    %p152 = por %p150, %p151
    %p153 = scmp.ne.s32.totalorder %s145, %s147
    %p154 = scmp.eq.s32.totalorder %s20, 3
    %p155 = por %p153, %p154
    %p156 = scmp.ne.s32.totalorder %s147, %s148
    %p157 = scmp.eq.s32.totalorder %s20, 0
    %p158 = por %p156, %p157
    %p159 = scmp.ne.s32.totalorder %s147, %s148
    %p160 = scmp.eq.s32.totalorder %s21, 3
    %p161 = por %p159, %p160
    %p163 = scmp.ne.s32.totalorder %s148, %s162
    %p164 = scmp.eq.s32.totalorder %s21, 0
    %p165 = por %p163, %p164
    %s167 = sadd.s32 %s166, 1
    %p170 = scmp.eq.s32.totalorder %s15, 3
    %p171 = scmp.ne.s32.totalorder %s166, %s168
    %p172 = scmp.eq.s32.totalorder %s15, 0
    %p173 = por %p171, %p172
    %p174 = scmp.ne.s32.totalorder %s166, %s168
    %p175 = scmp.eq.s32.totalorder %s20, 3
    %p176 = por %p174, %p175
    %p177 = scmp.ne.s32.totalorder %s168, %s169
    %p178 = scmp.eq.s32.totalorder %s20, 0
    %p179 = por %p177, %p178
    %p180 = scmp.ne.s32.totalorder %s168, %s169
    %p181 = scmp.eq.s32.totalorder %s21, 3
    %p182 = por %p180, %p181
    %p184 = scmp.ne.s32.totalorder %s169, %s183
    %p185 = scmp.eq.s32.totalorder %s21, 0
    %p186 = por %p184, %p185
    %s188 = sadd.s32 %s187, 1
    %p191 = scmp.eq.s32.totalorder %s15, 3
    %p192 = scmp.ne.s32.totalorder %s187, %s189
    %p193 = scmp.eq.s32.totalorder %s15, 0
    %p194 = por %p192, %p193
    %p195 = scmp.ne.s32.totalorder %s187, %s189
    %p196 = scmp.eq.s32.totalorder %s20, 3
    %p197 = por %p195, %p196
    %p198 = scmp.ne.s32.totalorder %s189, %s190
    %p199 = scmp.eq.s32.totalorder %s20, 0
    %p200 = por %p198, %p199
    %p201 = scmp.ne.s32.totalorder %s189, %s190
    %p202 = scmp.eq.s32.totalorder %s21, 3
    %p203 = por %p201, %p202
    %p205 = scmp.ne.s32.totalorder %s190, %s204
    %p206 = scmp.eq.s32.totalorder %s21, 0
    %p207 = por %p205, %p206
    %s209 = sadd.s32 %s208, 1
    %p212 = scmp.eq.s32.totalorder %s15, 3
    %p213 = scmp.ne.s32.totalorder %s208, %s210
    %p214 = scmp.eq.s32.totalorder %s15, 0
    %p215 = por %p213, %p214
    %p216 = scmp.ne.s32.totalorder %s208, %s210
    %p217 = scmp.eq.s32.totalorder %s20, 3
    %p218 = por %p216, %p217
    %p219 = scmp.ne.s32.totalorder %s210, %s211
    %p220 = scmp.eq.s32.totalorder %s20, 0
    %p221 = por %p219, %p220
    %p222 = scmp.ne.s32.totalorder %s210, %s211
    %p223 = scmp.eq.s32.totalorder %s21, 3
    %p224 = por %p222, %p223
    %p226 = scmp.ne.s32.totalorder %s211, %s225
    %p227 = scmp.eq.s32.totalorder %s21, 0
    %p228 = por %p226, %p227
    %s229 = ssub.s32 %s22, %s34
    %s230 = ssub.s32 %s23, %s30
    %s231 = sor.u32 %s229, %s230
    %p232 = scmp.eq.s32.totalorder %s231, 0
    %s234 = sadd.s32 %s233, 1
    %s235 = scalar_select %p232, %s233, %s234
    %p238 = pneg %p232
    %p239 = scmp.eq.s32.totalorder %s15, 3
    %p240 = por %p238, %p239
    %p241 = scmp.ne.s32.totalorder %s233, %s236
    %p242 = scmp.eq.s32.totalorder %s15, 0
    %p243 = por %p241, %p242
    %p244 = scmp.ne.s32.totalorder %s233, %s236
    %p245 = scmp.eq.s32.totalorder %s20, 3
    %p246 = por %p244, %p245
    %p247 = scmp.ne.s32.totalorder %s236, %s237
    %p248 = scmp.eq.s32.totalorder %s20, 0
    %p249 = por %p247, %p248
    %p250 = scmp.ne.s32.totalorder %s236, %s237
    %p251 = scmp.eq.s32.totalorder %s21, 3
    %p252 = por %p250, %p251
    %p254 = scmp.ne.s32.totalorder %s237, %s253
    %p255 = scmp.eq.s32.totalorder %s21, 0
    %p256 = por %p254, %p255
    %p257 = scmp.le.s32.totalorder 1, %s15
    %p258 = scmp.lt.s32.totalorder %s15, 5
    %p259 = pnand %p257, %p258
    %p260 = pneg %p259
    // Predicated region
    $region9: #{tpu_custom_call.1} parent=5 // pred_check
      _
    $region10: #{tpu_custom_call.1} parent=5 // pred_check_branch
      %262 = sbr.rel (%p259) target = $region12
    $region11: #{tpu_custom_call.1} parent=5 // pred_region
      %s263 = ssub.s32 %s15, 1
      // Predicated region
      $region13: #{tpu_custom_call.1} parent=11 // pred_check
        %p264 = pneg %p74
      $region14: #{tpu_custom_call.1} parent=11 // pred_check_branch
        %266 = sbr.rel (%p264) target = $region16
      $region15: #{tpu_custom_call.1} parent=11 // pred_region
        _
      $region16: #{tpu_custom_call.1} parent=11 // pred_fallthru
        _
      // Predicated region
      $region17: #{tpu_custom_call.1} parent=11 // pred_check
        %p267 = pneg %p95
      $region18: #{tpu_custom_call.1} parent=11 // pred_check_branch
        %269 = sbr.rel (%p267) target = $region20
      $region19: #{tpu_custom_call.1} parent=11 // pred_region
        _
      $region20: #{tpu_custom_call.1} parent=11 // pred_fallthru
        _
      // Predicated region
      $region21: #{tpu_custom_call.1} parent=11 // pred_check
        %p270 = pneg %p116
      $region22: #{tpu_custom_call.1} parent=11 // pred_check_branch
        %272 = sbr.rel (%p270) target = $region24
      $region23: #{tpu_custom_call.1} parent=11 // pred_region
        _
      $region24: #{tpu_custom_call.1} parent=11 // pred_fallthru
        _
      // Predicated region
      $region25: #{tpu_custom_call.1} parent=11 // pred_check
        %p273 = pneg %p137
      $region26: #{tpu_custom_call.1} parent=11 // pred_check_branch
        %275 = sbr.rel (%p273) target = $region28
      $region27: #{tpu_custom_call.1} parent=11 // pred_region
        _
      $region28: #{tpu_custom_call.1} parent=11 // pred_fallthru
        _
      // Predicated region
      $region29: #{tpu_custom_call.1} parent=11 // pred_check
        %p276 = pneg %p158
      $region30: #{tpu_custom_call.1} parent=11 // pred_check_branch
        %278 = sbr.rel (%p276) target = $region32
      $region31: #{tpu_custom_call.1} parent=11 // pred_region
        _
      $region32: #{tpu_custom_call.1} parent=11 // pred_fallthru
        _
      // Predicated region
      $region33: #{tpu_custom_call.1} parent=11 // pred_check
        %p279 = pneg %p179
      $region34: #{tpu_custom_call.1} parent=11 // pred_check_branch
        %281 = sbr.rel (%p279) target = $region36
      $region35: #{tpu_custom_call.1} parent=11 // pred_region
        _
      $region36: #{tpu_custom_call.1} parent=11 // pred_fallthru
        _
      // Predicated region
      $region37: #{tpu_custom_call.1} parent=11 // pred_check
        %p282 = pneg %p200
      $region38: #{tpu_custom_call.1} parent=11 // pred_check_branch
        %284 = sbr.rel (%p282) target = $region40
      $region39: #{tpu_custom_call.1} parent=11 // pred_region
        _
      $region40: #{tpu_custom_call.1} parent=11 // pred_fallthru
        _
      // Predicated region
      $region41: #{tpu_custom_call.1} parent=11 // pred_check
        %p285 = pneg %p221
      $region42: #{tpu_custom_call.1} parent=11 // pred_check_branch
        %287 = sbr.rel (%p285) target = $region44
      $region43: #{tpu_custom_call.1} parent=11 // pred_region
        _
      $region44: #{tpu_custom_call.1} parent=11 // pred_fallthru
        _
    $region12: #{tpu_custom_call.1} parent=5 // pred_fallthru
      _
    %p288 = scmp.lt.s32.totalorder %s15, 4
    // Predicated region
    $region45: #{tpu_custom_call.1} parent=5 // pred_check
      %p289 = pneg %p288
    $region46: #{tpu_custom_call.1} parent=5 // pred_check_branch
      %291 = sbr.rel (%p289) target = $region48
    $region47: #{tpu_custom_call.1} parent=5 // pred_region
      // Predicated region
      $region49: #{tpu_custom_call.1} parent=47 // pred_check
        %p292 = pneg %p47
      $region50: #{tpu_custom_call.1} parent=47 // pred_check_branch
        %294 = sbr.rel (%p292) target = $region52
      $region51: #{tpu_custom_call.1} parent=47 // pred_region
        %p295 = scmp.lt.s32.totalorder %s22, 1
        %s296 = scalar_select %p295, %s22, 1
        %s297 = smul.addr %s296, 16
        %s298 = smul.addr %s297, 8
        %s299 = scalar_lea.vmem %s0, %s298
      $region52: #{tpu_custom_call.1} parent=47 // pred_fallthru
        _
    $region48: #{tpu_custom_call.1} parent=5 // pred_fallthru
      _
    %p300 = scmp.le.s32.totalorder 1, %s15
    %p301 = scmp.lt.s32.totalorder %s15, 5
    %p302 = pnand %p300, %p301
    %p303 = pneg %p302
    // Predicated region
    $region53: #{tpu_custom_call.1} parent=5 // pred_check
      _
    $region54: #{tpu_custom_call.1} parent=5 // pred_check_branch
      %305 = sbr.rel (%p302) target = $region56
    $region55: #{tpu_custom_call.1} parent=5 // pred_region
      %s306 = ssub.s32 %s15, 1
      %p307 = scmp.lt.s32.totalorder %s24, 1
      %s308 = scalar_select %p307, %s24, 1
      %s309 = smul.addr %s308, 16
      %s310 = smul.addr %s309, 8
      %s311 = scalar_lea.vmem %s0, %s310
      %p312 = pneg %p53
      %p313 = pneg %p50
      %p314 = pneg %p74
      %p315 = pneg %p71
      %p316 = pneg %p95
      %p317 = pneg %p92
      %p318 = pneg %p116
      %p319 = pneg %p113
      %p320 = pneg %p137
      %p321 = pneg %p134
      %p322 = pneg %p158
      %p323 = pneg %p155
      %p324 = pneg %p179
      %p325 = pneg %p176
      %p326 = pneg %p200
      %p327 = pneg %p197
      %p328 = pneg %p221
      %p329 = pneg %p218
      %p330 = pneg %p249
      %p331 = pneg %p246
      %s332 = smul.u32 8, %s25
      %p333 = scmp.lt.s32.totalorder %s24, 1
      %s334 = scalar_select %p333, %s24, 1
      %p335 = scmp.lt.s32.totalorder %s332, 15
      %s336 = scalar_select %p335, %s332, 15
      %s337 = smul.addr %s334, 16
      %s338 = sadd.s32 %s336, %s337
      %s339 = smul.addr %s338, 8
      %s340 = scalar_lea.vmem %s9, %s339
      %p341 = scmp.lt.s32.totalorder %s24, 1
      %s342 = scalar_select %p341, %s24, 1
      %s343 = smul.addr %s342, 16
      %s344 = smul.addr %s343, 8
      %s345 = scalar_lea.vmem %s0, %s344
      %s346 = smul.u32 8, %s25
      %p347 = scmp.lt.s32.totalorder %s24, 1
      %s348 = scalar_select %p347, %s24, 1
      %p349 = scmp.lt.s32.totalorder %s346, 15
      %s350 = scalar_select %p349, %s346, 15
      %s351 = smul.addr %s348, 16
      %s352 = sadd.s32 %s350, %s351
      %s353 = smul.addr %s352, 8
      %s354 = scalar_lea.vmem %s9, %s353
      %s355 = smul.u32 8, %s25
      %p357 = scmp.eq.s32.totalorder %s25, 0
      // Predicated region
      $region57: #{tpu_custom_call.1} parent=55 // pred_check
        %p358 = pneg %p357
      $region58: #{tpu_custom_call.1} parent=55 // pred_check_branch
        %360 = sbr.rel (%p358) target = $region60
      $region59: #{tpu_custom_call.1} parent=55 // pred_region
        %v361 = vld [vmem:[%s345] sm:$0xff]
        %v362 = vld [vmem:[%s345 + $0x8] sm:$0xff]
        %v363 = vld [vmem:[%s345 + $0x10] sm:$0xff]
        %v364 = vld [vmem:[%s345 + $0x18] sm:$0xff]
        %v365 = vld [vmem:[%s345 + $0x20] sm:$0xff]
        %v366 = vld [vmem:[%s345 + $0x28] sm:$0xff]
        %v367 = vld [vmem:[%s345 + $0x30] sm:$0xff]
        %v368 = vld [vmem:[%s345 + $0x38] sm:$0xff]
        %v369 = vld [vmem:[%s345 + $0x40] sm:$0xff]
        %v370 = vld [vmem:[%s345 + $0x48] sm:$0xff]
        %v371 = vld [vmem:[%s345 + $0x50] sm:$0xff]
        %v372 = vld [vmem:[%s345 + $0x58] sm:$0xff]
        %v373 = vld [vmem:[%s345 + $0x60] sm:$0xff]
        %v374 = vld [vmem:[%s345 + $0x68] sm:$0xff]
        %v375 = vld [vmem:[%s345 + $0x70] sm:$0xff]
        %v376 = vld [vmem:[%s345 + $0x78] sm:$0xff]
        %vm377 = vcmask 523264
        %v378 = vsel %vm377, %v361, 0.0
        %379 = vadd.xlane.f32.xlu0 %v378
        %v380 = vpop.xlane.xlu0 %379
        %v381 = vsel %vm377, %v362, 0.0
        %382 = vadd.xlane.f32.xlu0 %v381
        %v383 = vpop.xlane.xlu0 %382
        %v384 = vsel %vm377, %v363, 0.0
        %385 = vadd.xlane.f32.xlu0 %v384
        %v386 = vpop.xlane.xlu0 %385
        %v387 = vsel %vm377, %v364, 0.0
        %388 = vadd.xlane.f32.xlu0 %v387
        %v389 = vpop.xlane.xlu0 %388
        %v390 = vsel %vm377, %v365, 0.0
        %391 = vadd.xlane.f32.xlu0 %v390
        %v392 = vpop.xlane.xlu0 %391
        %v393 = vsel %vm377, %v366, 0.0
        %394 = vadd.xlane.f32.xlu0 %v393
        %v395 = vpop.xlane.xlu0 %394
        %v396 = vsel %vm377, %v367, 0.0
        %397 = vadd.xlane.f32.xlu0 %v396
        %v398 = vpop.xlane.xlu0 %397
        %v399 = vsel %vm377, %v368, 0.0
        %400 = vadd.xlane.f32.xlu0 %v399
        %v401 = vpop.xlane.xlu0 %400
        %v402 = vsel %vm377, %v369, 0.0
        %403 = vadd.xlane.f32.xlu0 %v402
        %v404 = vpop.xlane.xlu0 %403
        %v405 = vsel %vm377, %v370, 0.0
        %406 = vadd.xlane.f32.xlu0 %v405
        %v407 = vpop.xlane.xlu0 %406
        %v408 = vsel %vm377, %v371, 0.0
        %409 = vadd.xlane.f32.xlu0 %v408
        %v410 = vpop.xlane.xlu0 %409
        %v411 = vsel %vm377, %v372, 0.0
        %412 = vadd.xlane.f32.xlu0 %v411
        %v413 = vpop.xlane.xlu0 %412
        %v414 = vsel %vm377, %v373, 0.0
        %415 = vadd.xlane.f32.xlu0 %v414
        %v416 = vpop.xlane.xlu0 %415
        %v417 = vsel %vm377, %v374, 0.0
        %418 = vadd.xlane.f32.xlu0 %v417
        %v419 = vpop.xlane.xlu0 %418
        %v420 = vsel %vm377, %v375, 0.0
        %421 = vadd.xlane.f32.xlu0 %v420
        %v422 = vpop.xlane.xlu0 %421
        %v423 = vsel %vm377, %v376, 0.0
        %424 = vadd.xlane.f32.xlu0 %v423
        %v425 = vpop.xlane.xlu0 %424
        %v426 = vrcp.pop 64.0
        %v427 = vmul.f32 64.0, %v426
        %v428 = vsub.f32 1.0, %v427
        %v429 = vmul.f32 %v426, %v428
        %v430 = vadd.f32 %v426, %v429
        %vm431 = vweird.f32 %v426
        %v432 = vsel %vm431, %v426, %v430
        %v433 = vmul.f32 %v380, %v432
        %v434 = vmul.f32 %v383, %v432
        %v435 = vmul.f32 %v386, %v432
        %v436 = vmul.f32 %v389, %v432
        %v437 = vmul.f32 %v392, %v432
        %v438 = vmul.f32 %v395, %v432
        %v439 = vmul.f32 %v398, %v432
        %v440 = vmul.f32 %v401, %v432
        %v441 = vmul.f32 %v404, %v432
        %v442 = vmul.f32 %v407, %v432
        %v443 = vmul.f32 %v410, %v432
        %v444 = vmul.f32 %v413, %v432
        %v445 = vmul.f32 %v416, %v432
        %v446 = vmul.f32 %v419, %v432
        %v447 = vmul.f32 %v422, %v432
        %v448 = vmul.f32 %v425, %v432
        %v449 = vsub.f32 %v361, %v433
        %v450 = vsub.f32 %v362, %v434
        %v451 = vsub.f32 %v363, %v435
        %v452 = vsub.f32 %v364, %v436
        %v453 = vsub.f32 %v365, %v437
        %v454 = vsub.f32 %v366, %v438
        %v455 = vsub.f32 %v367, %v439
        %v456 = vsub.f32 %v368, %v440
        %v457 = vsub.f32 %v369, %v441
        %v458 = vsub.f32 %v370, %v442
        %v459 = vsub.f32 %v371, %v443
        %v460 = vsub.f32 %v372, %v444
        %v461 = vsub.f32 %v373, %v445
        %v462 = vsub.f32 %v374, %v446
        %v463 = vsub.f32 %v375, %v447
        %v464 = vsub.f32 %v376, %v448
        %v465 = vmul.f32 %v449, %v449
        %v466 = vmul.f32 %v450, %v450
        %v467 = vmul.f32 %v451, %v451
        %v468 = vmul.f32 %v452, %v452
        %v469 = vmul.f32 %v453, %v453
        %v470 = vmul.f32 %v454, %v454
        %v471 = vmul.f32 %v455, %v455
        %v472 = vmul.f32 %v456, %v456
        %v473 = vmul.f32 %v457, %v457
        %v474 = vmul.f32 %v458, %v458
        %v475 = vmul.f32 %v459, %v459
        %v476 = vmul.f32 %v460, %v460
        %v477 = vmul.f32 %v461, %v461
        %v478 = vmul.f32 %v462, %v462
        %v479 = vmul.f32 %v463, %v463
        %v480 = vmul.f32 %v464, %v464
        %v481 = vsel %vm377, %v465, 0.0
        %482 = vadd.xlane.f32.xlu0 %v481
        %v483 = vpop.xlane.xlu0 %482
        %v484 = vsel %vm377, %v466, 0.0
        %485 = vadd.xlane.f32.xlu0 %v484
        %v486 = vpop.xlane.xlu0 %485
        %v487 = vsel %vm377, %v467, 0.0
        %488 = vadd.xlane.f32.xlu0 %v487
        %v489 = vpop.xlane.xlu0 %488
        %v490 = vsel %vm377, %v468, 0.0
        %491 = vadd.xlane.f32.xlu0 %v490
        %v492 = vpop.xlane.xlu0 %491
        %v493 = vsel %vm377, %v469, 0.0
        %494 = vadd.xlane.f32.xlu0 %v493
        %v495 = vpop.xlane.xlu0 %494
        %v496 = vsel %vm377, %v470, 0.0
        %497 = vadd.xlane.f32.xlu0 %v496
        %v498 = vpop.xlane.xlu0 %497
        %v499 = vsel %vm377, %v471, 0.0
        %500 = vadd.xlane.f32.xlu0 %v499
        %v501 = vpop.xlane.xlu0 %500
        %v502 = vsel %vm377, %v472, 0.0
        %503 = vadd.xlane.f32.xlu0 %v502
        %v504 = vpop.xlane.xlu0 %503
        %v505 = vsel %vm377, %v473, 0.0
        %506 = vadd.xlane.f32.xlu0 %v505
        %v507 = vpop.xlane.xlu0 %506
        %v508 = vsel %vm377, %v474, 0.0
        %509 = vadd.xlane.f32.xlu0 %v508
        %v510 = vpop.xlane.xlu0 %509
        %v511 = vsel %vm377, %v475, 0.0
        %512 = vadd.xlane.f32.xlu0 %v511
        %v513 = vpop.xlane.xlu0 %512
        %v514 = vsel %vm377, %v476, 0.0
        %515 = vadd.xlane.f32.xlu0 %v514
        %v516 = vpop.xlane.xlu0 %515
        %v517 = vsel %vm377, %v477, 0.0
        %518 = vadd.xlane.f32.xlu0 %v517
        %v519 = vpop.xlane.xlu0 %518
        %v520 = vsel %vm377, %v478, 0.0
        %521 = vadd.xlane.f32.xlu0 %v520
        %v522 = vpop.xlane.xlu0 %521
        %v523 = vsel %vm377, %v479, 0.0
        %524 = vadd.xlane.f32.xlu0 %v523
        %v525 = vpop.xlane.xlu0 %524
        %v526 = vsel %vm377, %v480, 0.0
        %527 = vadd.xlane.f32.xlu0 %v526
        %v528 = vpop.xlane.xlu0 %527
        %v529 = vmul.f32 %v483, %v432
        %v530 = vmul.f32 %v486, %v432
        %v531 = vmul.f32 %v489, %v432
        %v532 = vmul.f32 %v492, %v432
        %v533 = vmul.f32 %v495, %v432
        %v534 = vmul.f32 %v498, %v432
        %v535 = vmul.f32 %v501, %v432
        %v536 = vmul.f32 %v504, %v432
        %v537 = vmul.f32 %v507, %v432
        %v538 = vmul.f32 %v510, %v432
        %v539 = vmul.f32 %v513, %v432
        %v540 = vmul.f32 %v516, %v432
        %v541 = vmul.f32 %v519, %v432
        %v542 = vmul.f32 %v522, %v432
        %v543 = vmul.f32 %v525, %v432
        %v544 = vmul.f32 %v528, %v432
        %v545 = vadd.f32 %v529, 1e-06
        %v546 = vadd.f32 %v530, 1e-06
        %v547 = vadd.f32 %v531, 1e-06
        %v548 = vadd.f32 %v532, 1e-06
        %v549 = vadd.f32 %v533, 1e-06
        %v550 = vadd.f32 %v534, 1e-06
        %v551 = vadd.f32 %v535, 1e-06
        %v552 = vadd.f32 %v536, 1e-06
        %v553 = vadd.f32 %v537, 1e-06
        %v554 = vadd.f32 %v538, 1e-06
        %v555 = vadd.f32 %v539, 1e-06
        %v556 = vadd.f32 %v540, 1e-06
        %v557 = vadd.f32 %v541, 1e-06
        %v558 = vadd.f32 %v542, 1e-06
        %v559 = vadd.f32 %v543, 1e-06
        %v560 = vadd.f32 %v544, 1e-06
        %v561 = vrsqrt.pop %v545
        %v562 = vmul.f32 %v561, %v545
        %v563 = vmul.f32 %v562, %v561
        %v564 = vmul.f32 0.5, %v563
        %v565 = vsub.f32 1.5, %v564
        %v566 = vmul.f32 %v561, %v565
        %vm567 = vweird.f32 %v545
        %vm568 = vweird.f32 %v561
        %vm569 = vmor %vm567, %vm568
        %v570 = vsel %vm569, %v561, %v566
        %v571 = vrsqrt.pop %v546
        %v572 = vmul.f32 %v571, %v546
        %v573 = vmul.f32 %v572, %v571
        %v574 = vmul.f32 0.5, %v573
        %v575 = vsub.f32 1.5, %v574
        %v576 = vmul.f32 %v571, %v575
        %vm577 = vweird.f32 %v546
        %vm578 = vweird.f32 %v571
        %vm579 = vmor %vm577, %vm578
        %v580 = vsel %vm579, %v571, %v576
        %v581 = vrsqrt.pop %v547
        %v582 = vmul.f32 %v581, %v547
        %v583 = vmul.f32 %v582, %v581
        %v584 = vmul.f32 0.5, %v583
        %v585 = vsub.f32 1.5, %v584
        %v586 = vmul.f32 %v581, %v585
        %vm587 = vweird.f32 %v547
        %vm588 = vweird.f32 %v581
        %vm589 = vmor %vm587, %vm588
        %v590 = vsel %vm589, %v581, %v586
        %v591 = vrsqrt.pop %v548
        %v592 = vmul.f32 %v591, %v548
        %v593 = vmul.f32 %v592, %v591
        %v594 = vmul.f32 0.5, %v593
        %v595 = vsub.f32 1.5, %v594
        %v596 = vmul.f32 %v591, %v595
        %vm597 = vweird.f32 %v548
        %vm598 = vweird.f32 %v591
        %vm599 = vmor %vm597, %vm598
        %v600 = vsel %vm599, %v591, %v596
        %v601 = vrsqrt.pop %v549
        %v602 = vmul.f32 %v601, %v549
        %v603 = vmul.f32 %v602, %v601
        %v604 = vmul.f32 0.5, %v603
        %v605 = vsub.f32 1.5, %v604
        %v606 = vmul.f32 %v601, %v605
        %vm607 = vweird.f32 %v549
        %vm608 = vweird.f32 %v601
        %vm609 = vmor %vm607, %vm608
        %v610 = vsel %vm609, %v601, %v606
        %v611 = vrsqrt.pop %v550
        %v612 = vmul.f32 %v611, %v550
        %v613 = vmul.f32 %v612, %v611
        %v614 = vmul.f32 0.5, %v613
        %v615 = vsub.f32 1.5, %v614
        %v616 = vmul.f32 %v611, %v615
        %vm617 = vweird.f32 %v550
        %vm618 = vweird.f32 %v611
        %vm619 = vmor %vm617, %vm618
        %v620 = vsel %vm619, %v611, %v616
        %v621 = vrsqrt.pop %v551
        %v622 = vmul.f32 %v621, %v551
        %v623 = vmul.f32 %v622, %v621
        %v624 = vmul.f32 0.5, %v623
        %v625 = vsub.f32 1.5, %v624
        %v626 = vmul.f32 %v621, %v625
        %vm627 = vweird.f32 %v551
        %vm628 = vweird.f32 %v621
        %vm629 = vmor %vm627, %vm628
        %v630 = vsel %vm629, %v621, %v626
        %v631 = vrsqrt.pop %v552
        %v632 = vmul.f32 %v631, %v552
        %v633 = vmul.f32 %v632, %v631
        %v634 = vmul.f32 0.5, %v633
        %v635 = vsub.f32 1.5, %v634
        %v636 = vmul.f32 %v631, %v635
        %vm637 = vweird.f32 %v552
        %vm638 = vweird.f32 %v631
        %vm639 = vmor %vm637, %vm638
        %v640 = vsel %vm639, %v631, %v636
        %v641 = vrsqrt.pop %v553
        %v642 = vmul.f32 %v641, %v553
        %v643 = vmul.f32 %v642, %v641
        %v644 = vmul.f32 0.5, %v643
        %v645 = vsub.f32 1.5, %v644
        %v646 = vmul.f32 %v641, %v645
        %vm647 = vweird.f32 %v553
        %vm648 = vweird.f32 %v641
        %vm649 = vmor %vm647, %vm648
        %v650 = vsel %vm649, %v641, %v646
        %v651 = vrsqrt.pop %v554
        %v652 = vmul.f32 %v651, %v554
        %v653 = vmul.f32 %v652, %v651
        %v654 = vmul.f32 0.5, %v653
        %v655 = vsub.f32 1.5, %v654
        %v656 = vmul.f32 %v651, %v655
        %vm657 = vweird.f32 %v554
        %vm658 = vweird.f32 %v651
        %vm659 = vmor %vm657, %vm658
        %v660 = vsel %vm659, %v651, %v656
        %v661 = vrsqrt.pop %v555
        %v662 = vmul.f32 %v661, %v555
        %v663 = vmul.f32 %v662, %v661
        %v664 = vmul.f32 0.5, %v663
        %v665 = vsub.f32 1.5, %v664
        %v666 = vmul.f32 %v661, %v665
        %vm667 = vweird.f32 %v555
        %vm668 = vweird.f32 %v661
        %vm669 = vmor %vm667, %vm668
        %v670 = vsel %vm669, %v661, %v666
        %v671 = vrsqrt.pop %v556
        %v672 = vmul.f32 %v671, %v556
        %v673 = vmul.f32 %v672, %v671
        %v674 = vmul.f32 0.5, %v673
        %v675 = vsub.f32 1.5, %v674
        %v676 = vmul.f32 %v671, %v675
        %vm677 = vweird.f32 %v556
        %vm678 = vweird.f32 %v671
        %vm679 = vmor %vm677, %vm678
        %v680 = vsel %vm679, %v671, %v676
        %v681 = vrsqrt.pop %v557
        %v682 = vmul.f32 %v681, %v557
        %v683 = vmul.f32 %v682, %v681
        %v684 = vmul.f32 0.5, %v683
        %v685 = vsub.f32 1.5, %v684
        %v686 = vmul.f32 %v681, %v685
        %vm687 = vweird.f32 %v557
        %vm688 = vweird.f32 %v681
        %vm689 = vmor %vm687, %vm688
        %v690 = vsel %vm689, %v681, %v686
        %v691 = vrsqrt.pop %v558
        %v692 = vmul.f32 %v691, %v558
        %v693 = vmul.f32 %v692, %v691
        %v694 = vmul.f32 0.5, %v693
        %v695 = vsub.f32 1.5, %v694
        %v696 = vmul.f32 %v691, %v695
        %vm697 = vweird.f32 %v558
        %vm698 = vweird.f32 %v691
        %vm699 = vmor %vm697, %vm698
        %v700 = vsel %vm699, %v691, %v696
        %v701 = vrsqrt.pop %v559
        %v702 = vmul.f32 %v701, %v559
        %v703 = vmul.f32 %v702, %v701
        %v704 = vmul.f32 0.5, %v703
        %v705 = vsub.f32 1.5, %v704
        %v706 = vmul.f32 %v701, %v705
        %vm707 = vweird.f32 %v559
        %vm708 = vweird.f32 %v701
        %vm709 = vmor %vm707, %vm708
        %v710 = vsel %vm709, %v701, %v706
        %v711 = vrsqrt.pop %v560
        %v712 = vmul.f32 %v711, %v560
        %v713 = vmul.f32 %v712, %v711
        %v714 = vmul.f32 0.5, %v713
        %v715 = vsub.f32 1.5, %v714
        %v716 = vmul.f32 %v711, %v715
        %vm717 = vweird.f32 %v560
        %vm718 = vweird.f32 %v711
        %vm719 = vmor %vm717, %vm718
        %v720 = vsel %vm719, %v711, %v716
        %v721 = vmul.f32 %v449, %v570
        %v722 = vmul.f32 %v450, %v580
        %v723 = vmul.f32 %v451, %v590
        %v724 = vmul.f32 %v452, %v600
        %v725 = vmul.f32 %v453, %v610
        %v726 = vmul.f32 %v454, %v620
        %v727 = vmul.f32 %v455, %v630
        %v728 = vmul.f32 %v456, %v640
        %v729 = vmul.f32 %v457, %v650
        %v730 = vmul.f32 %v458, %v660
        %v731 = vmul.f32 %v459, %v670
        %v732 = vmul.f32 %v460, %v680
        %v733 = vmul.f32 %v461, %v690
        %v734 = vmul.f32 %v462, %v700
        %v735 = vmul.f32 %v463, %v710
        %v736 = vmul.f32 %v464, %v720
        %v737 = vpack.c.bf16 %v722, %v721
        %v738 = vpack.c.bf16 %v724, %v723
        %v739 = vpack.c.bf16 %v726, %v725
        %v740 = vpack.c.bf16 %v728, %v727
        %v741 = vpack.c.bf16 %v730, %v729
        %v742 = vpack.c.bf16 %v732, %v731
        %v743 = vpack.c.bf16 %v734, %v733
        %v744 = vpack.c.bf16 %v736, %v735
        %v745 = vld [vmem:[%s1] sm:$0xff]
        %v746 = vld [vmem:[%s1 + $0x8] sm:$0xff]
        %v747 = vld [vmem:[%s1 + $0x10] sm:$0xff]
        %v748 = vld [vmem:[%s1 + $0x18] sm:$0xff]
        %v749 = vld [vmem:[%s1 + $0x20] sm:$0xff]
        %v750 = vld [vmem:[%s1 + $0x28] sm:$0xff]
        %v751 = vld [vmem:[%s1 + $0x30] sm:$0xff]
        %v752 = vld [vmem:[%s1 + $0x38] sm:$0xff]
        %v753 = vld [vmem:[%s2] sm:$0x3]
        %v755 = vperm.slane %v753, 0
        %v756 = vperm.slane %v753, 1
        %v767 = vunpack.c.l.b16 %v745
        %v768 = vunpack.c.h.b16 %v745
        %v769 = vunpack.c.l.b16 %v746
        %v770 = vunpack.c.h.b16 %v746
        %v771 = vunpack.c.l.b16 %v747
        %v772 = vunpack.c.h.b16 %v747
        %v773 = vunpack.c.l.b16 %v748
        %v774 = vunpack.c.h.b16 %v748
        %v775 = vunpack.c.l.b16 %v749
        %v776 = vunpack.c.h.b16 %v749
        %v777 = vunpack.c.l.b16 %v750
        %v778 = vunpack.c.h.b16 %v750
        %v779 = vunpack.c.l.b16 %v751
        %v780 = vunpack.c.h.b16 %v751
        %v781 = vunpack.c.l.b16 %v752
        %v782 = vunpack.c.h.b16 %v752
        %v783 = vpack.c.b16 %v769, %v767
        %v784 = vpack.c.b16 %v770, %v768
        %v785 = vpack.c.b16 %v773, %v771
        %v786 = vpack.c.b16 %v774, %v772
        %v787 = vpack.c.b16 %v777, %v775
        %v788 = vpack.c.b16 %v778, %v776
        %v789 = vpack.c.b16 %v781, %v779
        %v790 = vpack.c.b16 %v782, %v780
        %v800 = vsel %vm377, %v737, 0
        %v803 = vsel %vm377, %v738, 0
        %v806 = vsel %vm377, %v739, 0
        %v809 = vsel %vm377, %v740, 0
        %v812 = vsel %vm377, %v741, 0
        %v815 = vsel %vm377, %v742, 0
        %v818 = vsel %vm377, %v743, 0
        %v821 = vsel %vm377, %v744, 0
        %823 = vmatpush.bf16.msra.mxu0 0
        %824 = vmatpush.bf16.msra.mxu0 0
        %825 = vmatpush.bf16.msra.mxu0 0
        %826 = vmatpush.bf16.msra.mxu0 0
        %827 = vmatpush.bf16.msra.mxu0 %v789
        %828 = vmatpush.bf16.msra.mxu0 %v787
        %829 = vmatpush.bf16.msra.mxu0 %v785
        %830 = vmatpush.bf16.msra.mxu0 %v783
        %831 = vmatmul.bf16.gmra.mxu0 %v800
        %v832 = vpop.f32.mrf.mxu0
        %v833 = vadd.f32 %v755, %v832
        %v834 = vpop.f32.mrf.mxu0
        %v835 = vadd.f32 %v755, %v834
        %836 = vmatmul.bf16.gmra.mxu0 %v803
        %v837 = vpop.f32.mrf.mxu0
        %v838 = vadd.f32 %v755, %v837
        %v839 = vpop.f32.mrf.mxu0
        %v840 = vadd.f32 %v755, %v839
        %841 = vmatmul.bf16.gmra.mxu0 %v806
        %v842 = vpop.f32.mrf.mxu0
        %v843 = vadd.f32 %v755, %v842
        %v844 = vpop.f32.mrf.mxu0
        %v845 = vadd.f32 %v755, %v844
        %846 = vmatmul.bf16.gmra.mxu0 %v809
        %v847 = vpop.f32.mrf.mxu0
        %v848 = vadd.f32 %v755, %v847
        %v849 = vpop.f32.mrf.mxu0
        %v850 = vadd.f32 %v755, %v849
        %851 = vmatmul.bf16.gmra.mxu0 %v812
        %v852 = vpop.f32.mrf.mxu0
        %v853 = vadd.f32 %v755, %v852
        %v854 = vpop.f32.mrf.mxu0
        %v855 = vadd.f32 %v755, %v854
        %856 = vmatmul.bf16.gmra.mxu0 %v815
        %v857 = vpop.f32.mrf.mxu0
        %v858 = vadd.f32 %v755, %v857
        %v859 = vpop.f32.mrf.mxu0
        %v860 = vadd.f32 %v755, %v859
        %861 = vmatmul.bf16.gmra.mxu0 %v818
        %v862 = vpop.f32.mrf.mxu0
        %v863 = vadd.f32 %v755, %v862
        %v864 = vpop.f32.mrf.mxu0
        %v865 = vadd.f32 %v755, %v864
        %866 = vmatmul.bf16.gmra.mxu0 %v821
        %v867 = vpop.f32.mrf.mxu0
        %v868 = vadd.f32 %v755, %v867
        %v869 = vpop.f32.mrf.mxu0
        %v870 = vadd.f32 %v755, %v869
        %871 = vdwg.mxu0
        %872 = vmatpush.bf16.msra.mxu0 0
        %873 = vmatpush.bf16.msra.mxu0 0
        %874 = vmatpush.bf16.msra.mxu0 0
        %875 = vmatpush.bf16.msra.mxu0 0
        %876 = vmatpush.bf16.msra.mxu0 %v790
        %877 = vmatpush.bf16.msra.mxu0 %v788
        %878 = vmatpush.bf16.msra.mxu0 %v786
        %879 = vmatpush.bf16.msra.mxu0 %v784
        %880 = vmatmul.bf16.gmra.mxu0 %v800
        %v881 = vpop.f32.mrf.mxu0
        %v882 = vadd.f32 %v756, %v881
        %v883 = vpop.f32.mrf.mxu0
        %v884 = vadd.f32 %v756, %v883
        %885 = vmatmul.bf16.gmra.mxu0 %v803
        %v886 = vpop.f32.mrf.mxu0
        %v887 = vadd.f32 %v756, %v886
        %v888 = vpop.f32.mrf.mxu0
        %v889 = vadd.f32 %v756, %v888
        %890 = vmatmul.bf16.gmra.mxu0 %v806
        %v891 = vpop.f32.mrf.mxu0
        %v892 = vadd.f32 %v756, %v891
        %v893 = vpop.f32.mrf.mxu0
        %v894 = vadd.f32 %v756, %v893
        %895 = vmatmul.bf16.gmra.mxu0 %v809
        %v896 = vpop.f32.mrf.mxu0
        %v897 = vadd.f32 %v756, %v896
        %v898 = vpop.f32.mrf.mxu0
        %v899 = vadd.f32 %v756, %v898
        %900 = vmatmul.bf16.gmra.mxu0 %v812
        %v901 = vpop.f32.mrf.mxu0
        %v902 = vadd.f32 %v756, %v901
        %v903 = vpop.f32.mrf.mxu0
        %v904 = vadd.f32 %v756, %v903
        %905 = vmatmul.bf16.gmra.mxu0 %v815
        %v906 = vpop.f32.mrf.mxu0
        %v907 = vadd.f32 %v756, %v906
        %v908 = vpop.f32.mrf.mxu0
        %v909 = vadd.f32 %v756, %v908
        %910 = vmatmul.bf16.gmra.mxu0 %v818
        %v911 = vpop.f32.mrf.mxu0
        %v912 = vadd.f32 %v756, %v911
        %v913 = vpop.f32.mrf.mxu0
        %v914 = vadd.f32 %v756, %v913
        %915 = vmatmul.bf16.gmra.mxu0 %v821
        %v916 = vpop.f32.mrf.mxu0
        %v917 = vadd.f32 %v756, %v916
        %v918 = vpop.f32.mrf.mxu0
        %v919 = vadd.f32 %v756, %v918
        %920 = vdwg.mxu0
        %v921 = vpack.c.bf16 %v882, %v833
        %v922 = vpack.c.bf16 %v884, %v835
        %v923 = vpack.c.bf16 %v887, %v838
        %v924 = vpack.c.bf16 %v889, %v840
        %v925 = vpack.c.bf16 %v892, %v843
        %v926 = vpack.c.bf16 %v894, %v845
        %v927 = vpack.c.bf16 %v897, %v848
        %v928 = vpack.c.bf16 %v899, %v850
        %v929 = vpack.c.bf16 %v902, %v853
        %v930 = vpack.c.bf16 %v904, %v855
        %v931 = vpack.c.bf16 %v907, %v858
        %v932 = vpack.c.bf16 %v909, %v860
        %v933 = vpack.c.bf16 %v912, %v863
        %v934 = vpack.c.bf16 %v914, %v865
        %v935 = vpack.c.bf16 %v917, %v868
        %v936 = vpack.c.bf16 %v919, %v870
        %vm937 = vcmask 1043456
        %vm938 = vcmask 523268
        %vm939 = vmor %vm938, %vm937
        %940 = vst.msk [vmem:[#allocation2] sm:$0xff] %vm939, %v921
        %941 = vst.msk [vmem:[#allocation2 + $0x8] sm:$0xff] %vm939, %v922
        %942 = vst.msk [vmem:[#allocation2 + $0x10] sm:$0xff] %vm939, %v923
        %943 = vst.msk [vmem:[#allocation2 + $0x18] sm:$0xff] %vm939, %v924
        %944 = vst.msk [vmem:[#allocation2 + $0x20] sm:$0xff] %vm939, %v925
        %945 = vst.msk [vmem:[#allocation2 + $0x28] sm:$0xff] %vm939, %v926
        %946 = vst.msk [vmem:[#allocation2 + $0x30] sm:$0xff] %vm939, %v927
        %947 = vst.msk [vmem:[#allocation2 + $0x38] sm:$0xff] %vm939, %v928
        %948 = vst.msk [vmem:[#allocation2 + $0x40] sm:$0xff] %vm939, %v929
        %949 = vst.msk [vmem:[#allocation2 + $0x48] sm:$0xff] %vm939, %v930
        %950 = vst.msk [vmem:[#allocation2 + $0x50] sm:$0xff] %vm939, %v931
        %951 = vst.msk [vmem:[#allocation2 + $0x58] sm:$0xff] %vm939, %v932
        %952 = vst.msk [vmem:[#allocation2 + $0x60] sm:$0xff] %vm939, %v933
        %953 = vst.msk [vmem:[#allocation2 + $0x68] sm:$0xff] %vm939, %v934
        %954 = vst.msk [vmem:[#allocation2 + $0x70] sm:$0xff] %vm939, %v935
        %955 = vst.msk [vmem:[#allocation2 + $0x78] sm:$0xff] %vm939, %v936
      $region60: #{tpu_custom_call.1} parent=55 // pred_fallthru
        _
      %s956 = smul.u32 %s25, 64
      %s957 = sshra.s32 %s956, 3
      %s958 = sand.u32 %s956, 7
      %s959 = smul.u32 %s957, 2
      %s960 = smul.addr %s959, 4
      %s961 = scalar_lea.vmem [#allocation2], %s960
      %v962 = vld [vmem:[%s961] sm:$0xf]
      %v963 = vld [vmem:[%s961 + $0x8] sm:$0xf]
      %v964 = vld [vmem:[%s961 + $0x10] sm:$0xf]
      %v965 = vld [vmem:[%s961 + $0x18] sm:$0xf]
      %v966 = vld [vmem:[%s961 + $0x20] sm:$0xf]
      %v967 = vld [vmem:[%s961 + $0x28] sm:$0xf]
      %v968 = vld [vmem:[%s961 + $0x30] sm:$0xf]
      %v969 = vld [vmem:[%s961 + $0x38] sm:$0xf]
      %v970 = vld [vmem:[#allocation2] sm:$0xf]
      %v971 = vld [vmem:[#allocation2 + $0x8] sm:$0xf]
      %v972 = vld [vmem:[#allocation2 + $0x10] sm:$0xf]
      %v973 = vld [vmem:[#allocation2 + $0x18] sm:$0xf]
      %v974 = vld [vmem:[#allocation2 + $0x20] sm:$0xf]
      %v975 = vld [vmem:[#allocation2 + $0x28] sm:$0xf]
      %v976 = vld [vmem:[#allocation2 + $0x30] sm:$0xf]
      %v977 = vld [vmem:[#allocation2 + $0x38] sm:$0xf]
      %v978 = vld [vmem:[#allocation2 + $0x40] sm:$0xf]
      %v979 = vld [vmem:[#allocation2 + $0x48] sm:$0xf]
      %v980 = vld [vmem:[#allocation2 + $0x50] sm:$0xf]
      %v981 = vld [vmem:[#allocation2 + $0x58] sm:$0xf]
      %v982 = vld [vmem:[#allocation2 + $0x60] sm:$0xf]
      %v983 = vld [vmem:[#allocation2 + $0x68] sm:$0xf]
      %v984 = vld [vmem:[#allocation2 + $0x70] sm:$0xf]
      %v985 = vld [vmem:[#allocation2 + $0x78] sm:$0xf]
      %v986 = vld [vmem:[#allocation2 + $0x4] sm:$0xf]
      %v987 = vld [vmem:[#allocation2 + $0xc] sm:$0xf]
      %v988 = vld [vmem:[#allocation2 + $0x14] sm:$0xf]
      %v989 = vld [vmem:[#allocation2 + $0x1c] sm:$0xf]
      %v990 = vld [vmem:[#allocation2 + $0x24] sm:$0xf]
      %v991 = vld [vmem:[#allocation2 + $0x2c] sm:$0xf]
      %v992 = vld [vmem:[#allocation2 + $0x34] sm:$0xf]
      %v993 = vld [vmem:[#allocation2 + $0x3c] sm:$0xf]
      %v994 = vld [vmem:[#allocation2 + $0x44] sm:$0xf]
      %v995 = vld [vmem:[#allocation2 + $0x4c] sm:$0xf]
      %v996 = vld [vmem:[#allocation2 + $0x54] sm:$0xf]
      %v997 = vld [vmem:[#allocation2 + $0x5c] sm:$0xf]
      %v998 = vld [vmem:[#allocation2 + $0x64] sm:$0xf]
      %v999 = vld [vmem:[#allocation2 + $0x6c] sm:$0xf]
      %v1000 = vld [vmem:[#allocation2 + $0x74] sm:$0xf]
      %v1001 = vld [vmem:[#allocation2 + $0x7c] sm:$0xf]
      %v1010 = vunpack.c.l.b16 %v962
      %v1011 = vunpack.c.l.b16 %v963
      %v1012 = vunpack.c.l.b16 %v964
      %v1013 = vunpack.c.l.b16 %v965
      %v1014 = vunpack.c.l.b16 %v966
      %v1015 = vunpack.c.l.b16 %v967
      %v1016 = vunpack.c.l.b16 %v968
      %v1017 = vunpack.c.l.b16 %v969
      %v1018 = vpack.c.b16 %v1011, %v1010
      %v1019 = vpack.c.b16 %v1013, %v1012
      %v1020 = vpack.c.b16 %v1015, %v1014
      %v1021 = vpack.c.b16 %v1017, %v1016
      %v1038 = vunpack.c.l.b16 %v970
      %v1039 = vunpack.c.l.b16 %v971
      %v1040 = vunpack.c.l.b16 %v972
      %v1041 = vunpack.c.l.b16 %v973
      %v1042 = vunpack.c.l.b16 %v974
      %v1043 = vunpack.c.l.b16 %v975
      %v1044 = vunpack.c.l.b16 %v976
      %v1045 = vunpack.c.l.b16 %v977
      %v1046 = vunpack.c.l.b16 %v978
      %v1047 = vunpack.c.l.b16 %v979
      %v1048 = vunpack.c.l.b16 %v980
      %v1049 = vunpack.c.l.b16 %v981
      %v1050 = vunpack.c.l.b16 %v982
      %v1051 = vunpack.c.l.b16 %v983
      %v1052 = vunpack.c.l.b16 %v984
      %v1053 = vunpack.c.l.b16 %v985
      %v1054 = vpack.c.b16 %v1039, %v1038
      %v1055 = vpack.c.b16 %v1041, %v1040
      %v1056 = vpack.c.b16 %v1043, %v1042
      %v1057 = vpack.c.b16 %v1045, %v1044
      %v1058 = vpack.c.b16 %v1047, %v1046
      %v1059 = vpack.c.b16 %v1049, %v1048
      %v1060 = vpack.c.b16 %v1051, %v1050
      %v1061 = vpack.c.b16 %v1053, %v1052
      %1062 = vrot.lane.b32.xlu0 %v1054, 64
      %v1063 = vpop.permute.xlu0 %1062
      %1064 = vrot.lane.b32.xlu0 %v1055, 64
      %v1065 = vpop.permute.xlu0 %1064
      %1066 = vrot.lane.b32.xlu0 %v1056, 64
      %v1067 = vpop.permute.xlu0 %1066
      %1068 = vrot.lane.b32.xlu0 %v1057, 64
      %v1069 = vpop.permute.xlu0 %1068
      %1070 = vrot.lane.b32.xlu0 %v1058, 64
      %v1071 = vpop.permute.xlu0 %1070
      %1072 = vrot.lane.b32.xlu0 %v1059, 64
      %v1073 = vpop.permute.xlu0 %1072
      %1074 = vrot.lane.b32.xlu0 %v1060, 64
      %v1075 = vpop.permute.xlu0 %1074
      %1076 = vrot.lane.b32.xlu0 %v1061, 64
      %v1077 = vpop.permute.xlu0 %1076
      %vm1078 = vcmask 130048
      %v1080 = vsel %vm1078, %v1018, 0
      %v1083 = vsel %vm1078, %v1019, 0
      %v1086 = vsel %vm1078, %v1020, 0
      %v1089 = vsel %vm1078, %v1021, 0
      %v1092 = vsel %vm1078, %v1063, 0
      %v1095 = vsel %vm1078, %v1065, 0
      %v1098 = vsel %vm1078, %v1067, 0
      %v1101 = vsel %vm1078, %v1069, 0
      %v1104 = vsel %vm1078, %v1071, 0
      %v1107 = vsel %vm1078, %v1073, 0
      %v1110 = vsel %vm1078, %v1075, 0
      %v1113 = vsel %vm1078, %v1077, 0
      %1115 = vmatpush.bf16.xpose.msra.mxu0 %v1113
      %1116 = vmatpush.bf16.xpose.msra.mxu0 %v1110
      %1117 = vmatpush.bf16.xpose.msra.mxu0 %v1107
      %1118 = vmatpush.bf16.xpose.msra.mxu0 %v1104
      %1119 = vmatpush.bf16.xpose.msra.mxu0 %v1101
      %1120 = vmatpush.bf16.xpose.msra.mxu0 %v1098
      %1121 = vmatpush.bf16.xpose.msra.mxu0 %v1095
      %1122 = vmatpush.bf16.xpose.msra.mxu0 %v1092
      %1123 = vmatmul.bf16.gmra.mxu0 %v1080
      %v1124 = vpop.f32.mrf.mxu0
      %v1125 = vadd.f32 0.0, %v1124
      %v1126 = vpop.f32.mrf.mxu0
      %v1127 = vadd.f32 0.0, %v1126
      %1128 = vmatmul.bf16.gmra.mxu0 %v1083
      %v1129 = vpop.f32.mrf.mxu0
      %v1130 = vadd.f32 0.0, %v1129
      %v1131 = vpop.f32.mrf.mxu0
      %v1132 = vadd.f32 0.0, %v1131
      %1133 = vmatmul.bf16.gmra.mxu0 %v1086
      %v1134 = vpop.f32.mrf.mxu0
      %v1135 = vadd.f32 0.0, %v1134
      %v1136 = vpop.f32.mrf.mxu0
      %v1137 = vadd.f32 0.0, %v1136
      %1138 = vmatmul.bf16.gmra.mxu0 %v1089
      %v1139 = vpop.f32.mrf.mxu0
      %v1140 = vadd.f32 0.0, %v1139
      %v1141 = vpop.f32.mrf.mxu0
      %v1142 = vadd.f32 0.0, %v1141
      %1143 = vdwg.mxu0
      %1144 = vmax.xlane.f32.xlu0 %v1125
      %v1145 = vpop.xlane.xlu0 %1144
      %1146 = vmax.xlane.f32.xlu0 %v1127
      %v1147 = vpop.xlane.xlu0 %1146
      %1148 = vmax.xlane.f32.xlu0 %v1130
      %v1149 = vpop.xlane.xlu0 %1148
      %1150 = vmax.xlane.f32.xlu0 %v1132
      %v1151 = vpop.xlane.xlu0 %1150
      %1152 = vmax.xlane.f32.xlu0 %v1135
      %v1153 = vpop.xlane.xlu0 %1152
      %1154 = vmax.xlane.f32.xlu0 %v1137
      %v1155 = vpop.xlane.xlu0 %1154
      %1156 = vmax.xlane.f32.xlu0 %v1140
      %v1157 = vpop.xlane.xlu0 %1156
      %1158 = vmax.xlane.f32.xlu0 %v1142
      %v1159 = vpop.xlane.xlu0 %1158
      %v1160 = vsub.f32 %v1125, %v1145
      %v1161 = vsub.f32 %v1127, %v1147
      %v1162 = vsub.f32 %v1130, %v1149
      %v1163 = vsub.f32 %v1132, %v1151
      %v1164 = vsub.f32 %v1135, %v1153
      %v1165 = vsub.f32 %v1137, %v1155
      %v1166 = vsub.f32 %v1140, %v1157
      %v1167 = vsub.f32 %v1142, %v1159
      %v1168 = vmul.f32 %v1160, 1.442695
      %v1169 = vpow.pop %v1168
      %v1170 = vmul.f32 %v1161, 1.442695
      %v1171 = vpow.pop %v1170
      %v1172 = vmul.f32 %v1162, 1.442695
      %v1173 = vpow.pop %v1172
      %v1174 = vmul.f32 %v1163, 1.442695
      %v1175 = vpow.pop %v1174
      %v1176 = vmul.f32 %v1164, 1.442695
      %v1177 = vpow.pop %v1176
      %v1178 = vmul.f32 %v1165, 1.442695
      %v1179 = vpow.pop %v1178
      %v1180 = vmul.f32 %v1166, 1.442695
      %v1181 = vpow.pop %v1180
      %v1182 = vmul.f32 %v1167, 1.442695
      %v1183 = vpow.pop %v1182
      %1184 = vadd.xlane.f32.xlu0 %v1169
      %v1185 = vpop.xlane.xlu0 %1184
      %1186 = vadd.xlane.f32.xlu0 %v1171
      %v1187 = vpop.xlane.xlu0 %1186
      %1188 = vadd.xlane.f32.xlu0 %v1173
      %v1189 = vpop.xlane.xlu0 %1188
      %1190 = vadd.xlane.f32.xlu0 %v1175
      %v1191 = vpop.xlane.xlu0 %1190
      %1192 = vadd.xlane.f32.xlu0 %v1177
      %v1193 = vpop.xlane.xlu0 %1192
      %1194 = vadd.xlane.f32.xlu0 %v1179
      %v1195 = vpop.xlane.xlu0 %1194
      %1196 = vadd.xlane.f32.xlu0 %v1181
      %v1197 = vpop.xlane.xlu0 %1196
      %1198 = vadd.xlane.f32.xlu0 %v1183
      %v1199 = vpop.xlane.xlu0 %1198
      %v1200 = vrcp.pop %v1185
      %v1201 = vrcp.pop %v1187
      %v1202 = vrcp.pop %v1189
      %v1203 = vrcp.pop %v1191
      %v1204 = vrcp.pop %v1193
      %v1205 = vrcp.pop %v1195
      %v1206 = vrcp.pop %v1197
      %v1207 = vrcp.pop %v1199
      %v1208 = vmul.f32 %v1169, %v1200
      %v1209 = vmul.f32 %v1171, %v1201
      %v1210 = vmul.f32 %v1173, %v1202
      %v1211 = vmul.f32 %v1175, %v1203
      %v1212 = vmul.f32 %v1177, %v1204
      %v1213 = vmul.f32 %v1179, %v1205
      %v1214 = vmul.f32 %v1181, %v1206
      %v1215 = vmul.f32 %v1183, %v1207
      %v1216 = vpack.c.bf16 %v1209, %v1208
      %v1217 = vpack.c.bf16 %v1211, %v1210
      %v1218 = vpack.c.bf16 %v1213, %v1212
      %v1219 = vpack.c.bf16 %v1215, %v1214
      %v1236 = vunpack.c.l.b16 %v986
      %v1237 = vunpack.c.l.b16 %v987
      %v1238 = vunpack.c.l.b16 %v988
      %v1239 = vunpack.c.l.b16 %v989
      %v1240 = vunpack.c.l.b16 %v990
      %v1241 = vunpack.c.l.b16 %v991
      %v1242 = vunpack.c.l.b16 %v992
      %v1243 = vunpack.c.l.b16 %v993
      %v1244 = vunpack.c.l.b16 %v994
      %v1245 = vunpack.c.l.b16 %v995
      %v1246 = vunpack.c.l.b16 %v996
      %v1247 = vunpack.c.l.b16 %v997
      %v1248 = vunpack.c.l.b16 %v998
      %v1249 = vunpack.c.l.b16 %v999
      %v1250 = vunpack.c.l.b16 %v1000
      %v1251 = vunpack.c.l.b16 %v1001
      %v1252 = vpack.c.b16 %v1237, %v1236
      %v1253 = vpack.c.b16 %v1239, %v1238
      %v1254 = vpack.c.b16 %v1241, %v1240
      %v1255 = vpack.c.b16 %v1243, %v1242
      %v1256 = vpack.c.b16 %v1245, %v1244
      %v1257 = vpack.c.b16 %v1247, %v1246
      %v1258 = vpack.c.b16 %v1249, %v1248
      %v1259 = vpack.c.b16 %v1251, %v1250
      %1268 = vmatpush.bf16.msra.mxu0 %v1259
      %1269 = vmatpush.bf16.msra.mxu0 %v1258
      %1270 = vmatpush.bf16.msra.mxu0 %v1257
      %1271 = vmatpush.bf16.msra.mxu0 %v1256
      %1272 = vmatpush.bf16.msra.mxu0 %v1255
      %1273 = vmatpush.bf16.msra.mxu0 %v1254
      %1274 = vmatpush.bf16.msra.mxu0 %v1253
      %1275 = vmatpush.bf16.msra.mxu0 %v1252
      %1276 = vmatmul.bf16.gmra.mxu0 %v1216
      %v1277 = vpop.f32.mrf.mxu0
      %v1278 = vadd.f32 0.0, %v1277
      %v1279 = vpop.f32.mrf.mxu0
      %v1280 = vadd.f32 0.0, %v1279
      %1281 = vmatmul.bf16.gmra.mxu0 %v1217
      %v1282 = vpop.f32.mrf.mxu0
      %v1283 = vadd.f32 0.0, %v1282
      %v1284 = vpop.f32.mrf.mxu0
      %v1285 = vadd.f32 0.0, %v1284
      %1286 = vmatmul.bf16.gmra.mxu0 %v1218
      %v1287 = vpop.f32.mrf.mxu0
      %v1288 = vadd.f32 0.0, %v1287
      %v1289 = vpop.f32.mrf.mxu0
      %v1290 = vadd.f32 0.0, %v1289
      %1291 = vmatmul.bf16.gmra.mxu0 %v1219
      %v1292 = vpop.f32.mrf.mxu0
      %v1293 = vadd.f32 0.0, %v1292
      %v1294 = vpop.f32.mrf.mxu0
      %v1295 = vadd.f32 0.0, %v1294
      %1296 = vdwg.mxu0
      %v1297 = vpack.c.bf16 %v1278, %v1278
      %v1298 = vpack.c.bf16 %v1280, %v1280
      %v1299 = vpack.c.bf16 %v1283, %v1283
      %v1300 = vpack.c.bf16 %v1285, %v1285
      %v1301 = vpack.c.bf16 %v1288, %v1288
      %v1302 = vpack.c.bf16 %v1290, %v1290
      %v1303 = vpack.c.bf16 %v1293, %v1293
      %v1304 = vpack.c.bf16 %v1295, %v1295
      %vm1305 = vcmask 125952
      %1306 = vst.msk [vmem:[#allocation3] sm:$0xf] %vm1305, %v1297
      %1307 = vst.msk [vmem:[#allocation3 + $0x4] sm:$0xf] %vm1305, %v1298
      %1308 = vst.msk [vmem:[#allocation3 + $0x8] sm:$0xf] %vm1305, %v1299
      %1309 = vst.msk [vmem:[#allocation3 + $0xc] sm:$0xf] %vm1305, %v1300
      %1310 = vst.msk [vmem:[#allocation3 + $0x10] sm:$0xf] %vm1305, %v1301
      %1311 = vst.msk [vmem:[#allocation3 + $0x14] sm:$0xf] %vm1305, %v1302
      %1312 = vst.msk [vmem:[#allocation3 + $0x18] sm:$0xf] %vm1305, %v1303
      %1313 = vst.msk [vmem:[#allocation3 + $0x1c] sm:$0xf] %vm1305, %v1304
      %v1314 = vld [vmem:[%s961] sm:$0xf]
      %v1315 = vld [vmem:[%s961 + $0x8] sm:$0xf]
      %v1316 = vld [vmem:[%s961 + $0x10] sm:$0xf]
      %v1317 = vld [vmem:[%s961 + $0x18] sm:$0xf]
      %v1318 = vld [vmem:[%s961 + $0x20] sm:$0xf]
      %v1319 = vld [vmem:[%s961 + $0x28] sm:$0xf]
      %v1320 = vld [vmem:[%s961 + $0x30] sm:$0xf]
      %v1321 = vld [vmem:[%s961 + $0x38] sm:$0xf]
      %v1322 = vld [vmem:[#allocation2] sm:$0xf]
      %v1323 = vld [vmem:[#allocation2 + $0x8] sm:$0xf]
      %v1324 = vld [vmem:[#allocation2 + $0x10] sm:$0xf]
      %v1325 = vld [vmem:[#allocation2 + $0x18] sm:$0xf]
      %v1326 = vld [vmem:[#allocation2 + $0x20] sm:$0xf]
      %v1327 = vld [vmem:[#allocation2 + $0x28] sm:$0xf]
      %v1328 = vld [vmem:[#allocation2 + $0x30] sm:$0xf]
      %v1329 = vld [vmem:[#allocation2 + $0x38] sm:$0xf]
      %v1330 = vld [vmem:[#allocation2 + $0x40] sm:$0xf]
      %v1331 = vld [vmem:[#allocation2 + $0x48] sm:$0xf]
      %v1332 = vld [vmem:[#allocation2 + $0x50] sm:$0xf]
      %v1333 = vld [vmem:[#allocation2 + $0x58] sm:$0xf]
      %v1334 = vld [vmem:[#allocation2 + $0x60] sm:$0xf]
      %v1335 = vld [vmem:[#allocation2 + $0x68] sm:$0xf]
      %v1336 = vld [vmem:[#allocation2 + $0x70] sm:$0xf]
      %v1337 = vld [vmem:[#allocation2 + $0x78] sm:$0xf]
      %v1338 = vld [vmem:[#allocation2 + $0x4] sm:$0xf]
      %v1339 = vld [vmem:[#allocation2 + $0xc] sm:$0xf]
      %v1340 = vld [vmem:[#allocation2 + $0x14] sm:$0xf]
      %v1341 = vld [vmem:[#allocation2 + $0x1c] sm:$0xf]
      %v1342 = vld [vmem:[#allocation2 + $0x24] sm:$0xf]
      %v1343 = vld [vmem:[#allocation2 + $0x2c] sm:$0xf]
      %v1344 = vld [vmem:[#allocation2 + $0x34] sm:$0xf]
      %v1345 = vld [vmem:[#allocation2 + $0x3c] sm:$0xf]
      %v1346 = vld [vmem:[#allocation2 + $0x44] sm:$0xf]
      %v1347 = vld [vmem:[#allocation2 + $0x4c] sm:$0xf]
      %v1348 = vld [vmem:[#allocation2 + $0x54] sm:$0xf]
      %v1349 = vld [vmem:[#allocation2 + $0x5c] sm:$0xf]
      %v1350 = vld [vmem:[#allocation2 + $0x64] sm:$0xf]
      %v1351 = vld [vmem:[#allocation2 + $0x6c] sm:$0xf]
      %v1352 = vld [vmem:[#allocation2 + $0x74] sm:$0xf]
      %v1353 = vld [vmem:[#allocation2 + $0x7c] sm:$0xf]
      %v1362 = vunpack.c.l.b16 %v1314
      %v1363 = vunpack.c.l.b16 %v1315
      %v1364 = vunpack.c.l.b16 %v1316
      %v1365 = vunpack.c.l.b16 %v1317
      %v1366 = vunpack.c.l.b16 %v1318
      %v1367 = vunpack.c.l.b16 %v1319
      %v1368 = vunpack.c.l.b16 %v1320
      %v1369 = vunpack.c.l.b16 %v1321
      %v1370 = vpack.c.b16 %v1363, %v1362
      %v1371 = vpack.c.b16 %v1365, %v1364
      %v1372 = vpack.c.b16 %v1367, %v1366
      %v1373 = vpack.c.b16 %v1369, %v1368
      %1374 = vrot.lane.b32.xlu0 %v1370, 112
      %v1375 = vpop.permute.xlu0 %1374
      %1376 = vrot.lane.b32.xlu0 %v1371, 112
      %v1377 = vpop.permute.xlu0 %1376
      %1378 = vrot.lane.b32.xlu0 %v1372, 112
      %v1379 = vpop.permute.xlu0 %1378
      %1380 = vrot.lane.b32.xlu0 %v1373, 112
      %v1381 = vpop.permute.xlu0 %1380
      %v1398 = vunpack.c.l.b16 %v1322
      %v1399 = vunpack.c.l.b16 %v1323
      %v1400 = vunpack.c.l.b16 %v1324
      %v1401 = vunpack.c.l.b16 %v1325
      %v1402 = vunpack.c.l.b16 %v1326
      %v1403 = vunpack.c.l.b16 %v1327
      %v1404 = vunpack.c.l.b16 %v1328
      %v1405 = vunpack.c.l.b16 %v1329
      %v1406 = vunpack.c.l.b16 %v1330
      %v1407 = vunpack.c.l.b16 %v1331
      %v1408 = vunpack.c.l.b16 %v1332
      %v1409 = vunpack.c.l.b16 %v1333
      %v1410 = vunpack.c.l.b16 %v1334
      %v1411 = vunpack.c.l.b16 %v1335
      %v1412 = vunpack.c.l.b16 %v1336
      %v1413 = vunpack.c.l.b16 %v1337
      %v1414 = vpack.c.b16 %v1399, %v1398
      %v1415 = vpack.c.b16 %v1401, %v1400
      %v1416 = vpack.c.b16 %v1403, %v1402
      %v1417 = vpack.c.b16 %v1405, %v1404
      %v1418 = vpack.c.b16 %v1407, %v1406
      %v1419 = vpack.c.b16 %v1409, %v1408
      %v1420 = vpack.c.b16 %v1411, %v1410
      %v1421 = vpack.c.b16 %v1413, %v1412
      %1422 = vrot.lane.b32.xlu0 %v1414, 48
      %v1423 = vpop.permute.xlu0 %1422
      %1424 = vrot.lane.b32.xlu0 %v1415, 48
      %v1425 = vpop.permute.xlu0 %1424
      %1426 = vrot.lane.b32.xlu0 %v1416, 48
      %v1427 = vpop.permute.xlu0 %1426
      %1428 = vrot.lane.b32.xlu0 %v1417, 48
      %v1429 = vpop.permute.xlu0 %1428
      %1430 = vrot.lane.b32.xlu0 %v1418, 48
      %v1431 = vpop.permute.xlu0 %1430
      %1432 = vrot.lane.b32.xlu0 %v1419, 48
      %v1433 = vpop.permute.xlu0 %1432
      %1434 = vrot.lane.b32.xlu0 %v1420, 48
      %v1435 = vpop.permute.xlu0 %1434
      %1436 = vrot.lane.b32.xlu0 %v1421, 48
      %v1437 = vpop.permute.xlu0 %1436
      %v1439 = vsel %vm1078, %v1375, 0
      %v1442 = vsel %vm1078, %v1377, 0
      %v1445 = vsel %vm1078, %v1379, 0
      %v1448 = vsel %vm1078, %v1381, 0
      %v1451 = vsel %vm1078, %v1423, 0
      %v1454 = vsel %vm1078, %v1425, 0
      %v1457 = vsel %vm1078, %v1427, 0
      %v1460 = vsel %vm1078, %v1429, 0
      %v1463 = vsel %vm1078, %v1431, 0
      %v1466 = vsel %vm1078, %v1433, 0
      %v1469 = vsel %vm1078, %v1435, 0
      %v1472 = vsel %vm1078, %v1437, 0
      %1474 = vmatpush.bf16.xpose.msra.mxu0 %v1472
      %1475 = vmatpush.bf16.xpose.msra.mxu0 %v1469
      %1476 = vmatpush.bf16.xpose.msra.mxu0 %v1466
      %1477 = vmatpush.bf16.xpose.msra.mxu0 %v1463
      %1478 = vmatpush.bf16.xpose.msra.mxu0 %v1460
      %1479 = vmatpush.bf16.xpose.msra.mxu0 %v1457
      %1480 = vmatpush.bf16.xpose.msra.mxu0 %v1454
      %1481 = vmatpush.bf16.xpose.msra.mxu0 %v1451
      %1482 = vmatmul.bf16.gmra.mxu0 %v1439
      %v1483 = vpop.f32.mrf.mxu0
      %v1484 = vadd.f32 0.0, %v1483
      %v1485 = vpop.f32.mrf.mxu0
      %v1486 = vadd.f32 0.0, %v1485
      %1487 = vmatmul.bf16.gmra.mxu0 %v1442
      %v1488 = vpop.f32.mrf.mxu0
      %v1489 = vadd.f32 0.0, %v1488
      %v1490 = vpop.f32.mrf.mxu0
      %v1491 = vadd.f32 0.0, %v1490
      %1492 = vmatmul.bf16.gmra.mxu0 %v1445
      %v1493 = vpop.f32.mrf.mxu0
      %v1494 = vadd.f32 0.0, %v1493
      %v1495 = vpop.f32.mrf.mxu0
      %v1496 = vadd.f32 0.0, %v1495
      %1497 = vmatmul.bf16.gmra.mxu0 %v1448
      %v1498 = vpop.f32.mrf.mxu0
      %v1499 = vadd.f32 0.0, %v1498
      %v1500 = vpop.f32.mrf.mxu0
      %v1501 = vadd.f32 0.0, %v1500
      %1502 = vdwg.mxu0
      %1503 = vmax.xlane.f32.xlu0 %v1484
      %v1504 = vpop.xlane.xlu0 %1503
      %1505 = vmax.xlane.f32.xlu0 %v1486
      %v1506 = vpop.xlane.xlu0 %1505
      %1507 = vmax.xlane.f32.xlu0 %v1489
      %v1508 = vpop.xlane.xlu0 %1507
      %1509 = vmax.xlane.f32.xlu0 %v1491
      %v1510 = vpop.xlane.xlu0 %1509
      %1511 = vmax.xlane.f32.xlu0 %v1494
      %v1512 = vpop.xlane.xlu0 %1511
      %1513 = vmax.xlane.f32.xlu0 %v1496
      %v1514 = vpop.xlane.xlu0 %1513
      %1515 = vmax.xlane.f32.xlu0 %v1499
      %v1516 = vpop.xlane.xlu0 %1515
      %1517 = vmax.xlane.f32.xlu0 %v1501
      %v1518 = vpop.xlane.xlu0 %1517
      %v1519 = vsub.f32 %v1484, %v1504
      %v1520 = vsub.f32 %v1486, %v1506
      %v1521 = vsub.f32 %v1489, %v1508
      %v1522 = vsub.f32 %v1491, %v1510
      %v1523 = vsub.f32 %v1494, %v1512
      %v1524 = vsub.f32 %v1496, %v1514
      %v1525 = vsub.f32 %v1499, %v1516
      %v1526 = vsub.f32 %v1501, %v1518
      %v1527 = vmul.f32 %v1519, 1.442695
      %v1528 = vpow.pop %v1527
      %v1529 = vmul.f32 %v1520, 1.442695
      %v1530 = vpow.pop %v1529
      %v1531 = vmul.f32 %v1521, 1.442695
      %v1532 = vpow.pop %v1531
      %v1533 = vmul.f32 %v1522, 1.442695
      %v1534 = vpow.pop %v1533
      %v1535 = vmul.f32 %v1523, 1.442695
      %v1536 = vpow.pop %v1535
      %v1537 = vmul.f32 %v1524, 1.442695
      %v1538 = vpow.pop %v1537
      %v1539 = vmul.f32 %v1525, 1.442695
      %v1540 = vpow.pop %v1539
      %v1541 = vmul.f32 %v1526, 1.442695
      %v1542 = vpow.pop %v1541
      %1543 = vadd.xlane.f32.xlu0 %v1528
      %v1544 = vpop.xlane.xlu0 %1543
      %1545 = vadd.xlane.f32.xlu0 %v1530
      %v1546 = vpop.xlane.xlu0 %1545
      %1547 = vadd.xlane.f32.xlu0 %v1532
      %v1548 = vpop.xlane.xlu0 %1547
      %1549 = vadd.xlane.f32.xlu0 %v1534
      %v1550 = vpop.xlane.xlu0 %1549
      %1551 = vadd.xlane.f32.xlu0 %v1536
      %v1552 = vpop.xlane.xlu0 %1551
      %1553 = vadd.xlane.f32.xlu0 %v1538
      %v1554 = vpop.xlane.xlu0 %1553
      %1555 = vadd.xlane.f32.xlu0 %v1540
      %v1556 = vpop.xlane.xlu0 %1555
      %1557 = vadd.xlane.f32.xlu0 %v1542
      %v1558 = vpop.xlane.xlu0 %1557
      %v1559 = vrcp.pop %v1544
      %v1560 = vrcp.pop %v1546
      %v1561 = vrcp.pop %v1548
      %v1562 = vrcp.pop %v1550
      %v1563 = vrcp.pop %v1552
      %v1564 = vrcp.pop %v1554
      %v1565 = vrcp.pop %v1556
      %v1566 = vrcp.pop %v1558
      %v1567 = vmul.f32 %v1528, %v1559
      %v1568 = vmul.f32 %v1530, %v1560
      %v1569 = vmul.f32 %v1532, %v1561
      %v1570 = vmul.f32 %v1534, %v1562
      %v1571 = vmul.f32 %v1536, %v1563
      %v1572 = vmul.f32 %v1538, %v1564
      %v1573 = vmul.f32 %v1540, %v1565
      %v1574 = vmul.f32 %v1542, %v1566
      %v1575 = vpack.c.bf16 %v1568, %v1567
      %v1576 = vpack.c.bf16 %v1570, %v1569
      %v1577 = vpack.c.bf16 %v1572, %v1571
      %v1578 = vpack.c.bf16 %v1574, %v1573
      %v1595 = vunpack.c.l.b16 %v1338
      %v1596 = vunpack.c.l.b16 %v1339
      %v1597 = vunpack.c.l.b16 %v1340
      %v1598 = vunpack.c.l.b16 %v1341
      %v1599 = vunpack.c.l.b16 %v1342
      %v1600 = vunpack.c.l.b16 %v1343
      %v1601 = vunpack.c.l.b16 %v1344
      %v1602 = vunpack.c.l.b16 %v1345
      %v1603 = vunpack.c.l.b16 %v1346
      %v1604 = vunpack.c.l.b16 %v1347
      %v1605 = vunpack.c.l.b16 %v1348
      %v1606 = vunpack.c.l.b16 %v1349
      %v1607 = vunpack.c.l.b16 %v1350
      %v1608 = vunpack.c.l.b16 %v1351
      %v1609 = vunpack.c.l.b16 %v1352
      %v1610 = vunpack.c.l.b16 %v1353
      %v1611 = vpack.c.b16 %v1596, %v1595
      %v1612 = vpack.c.b16 %v1598, %v1597
      %v1613 = vpack.c.b16 %v1600, %v1599
      %v1614 = vpack.c.b16 %v1602, %v1601
      %v1615 = vpack.c.b16 %v1604, %v1603
      %v1616 = vpack.c.b16 %v1606, %v1605
      %v1617 = vpack.c.b16 %v1608, %v1607
      %v1618 = vpack.c.b16 %v1610, %v1609
      %1619 = vrot.lane.b32.xlu0 %v1611, 112
      %v1620 = vpop.permute.xlu0 %1619
      %1621 = vrot.lane.b32.xlu0 %v1612, 112
      %v1622 = vpop.permute.xlu0 %1621
      %1623 = vrot.lane.b32.xlu0 %v1613, 112
      %v1624 = vpop.permute.xlu0 %1623
      %1625 = vrot.lane.b32.xlu0 %v1614, 112
      %v1626 = vpop.permute.xlu0 %1625
      %1627 = vrot.lane.b32.xlu0 %v1615, 112
      %v1628 = vpop.permute.xlu0 %1627
      %1629 = vrot.lane.b32.xlu0 %v1616, 112
      %v1630 = vpop.permute.xlu0 %1629
      %1631 = vrot.lane.b32.xlu0 %v1617, 112
      %v1632 = vpop.permute.xlu0 %1631
      %1633 = vrot.lane.b32.xlu0 %v1618, 112
      %v1634 = vpop.permute.xlu0 %1633
      %1643 = vmatpush.bf16.msra.mxu0 %v1634
      %1644 = vmatpush.bf16.msra.mxu0 %v1632
      %1645 = vmatpush.bf16.msra.mxu0 %v1630
      %1646 = vmatpush.bf16.msra.mxu0 %v1628
      %1647 = vmatpush.bf16.msra.mxu0 %v1626
      %1648 = vmatpush.bf16.msra.mxu0 %v1624
      %1649 = vmatpush.bf16.msra.mxu0 %v1622
      %1650 = vmatpush.bf16.msra.mxu0 %v1620
      %1651 = vmatmul.bf16.gmra.mxu0 %v1575
      %v1652 = vpop.f32.mrf.mxu0
      %v1653 = vadd.f32 0.0, %v1652
      %v1654 = vpop.f32.mrf.mxu0
      %v1655 = vadd.f32 0.0, %v1654
      %1656 = vmatmul.bf16.gmra.mxu0 %v1576
      %v1657 = vpop.f32.mrf.mxu0
      %v1658 = vadd.f32 0.0, %v1657
      %v1659 = vpop.f32.mrf.mxu0
      %v1660 = vadd.f32 0.0, %v1659
      %1661 = vmatmul.bf16.gmra.mxu0 %v1577
      %v1662 = vpop.f32.mrf.mxu0
      %v1663 = vadd.f32 0.0, %v1662
      %v1664 = vpop.f32.mrf.mxu0
      %v1665 = vadd.f32 0.0, %v1664
      %1666 = vmatmul.bf16.gmra.mxu0 %v1578
      %v1667 = vpop.f32.mrf.mxu0
      %v1668 = vadd.f32 0.0, %v1667
      %v1669 = vpop.f32.mrf.mxu0
      %v1670 = vadd.f32 0.0, %v1669
      %1671 = vdwg.mxu0
      %v1672 = vpack.c.bf16 %v1653, %v1653
      %v1673 = vpack.c.bf16 %v1655, %v1655
      %v1674 = vpack.c.bf16 %v1658, %v1658
      %v1675 = vpack.c.bf16 %v1660, %v1660
      %v1676 = vpack.c.bf16 %v1663, %v1663
      %v1677 = vpack.c.bf16 %v1665, %v1665
      %v1678 = vpack.c.bf16 %v1668, %v1668
      %v1679 = vpack.c.bf16 %v1670, %v1670
      %1688 = vrot.lane.b32.xlu0 %v1672, 16
      %v1689 = vpop.permute.xlu0 %1688
      %1690 = vrot.lane.b32.xlu0 %v1673, 16
      %v1691 = vpop.permute.xlu0 %1690
      %1692 = vrot.lane.b32.xlu0 %v1674, 16
      %v1693 = vpop.permute.xlu0 %1692
      %1694 = vrot.lane.b32.xlu0 %v1675, 16
      %v1695 = vpop.permute.xlu0 %1694
      %1696 = vrot.lane.b32.xlu0 %v1676, 16
      %v1697 = vpop.permute.xlu0 %1696
      %1698 = vrot.lane.b32.xlu0 %v1677, 16
      %v1699 = vpop.permute.xlu0 %1698
      %1700 = vrot.lane.b32.xlu0 %v1678, 16
      %v1701 = vpop.permute.xlu0 %1700
      %1702 = vrot.lane.b32.xlu0 %v1679, 16
      %v1703 = vpop.permute.xlu0 %1702
      %vm1712 = vcmask 257152
      %1713 = vst.msk [vmem:[#allocation3] sm:$0xf] %vm1712, %v1689
      %1714 = vst.msk [vmem:[#allocation3 + $0x4] sm:$0xf] %vm1712, %v1691
      %1715 = vst.msk [vmem:[#allocation3 + $0x8] sm:$0xf] %vm1712, %v1693
      %1716 = vst.msk [vmem:[#allocation3 + $0xc] sm:$0xf] %vm1712, %v1695
      %1717 = vst.msk [vmem:[#allocation3 + $0x10] sm:$0xf] %vm1712, %v1697
      %1718 = vst.msk [vmem:[#allocation3 + $0x14] sm:$0xf] %vm1712, %v1699
      %1719 = vst.msk [vmem:[#allocation3 + $0x18] sm:$0xf] %vm1712, %v1701
      %1720 = vst.msk [vmem:[#allocation3 + $0x1c] sm:$0xf] %vm1712, %v1703
      %v1721 = vld [vmem:[%s961] sm:$0xf]
      %v1722 = vld [vmem:[%s961 + $0x8] sm:$0xf]
      %v1723 = vld [vmem:[%s961 + $0x10] sm:$0xf]
      %v1724 = vld [vmem:[%s961 + $0x18] sm:$0xf]
      %v1725 = vld [vmem:[%s961 + $0x20] sm:$0xf]
      %v1726 = vld [vmem:[%s961 + $0x28] sm:$0xf]
      %v1727 = vld [vmem:[%s961 + $0x30] sm:$0xf]
      %v1728 = vld [vmem:[%s961 + $0x38] sm:$0xf]
      %v1729 = vld [vmem:[#allocation2] sm:$0xf]
      %v1730 = vld [vmem:[#allocation2 + $0x8] sm:$0xf]
      %v1731 = vld [vmem:[#allocation2 + $0x10] sm:$0xf]
      %v1732 = vld [vmem:[#allocation2 + $0x18] sm:$0xf]
      %v1733 = vld [vmem:[#allocation2 + $0x20] sm:$0xf]
      %v1734 = vld [vmem:[#allocation2 + $0x28] sm:$0xf]
      %v1735 = vld [vmem:[#allocation2 + $0x30] sm:$0xf]
      %v1736 = vld [vmem:[#allocation2 + $0x38] sm:$0xf]
      %v1737 = vld [vmem:[#allocation2 + $0x40] sm:$0xf]
      %v1738 = vld [vmem:[#allocation2 + $0x48] sm:$0xf]
      %v1739 = vld [vmem:[#allocation2 + $0x50] sm:$0xf]
      %v1740 = vld [vmem:[#allocation2 + $0x58] sm:$0xf]
      %v1741 = vld [vmem:[#allocation2 + $0x60] sm:$0xf]
      %v1742 = vld [vmem:[#allocation2 + $0x68] sm:$0xf]
      %v1743 = vld [vmem:[#allocation2 + $0x70] sm:$0xf]
      %v1744 = vld [vmem:[#allocation2 + $0x78] sm:$0xf]
      %v1745 = vld [vmem:[#allocation2 + $0x4] sm:$0xf]
      %v1746 = vld [vmem:[#allocation2 + $0xc] sm:$0xf]
      %v1747 = vld [vmem:[#allocation2 + $0x14] sm:$0xf]
      %v1748 = vld [vmem:[#allocation2 + $0x1c] sm:$0xf]
      %v1749 = vld [vmem:[#allocation2 + $0x24] sm:$0xf]
      %v1750 = vld [vmem:[#allocation2 + $0x2c] sm:$0xf]
      %v1751 = vld [vmem:[#allocation2 + $0x34] sm:$0xf]
      %v1752 = vld [vmem:[#allocation2 + $0x3c] sm:$0xf]
      %v1753 = vld [vmem:[#allocation2 + $0x44] sm:$0xf]
      %v1754 = vld [vmem:[#allocation2 + $0x4c] sm:$0xf]
      %v1755 = vld [vmem:[#allocation2 + $0x54] sm:$0xf]
      %v1756 = vld [vmem:[#allocation2 + $0x5c] sm:$0xf]
      %v1757 = vld [vmem:[#allocation2 + $0x64] sm:$0xf]
      %v1758 = vld [vmem:[#allocation2 + $0x6c] sm:$0xf]
      %v1759 = vld [vmem:[#allocation2 + $0x74] sm:$0xf]
      %v1760 = vld [vmem:[#allocation2 + $0x7c] sm:$0xf]
      %v1769 = vunpack.c.l.b16 %v1721
      %v1770 = vunpack.c.l.b16 %v1722
      %v1771 = vunpack.c.l.b16 %v1723
      %v1772 = vunpack.c.l.b16 %v1724
      %v1773 = vunpack.c.l.b16 %v1725
      %v1774 = vunpack.c.l.b16 %v1726
      %v1775 = vunpack.c.l.b16 %v1727
      %v1776 = vunpack.c.l.b16 %v1728
      %v1777 = vpack.c.b16 %v1770, %v1769
      %v1778 = vpack.c.b16 %v1772, %v1771
      %v1779 = vpack.c.b16 %v1774, %v1773
      %v1780 = vpack.c.b16 %v1776, %v1775
      %1781 = vrot.lane.b32.xlu0 %v1777, 96
      %v1782 = vpop.permute.xlu0 %1781
      %1783 = vrot.lane.b32.xlu0 %v1778, 96
      %v1784 = vpop.permute.xlu0 %1783
      %1785 = vrot.lane.b32.xlu0 %v1779, 96
      %v1786 = vpop.permute.xlu0 %1785
      %1787 = vrot.lane.b32.xlu0 %v1780, 96
      %v1788 = vpop.permute.xlu0 %1787
      %v1805 = vunpack.c.l.b16 %v1729
      %v1806 = vunpack.c.l.b16 %v1730
      %v1807 = vunpack.c.l.b16 %v1731
      %v1808 = vunpack.c.l.b16 %v1732
      %v1809 = vunpack.c.l.b16 %v1733
      %v1810 = vunpack.c.l.b16 %v1734
      %v1811 = vunpack.c.l.b16 %v1735
      %v1812 = vunpack.c.l.b16 %v1736
      %v1813 = vunpack.c.l.b16 %v1737
      %v1814 = vunpack.c.l.b16 %v1738
      %v1815 = vunpack.c.l.b16 %v1739
      %v1816 = vunpack.c.l.b16 %v1740
      %v1817 = vunpack.c.l.b16 %v1741
      %v1818 = vunpack.c.l.b16 %v1742
      %v1819 = vunpack.c.l.b16 %v1743
      %v1820 = vunpack.c.l.b16 %v1744
      %v1821 = vpack.c.b16 %v1806, %v1805
      %v1822 = vpack.c.b16 %v1808, %v1807
      %v1823 = vpack.c.b16 %v1810, %v1809
      %v1824 = vpack.c.b16 %v1812, %v1811
      %v1825 = vpack.c.b16 %v1814, %v1813
      %v1826 = vpack.c.b16 %v1816, %v1815
      %v1827 = vpack.c.b16 %v1818, %v1817
      %v1828 = vpack.c.b16 %v1820, %v1819
      %1829 = vrot.lane.b32.xlu0 %v1821, 32
      %v1830 = vpop.permute.xlu0 %1829
      %1831 = vrot.lane.b32.xlu0 %v1822, 32
      %v1832 = vpop.permute.xlu0 %1831
      %1833 = vrot.lane.b32.xlu0 %v1823, 32
      %v1834 = vpop.permute.xlu0 %1833
      %1835 = vrot.lane.b32.xlu0 %v1824, 32
      %v1836 = vpop.permute.xlu0 %1835
      %1837 = vrot.lane.b32.xlu0 %v1825, 32
      %v1838 = vpop.permute.xlu0 %1837
      %1839 = vrot.lane.b32.xlu0 %v1826, 32
      %v1840 = vpop.permute.xlu0 %1839
      %1841 = vrot.lane.b32.xlu0 %v1827, 32
      %v1842 = vpop.permute.xlu0 %1841
      %1843 = vrot.lane.b32.xlu0 %v1828, 32
      %v1844 = vpop.permute.xlu0 %1843
      %v1846 = vsel %vm1078, %v1782, 0
      %v1849 = vsel %vm1078, %v1784, 0
      %v1852 = vsel %vm1078, %v1786, 0
      %v1855 = vsel %vm1078, %v1788, 0
      %v1858 = vsel %vm1078, %v1830, 0
      %v1861 = vsel %vm1078, %v1832, 0
      %v1864 = vsel %vm1078, %v1834, 0
      %v1867 = vsel %vm1078, %v1836, 0
      %v1870 = vsel %vm1078, %v1838, 0
      %v1873 = vsel %vm1078, %v1840, 0
      %v1876 = vsel %vm1078, %v1842, 0
      %v1879 = vsel %vm1078, %v1844, 0
      %1881 = vmatpush.bf16.xpose.msra.mxu0 %v1879
      %1882 = vmatpush.bf16.xpose.msra.mxu0 %v1876
      %1883 = vmatpush.bf16.xpose.msra.mxu0 %v1873
      %1884 = vmatpush.bf16.xpose.msra.mxu0 %v1870
      %1885 = vmatpush.bf16.xpose.msra.mxu0 %v1867
      %1886 = vmatpush.bf16.xpose.msra.mxu0 %v1864
      %1887 = vmatpush.bf16.xpose.msra.mxu0 %v1861
      %1888 = vmatpush.bf16.xpose.msra.mxu0 %v1858
      %1889 = vmatmul.bf16.gmra.mxu0 %v1846
      %v1890 = vpop.f32.mrf.mxu0
      %v1891 = vadd.f32 0.0, %v1890
      %v1892 = vpop.f32.mrf.mxu0
      %v1893 = vadd.f32 0.0, %v1892
      %1894 = vmatmul.bf16.gmra.mxu0 %v1849
      %v1895 = vpop.f32.mrf.mxu0
      %v1896 = vadd.f32 0.0, %v1895
      %v1897 = vpop.f32.mrf.mxu0
      %v1898 = vadd.f32 0.0, %v1897
      %1899 = vmatmul.bf16.gmra.mxu0 %v1852
      %v1900 = vpop.f32.mrf.mxu0
      %v1901 = vadd.f32 0.0, %v1900
      %v1902 = vpop.f32.mrf.mxu0
      %v1903 = vadd.f32 0.0, %v1902
      %1904 = vmatmul.bf16.gmra.mxu0 %v1855
      %v1905 = vpop.f32.mrf.mxu0
      %v1906 = vadd.f32 0.0, %v1905
      %v1907 = vpop.f32.mrf.mxu0
      %v1908 = vadd.f32 0.0, %v1907
      %1909 = vdwg.mxu0
      %1910 = vmax.xlane.f32.xlu0 %v1891
      %v1911 = vpop.xlane.xlu0 %1910
      %1912 = vmax.xlane.f32.xlu0 %v1893
      %v1913 = vpop.xlane.xlu0 %1912
      %1914 = vmax.xlane.f32.xlu0 %v1896
      %v1915 = vpop.xlane.xlu0 %1914
      %1916 = vmax.xlane.f32.xlu0 %v1898
      %v1917 = vpop.xlane.xlu0 %1916
      %1918 = vmax.xlane.f32.xlu0 %v1901
      %v1919 = vpop.xlane.xlu0 %1918
      %1920 = vmax.xlane.f32.xlu0 %v1903
      %v1921 = vpop.xlane.xlu0 %1920
      %1922 = vmax.xlane.f32.xlu0 %v1906
      %v1923 = vpop.xlane.xlu0 %1922
      %1924 = vmax.xlane.f32.xlu0 %v1908
      %v1925 = vpop.xlane.xlu0 %1924
      %v1926 = vsub.f32 %v1891, %v1911
      %v1927 = vsub.f32 %v1893, %v1913
      %v1928 = vsub.f32 %v1896, %v1915
      %v1929 = vsub.f32 %v1898, %v1917
      %v1930 = vsub.f32 %v1901, %v1919
      %v1931 = vsub.f32 %v1903, %v1921
      %v1932 = vsub.f32 %v1906, %v1923
      %v1933 = vsub.f32 %v1908, %v1925
      %v1934 = vmul.f32 %v1926, 1.442695
      %v1935 = vpow.pop %v1934
      %v1936 = vmul.f32 %v1927, 1.442695
      %v1937 = vpow.pop %v1936
      %v1938 = vmul.f32 %v1928, 1.442695
      %v1939 = vpow.pop %v1938
      %v1940 = vmul.f32 %v1929, 1.442695
      %v1941 = vpow.pop %v1940
      %v1942 = vmul.f32 %v1930, 1.442695
      %v1943 = vpow.pop %v1942
      %v1944 = vmul.f32 %v1931, 1.442695
      %v1945 = vpow.pop %v1944
      %v1946 = vmul.f32 %v1932, 1.442695
      %v1947 = vpow.pop %v1946
      %v1948 = vmul.f32 %v1933, 1.442695
      %v1949 = vpow.pop %v1948
      %1950 = vadd.xlane.f32.xlu0 %v1935
      %v1951 = vpop.xlane.xlu0 %1950
      %1952 = vadd.xlane.f32.xlu0 %v1937
      %v1953 = vpop.xlane.xlu0 %1952
      %1954 = vadd.xlane.f32.xlu0 %v1939
      %v1955 = vpop.xlane.xlu0 %1954
      %1956 = vadd.xlane.f32.xlu0 %v1941
      %v1957 = vpop.xlane.xlu0 %1956
      %1958 = vadd.xlane.f32.xlu0 %v1943
      %v1959 = vpop.xlane.xlu0 %1958
      %1960 = vadd.xlane.f32.xlu0 %v1945
      %v1961 = vpop.xlane.xlu0 %1960
      %1962 = vadd.xlane.f32.xlu0 %v1947
      %v1963 = vpop.xlane.xlu0 %1962
      %1964 = vadd.xlane.f32.xlu0 %v1949
      %v1965 = vpop.xlane.xlu0 %1964
      %v1966 = vrcp.pop %v1951
      %v1967 = vrcp.pop %v1953
      %v1968 = vrcp.pop %v1955
      %v1969 = vrcp.pop %v1957
      %v1970 = vrcp.pop %v1959
      %v1971 = vrcp.pop %v1961
      %v1972 = vrcp.pop %v1963
      %v1973 = vrcp.pop %v1965
      %v1974 = vmul.f32 %v1935, %v1966
      %v1975 = vmul.f32 %v1937, %v1967
      %v1976 = vmul.f32 %v1939, %v1968
      %v1977 = vmul.f32 %v1941, %v1969
      %v1978 = vmul.f32 %v1943, %v1970
      %v1979 = vmul.f32 %v1945, %v1971
      %v1980 = vmul.f32 %v1947, %v1972
      %v1981 = vmul.f32 %v1949, %v1973
      %v1982 = vpack.c.bf16 %v1975, %v1974
      %v1983 = vpack.c.bf16 %v1977, %v1976
      %v1984 = vpack.c.bf16 %v1979, %v1978
      %v1985 = vpack.c.bf16 %v1981, %v1980
      %v2002 = vunpack.c.l.b16 %v1745
      %v2003 = vunpack.c.l.b16 %v1746
      %v2004 = vunpack.c.l.b16 %v1747
      %v2005 = vunpack.c.l.b16 %v1748
      %v2006 = vunpack.c.l.b16 %v1749
      %v2007 = vunpack.c.l.b16 %v1750
      %v2008 = vunpack.c.l.b16 %v1751
      %v2009 = vunpack.c.l.b16 %v1752
      %v2010 = vunpack.c.l.b16 %v1753
      %v2011 = vunpack.c.l.b16 %v1754
      %v2012 = vunpack.c.l.b16 %v1755
      %v2013 = vunpack.c.l.b16 %v1756
      %v2014 = vunpack.c.l.b16 %v1757
      %v2015 = vunpack.c.l.b16 %v1758
      %v2016 = vunpack.c.l.b16 %v1759
      %v2017 = vunpack.c.l.b16 %v1760
      %v2018 = vpack.c.b16 %v2003, %v2002
      %v2019 = vpack.c.b16 %v2005, %v2004
      %v2020 = vpack.c.b16 %v2007, %v2006
      %v2021 = vpack.c.b16 %v2009, %v2008
      %v2022 = vpack.c.b16 %v2011, %v2010
      %v2023 = vpack.c.b16 %v2013, %v2012
      %v2024 = vpack.c.b16 %v2015, %v2014
      %v2025 = vpack.c.b16 %v2017, %v2016
      %2026 = vrot.lane.b32.xlu0 %v2018, 96
      %v2027 = vpop.permute.xlu0 %2026
      %2028 = vrot.lane.b32.xlu0 %v2019, 96
      %v2029 = vpop.permute.xlu0 %2028
      %2030 = vrot.lane.b32.xlu0 %v2020, 96
      %v2031 = vpop.permute.xlu0 %2030
      %2032 = vrot.lane.b32.xlu0 %v2021, 96
      %v2033 = vpop.permute.xlu0 %2032
      %2034 = vrot.lane.b32.xlu0 %v2022, 96
      %v2035 = vpop.permute.xlu0 %2034
      %2036 = vrot.lane.b32.xlu0 %v2023, 96
      %v2037 = vpop.permute.xlu0 %2036
      %2038 = vrot.lane.b32.xlu0 %v2024, 96
      %v2039 = vpop.permute.xlu0 %2038
      %2040 = vrot.lane.b32.xlu0 %v2025, 96
      %v2041 = vpop.permute.xlu0 %2040
      %2050 = vmatpush.bf16.msra.mxu0 %v2041
      %2051 = vmatpush.bf16.msra.mxu0 %v2039
      %2052 = vmatpush.bf16.msra.mxu0 %v2037
      %2053 = vmatpush.bf16.msra.mxu0 %v2035
      %2054 = vmatpush.bf16.msra.mxu0 %v2033
      %2055 = vmatpush.bf16.msra.mxu0 %v2031
      %2056 = vmatpush.bf16.msra.mxu0 %v2029
      %2057 = vmatpush.bf16.msra.mxu0 %v2027
      %2058 = vmatmul.bf16.gmra.mxu0 %v1982
      %v2059 = vpop.f32.mrf.mxu0
      %v2060 = vadd.f32 0.0, %v2059
      %v2061 = vpop.f32.mrf.mxu0
      %v2062 = vadd.f32 0.0, %v2061
      %2063 = vmatmul.bf16.gmra.mxu0 %v1983
      %v2064 = vpop.f32.mrf.mxu0
      %v2065 = vadd.f32 0.0, %v2064
      %v2066 = vpop.f32.mrf.mxu0
      %v2067 = vadd.f32 0.0, %v2066
      %2068 = vmatmul.bf16.gmra.mxu0 %v1984
      %v2069 = vpop.f32.mrf.mxu0
      %v2070 = vadd.f32 0.0, %v2069
      %v2071 = vpop.f32.mrf.mxu0
      %v2072 = vadd.f32 0.0, %v2071
      %2073 = vmatmul.bf16.gmra.mxu0 %v1985
      %v2074 = vpop.f32.mrf.mxu0
      %v2075 = vadd.f32 0.0, %v2074
      %v2076 = vpop.f32.mrf.mxu0
      %v2077 = vadd.f32 0.0, %v2076
      %2078 = vdwg.mxu0
      %v2079 = vpack.c.bf16 %v2060, %v2060
      %v2080 = vpack.c.bf16 %v2062, %v2062
      %v2081 = vpack.c.bf16 %v2065, %v2065
      %v2082 = vpack.c.bf16 %v2067, %v2067
      %v2083 = vpack.c.bf16 %v2070, %v2070
      %v2084 = vpack.c.bf16 %v2072, %v2072
      %v2085 = vpack.c.bf16 %v2075, %v2075
      %v2086 = vpack.c.bf16 %v2077, %v2077
      %2095 = vrot.lane.b32.xlu0 %v2079, 32
      %v2096 = vpop.permute.xlu0 %2095
      %2097 = vrot.lane.b32.xlu0 %v2080, 32
      %v2098 = vpop.permute.xlu0 %2097
      %2099 = vrot.lane.b32.xlu0 %v2081, 32
      %v2100 = vpop.permute.xlu0 %2099
      %2101 = vrot.lane.b32.xlu0 %v2082, 32
      %v2102 = vpop.permute.xlu0 %2101
      %2103 = vrot.lane.b32.xlu0 %v2083, 32
      %v2104 = vpop.permute.xlu0 %2103
      %2105 = vrot.lane.b32.xlu0 %v2084, 32
      %v2106 = vpop.permute.xlu0 %2105
      %2107 = vrot.lane.b32.xlu0 %v2085, 32
      %v2108 = vpop.permute.xlu0 %2107
      %2109 = vrot.lane.b32.xlu0 %v2086, 32
      %v2110 = vpop.permute.xlu0 %2109
      %vm2119 = vcmask 388352
      %2120 = vst.msk [vmem:[#allocation3] sm:$0xf] %vm2119, %v2096
      %2121 = vst.msk [vmem:[#allocation3 + $0x4] sm:$0xf] %vm2119, %v2098
      %2122 = vst.msk [vmem:[#allocation3 + $0x8] sm:$0xf] %vm2119, %v2100
      %2123 = vst.msk [vmem:[#allocation3 + $0xc] sm:$0xf] %vm2119, %v2102
      %2124 = vst.msk [vmem:[#allocation3 + $0x10] sm:$0xf] %vm2119, %v2104
      %2125 = vst.msk [vmem:[#allocation3 + $0x14] sm:$0xf] %vm2119, %v2106
      %2126 = vst.msk [vmem:[#allocation3 + $0x18] sm:$0xf] %vm2119, %v2108
      %2127 = vst.msk [vmem:[#allocation3 + $0x1c] sm:$0xf] %vm2119, %v2110
      %v2128 = vld [vmem:[%s961] sm:$0xf]
      %v2129 = vld [vmem:[%s961 + $0x8] sm:$0xf]
      %v2130 = vld [vmem:[%s961 + $0x10] sm:$0xf]
      %v2131 = vld [vmem:[%s961 + $0x18] sm:$0xf]
      %v2132 = vld [vmem:[%s961 + $0x20] sm:$0xf]
      %v2133 = vld [vmem:[%s961 + $0x28] sm:$0xf]
      %v2134 = vld [vmem:[%s961 + $0x30] sm:$0xf]
      %v2135 = vld [vmem:[%s961 + $0x38] sm:$0xf]
      %v2136 = vld [vmem:[#allocation2] sm:$0xf]
      %v2137 = vld [vmem:[#allocation2 + $0x8] sm:$0xf]
      %v2138 = vld [vmem:[#allocation2 + $0x10] sm:$0xf]
      %v2139 = vld [vmem:[#allocation2 + $0x18] sm:$0xf]
      %v2140 = vld [vmem:[#allocation2 + $0x20] sm:$0xf]
      %v2141 = vld [vmem:[#allocation2 + $0x28] sm:$0xf]
      %v2142 = vld [vmem:[#allocation2 + $0x30] sm:$0xf]
      %v2143 = vld [vmem:[#allocation2 + $0x38] sm:$0xf]
      %v2144 = vld [vmem:[#allocation2 + $0x40] sm:$0xf]
      %v2145 = vld [vmem:[#allocation2 + $0x48] sm:$0xf]
      %v2146 = vld [vmem:[#allocation2 + $0x50] sm:$0xf]
      %v2147 = vld [vmem:[#allocation2 + $0x58] sm:$0xf]
      %v2148 = vld [vmem:[#allocation2 + $0x60] sm:$0xf]
      %v2149 = vld [vmem:[#allocation2 + $0x68] sm:$0xf]
      %v2150 = vld [vmem:[#allocation2 + $0x70] sm:$0xf]
      %v2151 = vld [vmem:[#allocation2 + $0x78] sm:$0xf]
      %v2152 = vld [vmem:[#allocation2 + $0x4] sm:$0xf]
      %v2153 = vld [vmem:[#allocation2 + $0xc] sm:$0xf]
      %v2154 = vld [vmem:[#allocation2 + $0x14] sm:$0xf]
      %v2155 = vld [vmem:[#allocation2 + $0x1c] sm:$0xf]
      %v2156 = vld [vmem:[#allocation2 + $0x24] sm:$0xf]
      %v2157 = vld [vmem:[#allocation2 + $0x2c] sm:$0xf]
      %v2158 = vld [vmem:[#allocation2 + $0x34] sm:$0xf]
      %v2159 = vld [vmem:[#allocation2 + $0x3c] sm:$0xf]
      %v2160 = vld [vmem:[#allocation2 + $0x44] sm:$0xf]
      %v2161 = vld [vmem:[#allocation2 + $0x4c] sm:$0xf]
      %v2162 = vld [vmem:[#allocation2 + $0x54] sm:$0xf]
      %v2163 = vld [vmem:[#allocation2 + $0x5c] sm:$0xf]
      %v2164 = vld [vmem:[#allocation2 + $0x64] sm:$0xf]
      %v2165 = vld [vmem:[#allocation2 + $0x6c] sm:$0xf]
      %v2166 = vld [vmem:[#allocation2 + $0x74] sm:$0xf]
      %v2167 = vld [vmem:[#allocation2 + $0x7c] sm:$0xf]
      %v2176 = vunpack.c.l.b16 %v2128
      %v2177 = vunpack.c.l.b16 %v2129
      %v2178 = vunpack.c.l.b16 %v2130
      %v2179 = vunpack.c.l.b16 %v2131
      %v2180 = vunpack.c.l.b16 %v2132
      %v2181 = vunpack.c.l.b16 %v2133
      %v2182 = vunpack.c.l.b16 %v2134
      %v2183 = vunpack.c.l.b16 %v2135
      %v2184 = vpack.c.b16 %v2177, %v2176
      %v2185 = vpack.c.b16 %v2179, %v2178
      %v2186 = vpack.c.b16 %v2181, %v2180
      %v2187 = vpack.c.b16 %v2183, %v2182
      %2188 = vrot.lane.b32.xlu0 %v2184, 80
      %v2189 = vpop.permute.xlu0 %2188
      %2190 = vrot.lane.b32.xlu0 %v2185, 80
      %v2191 = vpop.permute.xlu0 %2190
      %2192 = vrot.lane.b32.xlu0 %v2186, 80
      %v2193 = vpop.permute.xlu0 %2192
      %2194 = vrot.lane.b32.xlu0 %v2187, 80
      %v2195 = vpop.permute.xlu0 %2194
      %v2212 = vunpack.c.l.b16 %v2136
      %v2213 = vunpack.c.l.b16 %v2137
      %v2214 = vunpack.c.l.b16 %v2138
      %v2215 = vunpack.c.l.b16 %v2139
      %v2216 = vunpack.c.l.b16 %v2140
      %v2217 = vunpack.c.l.b16 %v2141
      %v2218 = vunpack.c.l.b16 %v2142
      %v2219 = vunpack.c.l.b16 %v2143
      %v2220 = vunpack.c.l.b16 %v2144
      %v2221 = vunpack.c.l.b16 %v2145
      %v2222 = vunpack.c.l.b16 %v2146
      %v2223 = vunpack.c.l.b16 %v2147
      %v2224 = vunpack.c.l.b16 %v2148
      %v2225 = vunpack.c.l.b16 %v2149
      %v2226 = vunpack.c.l.b16 %v2150
      %v2227 = vunpack.c.l.b16 %v2151
      %v2228 = vpack.c.b16 %v2213, %v2212
      %v2229 = vpack.c.b16 %v2215, %v2214
      %v2230 = vpack.c.b16 %v2217, %v2216
      %v2231 = vpack.c.b16 %v2219, %v2218
      %v2232 = vpack.c.b16 %v2221, %v2220
      %v2233 = vpack.c.b16 %v2223, %v2222
      %v2234 = vpack.c.b16 %v2225, %v2224
      %v2235 = vpack.c.b16 %v2227, %v2226
      %2236 = vrot.lane.b32.xlu0 %v2228, 16
      %v2237 = vpop.permute.xlu0 %2236
      %2238 = vrot.lane.b32.xlu0 %v2229, 16
      %v2239 = vpop.permute.xlu0 %2238
      %2240 = vrot.lane.b32.xlu0 %v2230, 16
      %v2241 = vpop.permute.xlu0 %2240
      %2242 = vrot.lane.b32.xlu0 %v2231, 16
      %v2243 = vpop.permute.xlu0 %2242
      %2244 = vrot.lane.b32.xlu0 %v2232, 16
      %v2245 = vpop.permute.xlu0 %2244
      %2246 = vrot.lane.b32.xlu0 %v2233, 16
      %v2247 = vpop.permute.xlu0 %2246
      %2248 = vrot.lane.b32.xlu0 %v2234, 16
      %v2249 = vpop.permute.xlu0 %2248
      %2250 = vrot.lane.b32.xlu0 %v2235, 16
      %v2251 = vpop.permute.xlu0 %2250
      %v2253 = vsel %vm1078, %v2189, 0
      %v2256 = vsel %vm1078, %v2191, 0
      %v2259 = vsel %vm1078, %v2193, 0
      %v2262 = vsel %vm1078, %v2195, 0
      %v2265 = vsel %vm1078, %v2237, 0
      %v2268 = vsel %vm1078, %v2239, 0
      %v2271 = vsel %vm1078, %v2241, 0
      %v2274 = vsel %vm1078, %v2243, 0
      %v2277 = vsel %vm1078, %v2245, 0
      %v2280 = vsel %vm1078, %v2247, 0
      %v2283 = vsel %vm1078, %v2249, 0
      %v2286 = vsel %vm1078, %v2251, 0
      %2288 = vmatpush.bf16.xpose.msra.mxu0 %v2286
      %2289 = vmatpush.bf16.xpose.msra.mxu0 %v2283
      %2290 = vmatpush.bf16.xpose.msra.mxu0 %v2280
      %2291 = vmatpush.bf16.xpose.msra.mxu0 %v2277
      %2292 = vmatpush.bf16.xpose.msra.mxu0 %v2274
      %2293 = vmatpush.bf16.xpose.msra.mxu0 %v2271
      %2294 = vmatpush.bf16.xpose.msra.mxu0 %v2268
      %2295 = vmatpush.bf16.xpose.msra.mxu0 %v2265
      %2296 = vmatmul.bf16.gmra.mxu0 %v2253
      %v2297 = vpop.f32.mrf.mxu0
      %v2298 = vadd.f32 0.0, %v2297
      %v2299 = vpop.f32.mrf.mxu0
      %v2300 = vadd.f32 0.0, %v2299
      %2301 = vmatmul.bf16.gmra.mxu0 %v2256
      %v2302 = vpop.f32.mrf.mxu0
      %v2303 = vadd.f32 0.0, %v2302
      %v2304 = vpop.f32.mrf.mxu0
      %v2305 = vadd.f32 0.0, %v2304
      %2306 = vmatmul.bf16.gmra.mxu0 %v2259
      %v2307 = vpop.f32.mrf.mxu0
      %v2308 = vadd.f32 0.0, %v2307
      %v2309 = vpop.f32.mrf.mxu0
      %v2310 = vadd.f32 0.0, %v2309
      %2311 = vmatmul.bf16.gmra.mxu0 %v2262
      %v2312 = vpop.f32.mrf.mxu0
      %v2313 = vadd.f32 0.0, %v2312
      %v2314 = vpop.f32.mrf.mxu0
      %v2315 = vadd.f32 0.0, %v2314
      %2316 = vdwg.mxu0
      %2317 = vmax.xlane.f32.xlu0 %v2298
      %v2318 = vpop.xlane.xlu0 %2317
      %2319 = vmax.xlane.f32.xlu0 %v2300
      %v2320 = vpop.xlane.xlu0 %2319
      %2321 = vmax.xlane.f32.xlu0 %v2303
      %v2322 = vpop.xlane.xlu0 %2321
      %2323 = vmax.xlane.f32.xlu0 %v2305
      %v2324 = vpop.xlane.xlu0 %2323
      %2325 = vmax.xlane.f32.xlu0 %v2308
      %v2326 = vpop.xlane.xlu0 %2325
      %2327 = vmax.xlane.f32.xlu0 %v2310
      %v2328 = vpop.xlane.xlu0 %2327
      %2329 = vmax.xlane.f32.xlu0 %v2313
      %v2330 = vpop.xlane.xlu0 %2329
      %2331 = vmax.xlane.f32.xlu0 %v2315
      %v2332 = vpop.xlane.xlu0 %2331
      %v2333 = vsub.f32 %v2298, %v2318
      %v2334 = vsub.f32 %v2300, %v2320
      %v2335 = vsub.f32 %v2303, %v2322
      %v2336 = vsub.f32 %v2305, %v2324
      %v2337 = vsub.f32 %v2308, %v2326
      %v2338 = vsub.f32 %v2310, %v2328
      %v2339 = vsub.f32 %v2313, %v2330
      %v2340 = vsub.f32 %v2315, %v2332
      %v2341 = vmul.f32 %v2333, 1.442695
      %v2342 = vpow.pop %v2341
      %v2343 = vmul.f32 %v2334, 1.442695
      %v2344 = vpow.pop %v2343
      %v2345 = vmul.f32 %v2335, 1.442695
      %v2346 = vpow.pop %v2345
      %v2347 = vmul.f32 %v2336, 1.442695
      %v2348 = vpow.pop %v2347
      %v2349 = vmul.f32 %v2337, 1.442695
      %v2350 = vpow.pop %v2349
      %v2351 = vmul.f32 %v2338, 1.442695
      %v2352 = vpow.pop %v2351
      %v2353 = vmul.f32 %v2339, 1.442695
      %v2354 = vpow.pop %v2353
      %v2355 = vmul.f32 %v2340, 1.442695
      %v2356 = vpow.pop %v2355
      %2357 = vadd.xlane.f32.xlu0 %v2342
      %v2358 = vpop.xlane.xlu0 %2357
      %2359 = vadd.xlane.f32.xlu0 %v2344
      %v2360 = vpop.xlane.xlu0 %2359
      %2361 = vadd.xlane.f32.xlu0 %v2346
      %v2362 = vpop.xlane.xlu0 %2361
      %2363 = vadd.xlane.f32.xlu0 %v2348
      %v2364 = vpop.xlane.xlu0 %2363
      %2365 = vadd.xlane.f32.xlu0 %v2350
      %v2366 = vpop.xlane.xlu0 %2365
      %2367 = vadd.xlane.f32.xlu0 %v2352
      %v2368 = vpop.xlane.xlu0 %2367
      %2369 = vadd.xlane.f32.xlu0 %v2354
      %v2370 = vpop.xlane.xlu0 %2369
      %2371 = vadd.xlane.f32.xlu0 %v2356
      %v2372 = vpop.xlane.xlu0 %2371
      %v2373 = vrcp.pop %v2358
      %v2374 = vrcp.pop %v2360
      %v2375 = vrcp.pop %v2362
      %v2376 = vrcp.pop %v2364
      %v2377 = vrcp.pop %v2366
      %v2378 = vrcp.pop %v2368
      %v2379 = vrcp.pop %v2370
      %v2380 = vrcp.pop %v2372
      %v2381 = vmul.f32 %v2342, %v2373
      %v2382 = vmul.f32 %v2344, %v2374
      %v2383 = vmul.f32 %v2346, %v2375
      %v2384 = vmul.f32 %v2348, %v2376
      %v2385 = vmul.f32 %v2350, %v2377
      %v2386 = vmul.f32 %v2352, %v2378
      %v2387 = vmul.f32 %v2354, %v2379
      %v2388 = vmul.f32 %v2356, %v2380
      %v2389 = vpack.c.bf16 %v2382, %v2381
      %v2390 = vpack.c.bf16 %v2384, %v2383
      %v2391 = vpack.c.bf16 %v2386, %v2385
      %v2392 = vpack.c.bf16 %v2388, %v2387
      %v2409 = vunpack.c.l.b16 %v2152
      %v2410 = vunpack.c.l.b16 %v2153
      %v2411 = vunpack.c.l.b16 %v2154
      %v2412 = vunpack.c.l.b16 %v2155
      %v2413 = vunpack.c.l.b16 %v2156
      %v2414 = vunpack.c.l.b16 %v2157
      %v2415 = vunpack.c.l.b16 %v2158
      %v2416 = vunpack.c.l.b16 %v2159
      %v2417 = vunpack.c.l.b16 %v2160
      %v2418 = vunpack.c.l.b16 %v2161
      %v2419 = vunpack.c.l.b16 %v2162
      %v2420 = vunpack.c.l.b16 %v2163
      %v2421 = vunpack.c.l.b16 %v2164
      %v2422 = vunpack.c.l.b16 %v2165
      %v2423 = vunpack.c.l.b16 %v2166
      %v2424 = vunpack.c.l.b16 %v2167
      %v2425 = vpack.c.b16 %v2410, %v2409
      %v2426 = vpack.c.b16 %v2412, %v2411
      %v2427 = vpack.c.b16 %v2414, %v2413
      %v2428 = vpack.c.b16 %v2416, %v2415
      %v2429 = vpack.c.b16 %v2418, %v2417
      %v2430 = vpack.c.b16 %v2420, %v2419
      %v2431 = vpack.c.b16 %v2422, %v2421
      %v2432 = vpack.c.b16 %v2424, %v2423
      %2433 = vrot.lane.b32.xlu0 %v2425, 80
      %v2434 = vpop.permute.xlu0 %2433
      %2435 = vrot.lane.b32.xlu0 %v2426, 80
      %v2436 = vpop.permute.xlu0 %2435
      %2437 = vrot.lane.b32.xlu0 %v2427, 80
      %v2438 = vpop.permute.xlu0 %2437
      %2439 = vrot.lane.b32.xlu0 %v2428, 80
      %v2440 = vpop.permute.xlu0 %2439
      %2441 = vrot.lane.b32.xlu0 %v2429, 80
      %v2442 = vpop.permute.xlu0 %2441
      %2443 = vrot.lane.b32.xlu0 %v2430, 80
      %v2444 = vpop.permute.xlu0 %2443
      %2445 = vrot.lane.b32.xlu0 %v2431, 80
      %v2446 = vpop.permute.xlu0 %2445
      %2447 = vrot.lane.b32.xlu0 %v2432, 80
      %v2448 = vpop.permute.xlu0 %2447
      %2457 = vmatpush.bf16.msra.mxu0 %v2448
      %2458 = vmatpush.bf16.msra.mxu0 %v2446
      %2459 = vmatpush.bf16.msra.mxu0 %v2444
      %2460 = vmatpush.bf16.msra.mxu0 %v2442
      %2461 = vmatpush.bf16.msra.mxu0 %v2440
      %2462 = vmatpush.bf16.msra.mxu0 %v2438
      %2463 = vmatpush.bf16.msra.mxu0 %v2436
      %2464 = vmatpush.bf16.msra.mxu0 %v2434
      %2465 = vmatmul.bf16.gmra.mxu0 %v2389
      %v2466 = vpop.f32.mrf.mxu0
      %v2467 = vadd.f32 0.0, %v2466
      %v2468 = vpop.f32.mrf.mxu0
      %v2469 = vadd.f32 0.0, %v2468
      %2470 = vmatmul.bf16.gmra.mxu0 %v2390
      %v2471 = vpop.f32.mrf.mxu0
      %v2472 = vadd.f32 0.0, %v2471
      %v2473 = vpop.f32.mrf.mxu0
      %v2474 = vadd.f32 0.0, %v2473
      %2475 = vmatmul.bf16.gmra.mxu0 %v2391
      %v2476 = vpop.f32.mrf.mxu0
      %v2477 = vadd.f32 0.0, %v2476
      %v2478 = vpop.f32.mrf.mxu0
      %v2479 = vadd.f32 0.0, %v2478
      %2480 = vmatmul.bf16.gmra.mxu0 %v2392
      %v2481 = vpop.f32.mrf.mxu0
      %v2482 = vadd.f32 0.0, %v2481
      %v2483 = vpop.f32.mrf.mxu0
      %v2484 = vadd.f32 0.0, %v2483
      %2485 = vdwg.mxu0
      %v2486 = vpack.c.bf16 %v2467, %v2467
      %v2487 = vpack.c.bf16 %v2469, %v2469
      %v2488 = vpack.c.bf16 %v2472, %v2472
      %v2489 = vpack.c.bf16 %v2474, %v2474
      %v2490 = vpack.c.bf16 %v2477, %v2477
      %v2491 = vpack.c.bf16 %v2479, %v2479
      %v2492 = vpack.c.bf16 %v2482, %v2482
      %v2493 = vpack.c.bf16 %v2484, %v2484
      %2502 = vrot.lane.b32.xlu0 %v2486, 48
      %v2503 = vpop.permute.xlu0 %2502
      %2504 = vrot.lane.b32.xlu0 %v2487, 48
      %v2505 = vpop.permute.xlu0 %2504
      %2506 = vrot.lane.b32.xlu0 %v2488, 48
      %v2507 = vpop.permute.xlu0 %2506
      %2508 = vrot.lane.b32.xlu0 %v2489, 48
      %v2509 = vpop.permute.xlu0 %2508
      %2510 = vrot.lane.b32.xlu0 %v2490, 48
      %v2511 = vpop.permute.xlu0 %2510
      %2512 = vrot.lane.b32.xlu0 %v2491, 48
      %v2513 = vpop.permute.xlu0 %2512
      %2514 = vrot.lane.b32.xlu0 %v2492, 48
      %v2515 = vpop.permute.xlu0 %2514
      %2516 = vrot.lane.b32.xlu0 %v2493, 48
      %v2517 = vpop.permute.xlu0 %2516
      %vm2526 = vcmask 519552
      %2527 = vst.msk [vmem:[#allocation3] sm:$0xf] %vm2526, %v2503
      %2528 = vst.msk [vmem:[#allocation3 + $0x4] sm:$0xf] %vm2526, %v2505
      %2529 = vst.msk [vmem:[#allocation3 + $0x8] sm:$0xf] %vm2526, %v2507
      %2530 = vst.msk [vmem:[#allocation3 + $0xc] sm:$0xf] %vm2526, %v2509
      %2531 = vst.msk [vmem:[#allocation3 + $0x10] sm:$0xf] %vm2526, %v2511
      %2532 = vst.msk [vmem:[#allocation3 + $0x14] sm:$0xf] %vm2526, %v2513
      %2533 = vst.msk [vmem:[#allocation3 + $0x18] sm:$0xf] %vm2526, %v2515
      %2534 = vst.msk [vmem:[#allocation3 + $0x1c] sm:$0xf] %vm2526, %v2517
      %v2535 = vld [vmem:[#allocation3] sm:$0xf]
      %v2536 = vld [vmem:[#allocation3 + $0x4] sm:$0xf]
      %v2537 = vld [vmem:[#allocation3 + $0x8] sm:$0xf]
      %v2538 = vld [vmem:[#allocation3 + $0xc] sm:$0xf]
      %v2539 = vld [vmem:[#allocation3 + $0x10] sm:$0xf]
      %v2540 = vld [vmem:[#allocation3 + $0x14] sm:$0xf]
      %v2541 = vld [vmem:[#allocation3 + $0x18] sm:$0xf]
      %v2542 = vld [vmem:[#allocation3 + $0x1c] sm:$0xf]
      %v2543 = vld [vmem:[%s3] sm:$0xf]
      %v2544 = vld [vmem:[%s3 + $0x4] sm:$0xf]
      %v2545 = vld [vmem:[%s3 + $0x8] sm:$0xf]
      %v2546 = vld [vmem:[%s3 + $0xc] sm:$0xf]
      %v2547 = vld [vmem:[%s3 + $0x10] sm:$0xf]
      %v2548 = vld [vmem:[%s3 + $0x14] sm:$0xf]
      %v2549 = vld [vmem:[%s3 + $0x18] sm:$0xf]
      %v2550 = vld [vmem:[%s3 + $0x1c] sm:$0xf]
      %v2551 = vld [vmem:[%s4] sm:$0x1]
      %v2553 = vperm.slane %v2551, 0
      %v2563 = vunpack.c.l.b16 %v2535
      %v2564 = vunpack.c.l.b16 %v2536
      %v2565 = vunpack.c.l.b16 %v2537
      %v2566 = vunpack.c.l.b16 %v2538
      %v2567 = vunpack.c.l.b16 %v2539
      %v2568 = vunpack.c.l.b16 %v2540
      %v2569 = vunpack.c.l.b16 %v2541
      %v2570 = vunpack.c.l.b16 %v2542
      %v2571 = vpack.c.b16 %v2564, %v2563
      %v2572 = vpack.c.b16 %v2566, %v2565
      %v2573 = vpack.c.b16 %v2568, %v2567
      %v2574 = vpack.c.b16 %v2570, %v2569
      %v2583 = vunpack.c.l.b16 %v2543
      %v2584 = vunpack.c.l.b16 %v2544
      %v2585 = vunpack.c.l.b16 %v2545
      %v2586 = vunpack.c.l.b16 %v2546
      %v2587 = vunpack.c.l.b16 %v2547
      %v2588 = vunpack.c.l.b16 %v2548
      %v2589 = vunpack.c.l.b16 %v2549
      %v2590 = vunpack.c.l.b16 %v2550
      %v2591 = vpack.c.b16 %v2584, %v2583
      %v2592 = vpack.c.b16 %v2586, %v2585
      %v2593 = vpack.c.b16 %v2588, %v2587
      %v2594 = vpack.c.b16 %v2590, %v2589
      %vm2599 = vcmask 523264
      %v2601 = vsel %vm2599, %v2571, 0
      %v2604 = vsel %vm2599, %v2572, 0
      %v2607 = vsel %vm2599, %v2573, 0
      %v2610 = vsel %vm2599, %v2574, 0
      %2612 = vmatpush.bf16.msra.mxu0 0
      %2613 = vmatpush.bf16.msra.mxu0 0
      %2614 = vmatpush.bf16.msra.mxu0 0
      %2615 = vmatpush.bf16.msra.mxu0 0
      %2616 = vmatpush.bf16.msra.mxu0 %v2594
      %2617 = vmatpush.bf16.msra.mxu0 %v2593
      %2618 = vmatpush.bf16.msra.mxu0 %v2592
      %2619 = vmatpush.bf16.msra.mxu0 %v2591
      %2620 = vmatmul.bf16.gmra.mxu0 %v2601
      %v2621 = vpop.f32.mrf.mxu0
      %v2622 = vadd.f32 %v2553, %v2621
      %v2623 = vpop.f32.mrf.mxu0
      %v2624 = vadd.f32 %v2553, %v2623
      %2625 = vmatmul.bf16.gmra.mxu0 %v2604
      %v2626 = vpop.f32.mrf.mxu0
      %v2627 = vadd.f32 %v2553, %v2626
      %v2628 = vpop.f32.mrf.mxu0
      %v2629 = vadd.f32 %v2553, %v2628
      %2630 = vmatmul.bf16.gmra.mxu0 %v2607
      %v2631 = vpop.f32.mrf.mxu0
      %v2632 = vadd.f32 %v2553, %v2631
      %v2633 = vpop.f32.mrf.mxu0
      %v2634 = vadd.f32 %v2553, %v2633
      %2635 = vmatmul.bf16.gmra.mxu0 %v2610
      %v2636 = vpop.f32.mrf.mxu0
      %v2637 = vadd.f32 %v2553, %v2636
      %v2638 = vpop.f32.mrf.mxu0
      %v2639 = vadd.f32 %v2553, %v2638
      %2640 = vdwg.mxu0
      %s2641 = scalar_lea.vmem %s345, %s956
      %v2642 = vld [vmem:[%s2641] sm:$0xff]
      %v2643 = vld [vmem:[%s2641 + $0x8] sm:$0xff]
      %v2644 = vld [vmem:[%s2641 + $0x10] sm:$0xff]
      %v2645 = vld [vmem:[%s2641 + $0x18] sm:$0xff]
      %v2646 = vld [vmem:[%s2641 + $0x20] sm:$0xff]
      %v2647 = vld [vmem:[%s2641 + $0x28] sm:$0xff]
      %v2648 = vld [vmem:[%s2641 + $0x30] sm:$0xff]
      %v2649 = vld [vmem:[%s2641 + $0x38] sm:$0xff]
      %v2650 = vadd.f32 %v2642, %v2622
      %v2651 = vadd.f32 %v2643, %v2624
      %v2652 = vadd.f32 %v2644, %v2627
      %v2653 = vadd.f32 %v2645, %v2629
      %v2654 = vadd.f32 %v2646, %v2632
      %v2655 = vadd.f32 %v2647, %v2634
      %v2656 = vadd.f32 %v2648, %v2637
      %v2657 = vadd.f32 %v2649, %v2639
      %v2658 = vsel %vm2599, %v2650, 0.0
      %2659 = vadd.xlane.f32.xlu0 %v2658
      %v2660 = vpop.xlane.xlu0 %2659
      %v2661 = vsel %vm2599, %v2651, 0.0
      %2662 = vadd.xlane.f32.xlu0 %v2661
      %v2663 = vpop.xlane.xlu0 %2662
      %v2664 = vsel %vm2599, %v2652, 0.0
      %2665 = vadd.xlane.f32.xlu0 %v2664
      %v2666 = vpop.xlane.xlu0 %2665
      %v2667 = vsel %vm2599, %v2653, 0.0
      %2668 = vadd.xlane.f32.xlu0 %v2667
      %v2669 = vpop.xlane.xlu0 %2668
      %v2670 = vsel %vm2599, %v2654, 0.0
      %2671 = vadd.xlane.f32.xlu0 %v2670
      %v2672 = vpop.xlane.xlu0 %2671
      %v2673 = vsel %vm2599, %v2655, 0.0
      %2674 = vadd.xlane.f32.xlu0 %v2673
      %v2675 = vpop.xlane.xlu0 %2674
      %v2676 = vsel %vm2599, %v2656, 0.0
      %2677 = vadd.xlane.f32.xlu0 %v2676
      %v2678 = vpop.xlane.xlu0 %2677
      %v2679 = vsel %vm2599, %v2657, 0.0
      %2680 = vadd.xlane.f32.xlu0 %v2679
      %v2681 = vpop.xlane.xlu0 %2680
      %v2682 = vrcp.pop 64.0
      %v2683 = vmul.f32 64.0, %v2682
      %v2684 = vsub.f32 1.0, %v2683
      %v2685 = vmul.f32 %v2682, %v2684
      %v2686 = vadd.f32 %v2682, %v2685
      %vm2687 = vweird.f32 %v2682
      %v2688 = vsel %vm2687, %v2682, %v2686
      %v2689 = vmul.f32 %v2660, %v2688
      %v2690 = vmul.f32 %v2663, %v2688
      %v2691 = vmul.f32 %v2666, %v2688
      %v2692 = vmul.f32 %v2669, %v2688
      %v2693 = vmul.f32 %v2672, %v2688
      %v2694 = vmul.f32 %v2675, %v2688
      %v2695 = vmul.f32 %v2678, %v2688
      %v2696 = vmul.f32 %v2681, %v2688
      %v2697 = vsub.f32 %v2650, %v2689
      %v2698 = vsub.f32 %v2651, %v2690
      %v2699 = vsub.f32 %v2652, %v2691
      %v2700 = vsub.f32 %v2653, %v2692
      %v2701 = vsub.f32 %v2654, %v2693
      %v2702 = vsub.f32 %v2655, %v2694
      %v2703 = vsub.f32 %v2656, %v2695
      %v2704 = vsub.f32 %v2657, %v2696
      %v2705 = vmul.f32 %v2697, %v2697
      %v2706 = vmul.f32 %v2698, %v2698
      %v2707 = vmul.f32 %v2699, %v2699
      %v2708 = vmul.f32 %v2700, %v2700
      %v2709 = vmul.f32 %v2701, %v2701
      %v2710 = vmul.f32 %v2702, %v2702
      %v2711 = vmul.f32 %v2703, %v2703
      %v2712 = vmul.f32 %v2704, %v2704
      %v2713 = vsel %vm2599, %v2705, 0.0
      %2714 = vadd.xlane.f32.xlu0 %v2713
      %v2715 = vpop.xlane.xlu0 %2714
      %v2716 = vsel %vm2599, %v2706, 0.0
      %2717 = vadd.xlane.f32.xlu0 %v2716
      %v2718 = vpop.xlane.xlu0 %2717
      %v2719 = vsel %vm2599, %v2707, 0.0
      %2720 = vadd.xlane.f32.xlu0 %v2719
      %v2721 = vpop.xlane.xlu0 %2720
      %v2722 = vsel %vm2599, %v2708, 0.0
      %2723 = vadd.xlane.f32.xlu0 %v2722
      %v2724 = vpop.xlane.xlu0 %2723
      %v2725 = vsel %vm2599, %v2709, 0.0
      %2726 = vadd.xlane.f32.xlu0 %v2725
      %v2727 = vpop.xlane.xlu0 %2726
      %v2728 = vsel %vm2599, %v2710, 0.0
      %2729 = vadd.xlane.f32.xlu0 %v2728
      %v2730 = vpop.xlane.xlu0 %2729
      %v2731 = vsel %vm2599, %v2711, 0.0
      %2732 = vadd.xlane.f32.xlu0 %v2731
      %v2733 = vpop.xlane.xlu0 %2732
      %v2734 = vsel %vm2599, %v2712, 0.0
      %2735 = vadd.xlane.f32.xlu0 %v2734
      %v2736 = vpop.xlane.xlu0 %2735
      %v2737 = vmul.f32 %v2715, %v2688
      %v2738 = vmul.f32 %v2718, %v2688
      %v2739 = vmul.f32 %v2721, %v2688
      %v2740 = vmul.f32 %v2724, %v2688
      %v2741 = vmul.f32 %v2727, %v2688
      %v2742 = vmul.f32 %v2730, %v2688
      %v2743 = vmul.f32 %v2733, %v2688
      %v2744 = vmul.f32 %v2736, %v2688
      %v2745 = vadd.f32 %v2737, 1e-06
      %v2746 = vadd.f32 %v2738, 1e-06
      %v2747 = vadd.f32 %v2739, 1e-06
      %v2748 = vadd.f32 %v2740, 1e-06
      %v2749 = vadd.f32 %v2741, 1e-06
      %v2750 = vadd.f32 %v2742, 1e-06
      %v2751 = vadd.f32 %v2743, 1e-06
      %v2752 = vadd.f32 %v2744, 1e-06
      %v2753 = vrsqrt.pop %v2745
      %v2754 = vmul.f32 %v2753, %v2745
      %v2755 = vmul.f32 %v2754, %v2753
      %v2756 = vmul.f32 0.5, %v2755
      %v2757 = vsub.f32 1.5, %v2756
      %v2758 = vmul.f32 %v2753, %v2757
      %vm2759 = vweird.f32 %v2745
      %vm2760 = vweird.f32 %v2753
      %vm2761 = vmor %vm2759, %vm2760
      %v2762 = vsel %vm2761, %v2753, %v2758
      %v2763 = vrsqrt.pop %v2746
      %v2764 = vmul.f32 %v2763, %v2746
      %v2765 = vmul.f32 %v2764, %v2763
      %v2766 = vmul.f32 0.5, %v2765
      %v2767 = vsub.f32 1.5, %v2766
      %v2768 = vmul.f32 %v2763, %v2767
      %vm2769 = vweird.f32 %v2746
      %vm2770 = vweird.f32 %v2763
      %vm2771 = vmor %vm2769, %vm2770
      %v2772 = vsel %vm2771, %v2763, %v2768
      %v2773 = vrsqrt.pop %v2747
      %v2774 = vmul.f32 %v2773, %v2747
      %v2775 = vmul.f32 %v2774, %v2773
      %v2776 = vmul.f32 0.5, %v2775
      %v2777 = vsub.f32 1.5, %v2776
      %v2778 = vmul.f32 %v2773, %v2777
      %vm2779 = vweird.f32 %v2747
      %vm2780 = vweird.f32 %v2773
      %vm2781 = vmor %vm2779, %vm2780
      %v2782 = vsel %vm2781, %v2773, %v2778
      %v2783 = vrsqrt.pop %v2748
      %v2784 = vmul.f32 %v2783, %v2748
      %v2785 = vmul.f32 %v2784, %v2783
      %v2786 = vmul.f32 0.5, %v2785
      %v2787 = vsub.f32 1.5, %v2786
      %v2788 = vmul.f32 %v2783, %v2787
      %vm2789 = vweird.f32 %v2748
      %vm2790 = vweird.f32 %v2783
      %vm2791 = vmor %vm2789, %vm2790
      %v2792 = vsel %vm2791, %v2783, %v2788
      %v2793 = vrsqrt.pop %v2749
      %v2794 = vmul.f32 %v2793, %v2749
      %v2795 = vmul.f32 %v2794, %v2793
      %v2796 = vmul.f32 0.5, %v2795
      %v2797 = vsub.f32 1.5, %v2796
      %v2798 = vmul.f32 %v2793, %v2797
      %vm2799 = vweird.f32 %v2749
      %vm2800 = vweird.f32 %v2793
      %vm2801 = vmor %vm2799, %vm2800
      %v2802 = vsel %vm2801, %v2793, %v2798
      %v2803 = vrsqrt.pop %v2750
      %v2804 = vmul.f32 %v2803, %v2750
      %v2805 = vmul.f32 %v2804, %v2803
      %v2806 = vmul.f32 0.5, %v2805
      %v2807 = vsub.f32 1.5, %v2806
      %v2808 = vmul.f32 %v2803, %v2807
      %vm2809 = vweird.f32 %v2750
      %vm2810 = vweird.f32 %v2803
      %vm2811 = vmor %vm2809, %vm2810
      %v2812 = vsel %vm2811, %v2803, %v2808
      %v2813 = vrsqrt.pop %v2751
      %v2814 = vmul.f32 %v2813, %v2751
      %v2815 = vmul.f32 %v2814, %v2813
      %v2816 = vmul.f32 0.5, %v2815
      %v2817 = vsub.f32 1.5, %v2816
      %v2818 = vmul.f32 %v2813, %v2817
      %vm2819 = vweird.f32 %v2751
      %vm2820 = vweird.f32 %v2813
      %vm2821 = vmor %vm2819, %vm2820
      %v2822 = vsel %vm2821, %v2813, %v2818
      %v2823 = vrsqrt.pop %v2752
      %v2824 = vmul.f32 %v2823, %v2752
      %v2825 = vmul.f32 %v2824, %v2823
      %v2826 = vmul.f32 0.5, %v2825
      %v2827 = vsub.f32 1.5, %v2826
      %v2828 = vmul.f32 %v2823, %v2827
      %vm2829 = vweird.f32 %v2752
      %vm2830 = vweird.f32 %v2823
      %vm2831 = vmor %vm2829, %vm2830
      %v2832 = vsel %vm2831, %v2823, %v2828
      %v2833 = vmul.f32 %v2697, %v2762
      %v2834 = vmul.f32 %v2698, %v2772
      %v2835 = vmul.f32 %v2699, %v2782
      %v2836 = vmul.f32 %v2700, %v2792
      %v2837 = vmul.f32 %v2701, %v2802
      %v2838 = vmul.f32 %v2702, %v2812
      %v2839 = vmul.f32 %v2703, %v2822
      %v2840 = vmul.f32 %v2704, %v2832
      %v2841 = vpack.c.bf16 %v2834, %v2833
      %v2842 = vpack.c.bf16 %v2836, %v2835
      %v2843 = vpack.c.bf16 %v2838, %v2837
      %v2844 = vpack.c.bf16 %v2840, %v2839
      %v2845 = vld [vmem:[%s5] sm:$0xff]
      %v2846 = vld [vmem:[%s5 + $0x8] sm:$0xff]
      %v2847 = vld [vmem:[%s5 + $0x10] sm:$0xff]
      %v2848 = vld [vmem:[%s5 + $0x18] sm:$0xff]
      %v2849 = vld [vmem:[%s5 + $0x20] sm:$0xff]
      %v2850 = vld [vmem:[%s5 + $0x28] sm:$0xff]
      %v2851 = vld [vmem:[%s5 + $0x30] sm:$0xff]
      %v2852 = vld [vmem:[%s5 + $0x38] sm:$0xff]
      %v2853 = vld [vmem:[%s6] sm:$0x3]
      %v2855 = vperm.slane %v2853, 0
      %v2856 = vperm.slane %v2853, 1
      %v2867 = vunpack.c.l.b16 %v2845
      %v2868 = vunpack.c.h.b16 %v2845
      %v2869 = vunpack.c.l.b16 %v2846
      %v2870 = vunpack.c.h.b16 %v2846
      %v2871 = vunpack.c.l.b16 %v2847
      %v2872 = vunpack.c.h.b16 %v2847
      %v2873 = vunpack.c.l.b16 %v2848
      %v2874 = vunpack.c.h.b16 %v2848
      %v2875 = vunpack.c.l.b16 %v2849
      %v2876 = vunpack.c.h.b16 %v2849
      %v2877 = vunpack.c.l.b16 %v2850
      %v2878 = vunpack.c.h.b16 %v2850
      %v2879 = vunpack.c.l.b16 %v2851
      %v2880 = vunpack.c.h.b16 %v2851
      %v2881 = vunpack.c.l.b16 %v2852
      %v2882 = vunpack.c.h.b16 %v2852
      %v2883 = vpack.c.b16 %v2869, %v2867
      %v2884 = vpack.c.b16 %v2870, %v2868
      %v2885 = vpack.c.b16 %v2873, %v2871
      %v2886 = vpack.c.b16 %v2874, %v2872
      %v2887 = vpack.c.b16 %v2877, %v2875
      %v2888 = vpack.c.b16 %v2878, %v2876
      %v2889 = vpack.c.b16 %v2881, %v2879
      %v2890 = vpack.c.b16 %v2882, %v2880
      %v2900 = vsel %vm2599, %v2841, 0
      %v2903 = vsel %vm2599, %v2842, 0
      %v2906 = vsel %vm2599, %v2843, 0
      %v2909 = vsel %vm2599, %v2844, 0
      %2911 = vmatpush.bf16.msra.mxu0 0
      %2912 = vmatpush.bf16.msra.mxu0 0
      %2913 = vmatpush.bf16.msra.mxu0 0
      %2914 = vmatpush.bf16.msra.mxu0 0
      %2915 = vmatpush.bf16.msra.mxu0 %v2889
      %2916 = vmatpush.bf16.msra.mxu0 %v2887
      %2917 = vmatpush.bf16.msra.mxu0 %v2885
      %2918 = vmatpush.bf16.msra.mxu0 %v2883
      %2919 = vmatmul.bf16.gmra.mxu0 %v2900
      %v2920 = vpop.f32.mrf.mxu0
      %v2921 = vadd.f32 %v2855, %v2920
      %v2922 = vpop.f32.mrf.mxu0
      %v2923 = vadd.f32 %v2855, %v2922
      %2924 = vmatmul.bf16.gmra.mxu0 %v2903
      %v2925 = vpop.f32.mrf.mxu0
      %v2926 = vadd.f32 %v2855, %v2925
      %v2927 = vpop.f32.mrf.mxu0
      %v2928 = vadd.f32 %v2855, %v2927
      %2929 = vmatmul.bf16.gmra.mxu0 %v2906
      %v2930 = vpop.f32.mrf.mxu0
      %v2931 = vadd.f32 %v2855, %v2930
      %v2932 = vpop.f32.mrf.mxu0
      %v2933 = vadd.f32 %v2855, %v2932
      %2934 = vmatmul.bf16.gmra.mxu0 %v2909
      %v2935 = vpop.f32.mrf.mxu0
      %v2936 = vadd.f32 %v2855, %v2935
      %v2937 = vpop.f32.mrf.mxu0
      %v2938 = vadd.f32 %v2855, %v2937
      %2939 = vdwg.mxu0
      %2940 = vmatpush.bf16.msra.mxu0 0
      %2941 = vmatpush.bf16.msra.mxu0 0
      %2942 = vmatpush.bf16.msra.mxu0 0
      %2943 = vmatpush.bf16.msra.mxu0 0
      %2944 = vmatpush.bf16.msra.mxu0 %v2890
      %2945 = vmatpush.bf16.msra.mxu0 %v2888
      %2946 = vmatpush.bf16.msra.mxu0 %v2886
      %2947 = vmatpush.bf16.msra.mxu0 %v2884
      %2948 = vmatmul.bf16.gmra.mxu0 %v2900
      %v2949 = vpop.f32.mrf.mxu0
      %v2950 = vadd.f32 %v2856, %v2949
      %v2951 = vpop.f32.mrf.mxu0
      %v2952 = vadd.f32 %v2856, %v2951
      %2953 = vmatmul.bf16.gmra.mxu0 %v2903
      %v2954 = vpop.f32.mrf.mxu0
      %v2955 = vadd.f32 %v2856, %v2954
      %v2956 = vpop.f32.mrf.mxu0
      %v2957 = vadd.f32 %v2856, %v2956
      %2958 = vmatmul.bf16.gmra.mxu0 %v2906
      %v2959 = vpop.f32.mrf.mxu0
      %v2960 = vadd.f32 %v2856, %v2959
      %v2961 = vpop.f32.mrf.mxu0
      %v2962 = vadd.f32 %v2856, %v2961
      %2963 = vmatmul.bf16.gmra.mxu0 %v2909
      %v2964 = vpop.f32.mrf.mxu0
      %v2965 = vadd.f32 %v2856, %v2964
      %v2966 = vpop.f32.mrf.mxu0
      %v2967 = vadd.f32 %v2856, %v2966
      %2968 = vdwg.mxu0
      %v2969 = vmul.f32 %v2921, 0.5
      %v2970 = vmul.f32 %v2950, 0.5
      %v2971 = vmul.f32 %v2923, 0.5
      %v2972 = vmul.f32 %v2952, 0.5
      %v2973 = vmul.f32 %v2926, 0.5
      %v2974 = vmul.f32 %v2955, 0.5
      %v2975 = vmul.f32 %v2928, 0.5
      %v2976 = vmul.f32 %v2957, 0.5
      %v2977 = vmul.f32 %v2931, 0.5
      %v2978 = vmul.f32 %v2960, 0.5
      %v2979 = vmul.f32 %v2933, 0.5
      %v2980 = vmul.f32 %v2962, 0.5
      %v2981 = vmul.f32 %v2936, 0.5
      %v2982 = vmul.f32 %v2965, 0.5
      %v2983 = vmul.f32 %v2938, 0.5
      %v2984 = vmul.f32 %v2967, 0.5
      %v2985 = vmul.f32 %v2921, 0.70710677
      %v2986 = vmul.f32 %v2950, 0.70710677
      %v2987 = vmul.f32 %v2923, 0.70710677
      %v2988 = vmul.f32 %v2952, 0.70710677
      %v2989 = vmul.f32 %v2926, 0.70710677
      %v2990 = vmul.f32 %v2955, 0.70710677
      %v2991 = vmul.f32 %v2928, 0.70710677
      %v2992 = vmul.f32 %v2957, 0.70710677
      %v2993 = vmul.f32 %v2931, 0.70710677
      %v2994 = vmul.f32 %v2960, 0.70710677
      %v2995 = vmul.f32 %v2933, 0.70710677
      %v2996 = vmul.f32 %v2962, 0.70710677
      %v2997 = vmul.f32 %v2936, 0.70710677
      %v2998 = vmul.f32 %v2965, 0.70710677
      %v2999 = vmul.f32 %v2938, 0.70710677
      %v3000 = vmul.f32 %v2967, 0.70710677
      %v3001 = vmul.f32 %v2985, %v2985
      %v3002 = vmin.f32 16.0, %v3001
      %v3003 = vmul.f32 %v3002, 2.1237322e-06
      %v3004 = vadd.f32 %v3003, 0.00028619796
      %v3005 = vmul.f32 %v3002, %v3004
      %v3006 = vadd.f32 %v3005, 0.0036580483
      %v3007 = vmul.f32 %v3002, %v3006
      %v3008 = vadd.f32 %v3007, 0.05243302
      %v3009 = vmul.f32 %v3002, %v3008
      %v3010 = vadd.f32 %v3009, 0.18741608
      %v3011 = vmul.f32 %v3002, %v3010
      %v3012 = vadd.f32 %v3011, 1.1283791
      %v3013 = vmul.f32 %v2985, %v3012
      %v3014 = vmul.f32 %v3002, 3.8918573e-05
      %v3015 = vadd.f32 %v3014, 0.001143296
      %v3016 = vmul.f32 %v3002, %v3015
      %v3017 = vadd.f32 %v3016, 0.014752088
      %v3018 = vmul.f32 %v3002, %v3017
      %v3019 = vadd.f32 %v3018, 0.112945676
      %v3020 = vmul.f32 %v3002, %v3019
      %v3021 = vadd.f32 %v3020, 0.4994258
      %v3022 = vmul.f32 %v3002, %v3021
      %v3023 = vadd.f32 %v3022, 1.0
      %v3024 = vrcp.pop %v3023
      %v3025 = vmul.f32 %v3023, %v3024
      %v3026 = vsub.f32 1.0, %v3025
      %v3027 = vmul.f32 %v3024, %v3026
      %v3028 = vadd.f32 %v3024, %v3027
      %vm3029 = vweird.f32 %v3023
      %vm3030 = vweird.f32 %v3024
      %vm3031 = vmor %vm3029, %vm3030
      %v3032 = vsel %vm3031, %v3024, %v3028
      %v3033 = vand.u32 2147483647, %v3023
      %vm3034 = vcmp.eq.f32.partialorder %v3033, 8.507059e+37
      %v3035 = vand.u32 %v3023, 2147483648
      %v3036 = vor.u32 1.1754944e-38, %v3035
      %v3037 = vsel %vm3034, %v3036, %v3032
      %v3038 = vmul.f32 %v3013, %v3037
      %v3039 = vmin.f32 %v3038, 1.0
      %v3040 = vmax.f32 %v3039, -1.0
      %v3041 = vmul.f32 %v2986, %v2986
      %v3042 = vmin.f32 16.0, %v3041
      %v3043 = vmul.f32 %v3042, 2.1237322e-06
      %v3044 = vadd.f32 %v3043, 0.00028619796
      %v3045 = vmul.f32 %v3042, %v3044
      %v3046 = vadd.f32 %v3045, 0.0036580483
      %v3047 = vmul.f32 %v3042, %v3046
      %v3048 = vadd.f32 %v3047, 0.05243302
      %v3049 = vmul.f32 %v3042, %v3048
      %v3050 = vadd.f32 %v3049, 0.18741608
      %v3051 = vmul.f32 %v3042, %v3050
      %v3052 = vadd.f32 %v3051, 1.1283791
      %v3053 = vmul.f32 %v2986, %v3052
      %v3054 = vmul.f32 %v3042, 3.8918573e-05
      %v3055 = vadd.f32 %v3054, 0.001143296
      %v3056 = vmul.f32 %v3042, %v3055
      %v3057 = vadd.f32 %v3056, 0.014752088
      %v3058 = vmul.f32 %v3042, %v3057
      %v3059 = vadd.f32 %v3058, 0.112945676
      %v3060 = vmul.f32 %v3042, %v3059
      %v3061 = vadd.f32 %v3060, 0.4994258
      %v3062 = vmul.f32 %v3042, %v3061
      %v3063 = vadd.f32 %v3062, 1.0
      %v3064 = vrcp.pop %v3063
      %v3065 = vmul.f32 %v3063, %v3064
      %v3066 = vsub.f32 1.0, %v3065
      %v3067 = vmul.f32 %v3064, %v3066
      %v3068 = vadd.f32 %v3064, %v3067
      %vm3069 = vweird.f32 %v3063
      %vm3070 = vweird.f32 %v3064
      %vm3071 = vmor %vm3069, %vm3070
      %v3072 = vsel %vm3071, %v3064, %v3068
      %v3073 = vand.u32 2147483647, %v3063
      %vm3074 = vcmp.eq.f32.partialorder %v3073, 8.507059e+37
      %v3075 = vand.u32 %v3063, 2147483648
      %v3076 = vor.u32 1.1754944e-38, %v3075
      %v3077 = vsel %vm3074, %v3076, %v3072
      %v3078 = vmul.f32 %v3053, %v3077
      %v3079 = vmin.f32 %v3078, 1.0
      %v3080 = vmax.f32 %v3079, -1.0
      %v3081 = vmul.f32 %v2987, %v2987
      %v3082 = vmin.f32 16.0, %v3081
      %v3083 = vmul.f32 %v3082, 2.1237322e-06
      %v3084 = vadd.f32 %v3083, 0.00028619796
      %v3085 = vmul.f32 %v3082, %v3084
      %v3086 = vadd.f32 %v3085, 0.0036580483
      %v3087 = vmul.f32 %v3082, %v3086
      %v3088 = vadd.f32 %v3087, 0.05243302
      %v3089 = vmul.f32 %v3082, %v3088
      %v3090 = vadd.f32 %v3089, 0.18741608
      %v3091 = vmul.f32 %v3082, %v3090
      %v3092 = vadd.f32 %v3091, 1.1283791
      %v3093 = vmul.f32 %v2987, %v3092
      %v3094 = vmul.f32 %v3082, 3.8918573e-05
      %v3095 = vadd.f32 %v3094, 0.001143296
      %v3096 = vmul.f32 %v3082, %v3095
      %v3097 = vadd.f32 %v3096, 0.014752088
      %v3098 = vmul.f32 %v3082, %v3097
      %v3099 = vadd.f32 %v3098, 0.112945676
      %v3100 = vmul.f32 %v3082, %v3099
      %v3101 = vadd.f32 %v3100, 0.4994258
      %v3102 = vmul.f32 %v3082, %v3101
      %v3103 = vadd.f32 %v3102, 1.0
      %v3104 = vrcp.pop %v3103
      %v3105 = vmul.f32 %v3103, %v3104
      %v3106 = vsub.f32 1.0, %v3105
      %v3107 = vmul.f32 %v3104, %v3106
      %v3108 = vadd.f32 %v3104, %v3107
      %vm3109 = vweird.f32 %v3103
      %vm3110 = vweird.f32 %v3104
      %vm3111 = vmor %vm3109, %vm3110
      %v3112 = vsel %vm3111, %v3104, %v3108
      %v3113 = vand.u32 2147483647, %v3103
      %vm3114 = vcmp.eq.f32.partialorder %v3113, 8.507059e+37
      %v3115 = vand.u32 %v3103, 2147483648
      %v3116 = vor.u32 1.1754944e-38, %v3115
      %v3117 = vsel %vm3114, %v3116, %v3112
      %v3118 = vmul.f32 %v3093, %v3117
      %v3119 = vmin.f32 %v3118, 1.0
      %v3120 = vmax.f32 %v3119, -1.0
      %v3121 = vmul.f32 %v2988, %v2988
      %v3122 = vmin.f32 16.0, %v3121
      %v3123 = vmul.f32 %v3122, 2.1237322e-06
      %v3124 = vadd.f32 %v3123, 0.00028619796
      %v3125 = vmul.f32 %v3122, %v3124
      %v3126 = vadd.f32 %v3125, 0.0036580483
      %v3127 = vmul.f32 %v3122, %v3126
      %v3128 = vadd.f32 %v3127, 0.05243302
      %v3129 = vmul.f32 %v3122, %v3128
      %v3130 = vadd.f32 %v3129, 0.18741608
      %v3131 = vmul.f32 %v3122, %v3130
      %v3132 = vadd.f32 %v3131, 1.1283791
      %v3133 = vmul.f32 %v2988, %v3132
      %v3134 = vmul.f32 %v3122, 3.8918573e-05
      %v3135 = vadd.f32 %v3134, 0.001143296
      %v3136 = vmul.f32 %v3122, %v3135
      %v3137 = vadd.f32 %v3136, 0.014752088
      %v3138 = vmul.f32 %v3122, %v3137
      %v3139 = vadd.f32 %v3138, 0.112945676
      %v3140 = vmul.f32 %v3122, %v3139
      %v3141 = vadd.f32 %v3140, 0.4994258
      %v3142 = vmul.f32 %v3122, %v3141
      %v3143 = vadd.f32 %v3142, 1.0
      %v3144 = vrcp.pop %v3143
      %v3145 = vmul.f32 %v3143, %v3144
      %v3146 = vsub.f32 1.0, %v3145
      %v3147 = vmul.f32 %v3144, %v3146
      %v3148 = vadd.f32 %v3144, %v3147
      %vm3149 = vweird.f32 %v3143
      %vm3150 = vweird.f32 %v3144
      %vm3151 = vmor %vm3149, %vm3150
      %v3152 = vsel %vm3151, %v3144, %v3148
      %v3153 = vand.u32 2147483647, %v3143
      %vm3154 = vcmp.eq.f32.partialorder %v3153, 8.507059e+37
      %v3155 = vand.u32 %v3143, 2147483648
      %v3156 = vor.u32 1.1754944e-38, %v3155
      %v3157 = vsel %vm3154, %v3156, %v3152
      %v3158 = vmul.f32 %v3133, %v3157
      %v3159 = vmin.f32 %v3158, 1.0
      %v3160 = vmax.f32 %v3159, -1.0
      %v3161 = vmul.f32 %v2989, %v2989
      %v3162 = vmin.f32 16.0, %v3161
      %v3163 = vmul.f32 %v3162, 2.1237322e-06
      %v3164 = vadd.f32 %v3163, 0.00028619796
      %v3165 = vmul.f32 %v3162, %v3164
      %v3166 = vadd.f32 %v3165, 0.0036580483
      %v3167 = vmul.f32 %v3162, %v3166
      %v3168 = vadd.f32 %v3167, 0.05243302
      %v3169 = vmul.f32 %v3162, %v3168
      %v3170 = vadd.f32 %v3169, 0.18741608
      %v3171 = vmul.f32 %v3162, %v3170
      %v3172 = vadd.f32 %v3171, 1.1283791
      %v3173 = vmul.f32 %v2989, %v3172
      %v3174 = vmul.f32 %v3162, 3.8918573e-05
      %v3175 = vadd.f32 %v3174, 0.001143296
      %v3176 = vmul.f32 %v3162, %v3175
      %v3177 = vadd.f32 %v3176, 0.014752088
      %v3178 = vmul.f32 %v3162, %v3177
      %v3179 = vadd.f32 %v3178, 0.112945676
      %v3180 = vmul.f32 %v3162, %v3179
      %v3181 = vadd.f32 %v3180, 0.4994258
      %v3182 = vmul.f32 %v3162, %v3181
      %v3183 = vadd.f32 %v3182, 1.0
      %v3184 = vrcp.pop %v3183
      %v3185 = vmul.f32 %v3183, %v3184
      %v3186 = vsub.f32 1.0, %v3185
      %v3187 = vmul.f32 %v3184, %v3186
      %v3188 = vadd.f32 %v3184, %v3187
      %vm3189 = vweird.f32 %v3183
      %vm3190 = vweird.f32 %v3184
      %vm3191 = vmor %vm3189, %vm3190
      %v3192 = vsel %vm3191, %v3184, %v3188
      %v3193 = vand.u32 2147483647, %v3183
      %vm3194 = vcmp.eq.f32.partialorder %v3193, 8.507059e+37
      %v3195 = vand.u32 %v3183, 2147483648
      %v3196 = vor.u32 1.1754944e-38, %v3195
      %v3197 = vsel %vm3194, %v3196, %v3192
      %v3198 = vmul.f32 %v3173, %v3197
      %v3199 = vmin.f32 %v3198, 1.0
      %v3200 = vmax.f32 %v3199, -1.0
      %v3201 = vmul.f32 %v2990, %v2990
      %v3202 = vmin.f32 16.0, %v3201
      %v3203 = vmul.f32 %v3202, 2.1237322e-06
      %v3204 = vadd.f32 %v3203, 0.00028619796
      %v3205 = vmul.f32 %v3202, %v3204
      %v3206 = vadd.f32 %v3205, 0.0036580483
      %v3207 = vmul.f32 %v3202, %v3206
      %v3208 = vadd.f32 %v3207, 0.05243302
      %v3209 = vmul.f32 %v3202, %v3208
      %v3210 = vadd.f32 %v3209, 0.18741608
      %v3211 = vmul.f32 %v3202, %v3210
      %v3212 = vadd.f32 %v3211, 1.1283791
      %v3213 = vmul.f32 %v2990, %v3212
      %v3214 = vmul.f32 %v3202, 3.8918573e-05
      %v3215 = vadd.f32 %v3214, 0.001143296
      %v3216 = vmul.f32 %v3202, %v3215
      %v3217 = vadd.f32 %v3216, 0.014752088
      %v3218 = vmul.f32 %v3202, %v3217
      %v3219 = vadd.f32 %v3218, 0.112945676
      %v3220 = vmul.f32 %v3202, %v3219
      %v3221 = vadd.f32 %v3220, 0.4994258
      %v3222 = vmul.f32 %v3202, %v3221
      %v3223 = vadd.f32 %v3222, 1.0
      %v3224 = vrcp.pop %v3223
      %v3225 = vmul.f32 %v3223, %v3224
      %v3226 = vsub.f32 1.0, %v3225
      %v3227 = vmul.f32 %v3224, %v3226
      %v3228 = vadd.f32 %v3224, %v3227
      %vm3229 = vweird.f32 %v3223
      %vm3230 = vweird.f32 %v3224
      %vm3231 = vmor %vm3229, %vm3230
      %v3232 = vsel %vm3231, %v3224, %v3228
      %v3233 = vand.u32 2147483647, %v3223
      %vm3234 = vcmp.eq.f32.partialorder %v3233, 8.507059e+37
      %v3235 = vand.u32 %v3223, 2147483648
      %v3236 = vor.u32 1.1754944e-38, %v3235
      %v3237 = vsel %vm3234, %v3236, %v3232
      %v3238 = vmul.f32 %v3213, %v3237
      %v3239 = vmin.f32 %v3238, 1.0
      %v3240 = vmax.f32 %v3239, -1.0
      %v3241 = vmul.f32 %v2991, %v2991
      %v3242 = vmin.f32 16.0, %v3241
      %v3243 = vmul.f32 %v3242, 2.1237322e-06
      %v3244 = vadd.f32 %v3243, 0.00028619796
      %v3245 = vmul.f32 %v3242, %v3244
      %v3246 = vadd.f32 %v3245, 0.0036580483
      %v3247 = vmul.f32 %v3242, %v3246
      %v3248 = vadd.f32 %v3247, 0.05243302
      %v3249 = vmul.f32 %v3242, %v3248
      %v3250 = vadd.f32 %v3249, 0.18741608
      %v3251 = vmul.f32 %v3242, %v3250
      %v3252 = vadd.f32 %v3251, 1.1283791
      %v3253 = vmul.f32 %v2991, %v3252
      %v3254 = vmul.f32 %v3242, 3.8918573e-05
      %v3255 = vadd.f32 %v3254, 0.001143296
      %v3256 = vmul.f32 %v3242, %v3255
      %v3257 = vadd.f32 %v3256, 0.014752088
      %v3258 = vmul.f32 %v3242, %v3257
      %v3259 = vadd.f32 %v3258, 0.112945676
      %v3260 = vmul.f32 %v3242, %v3259
      %v3261 = vadd.f32 %v3260, 0.4994258
      %v3262 = vmul.f32 %v3242, %v3261
      %v3263 = vadd.f32 %v3262, 1.0
      %v3264 = vrcp.pop %v3263
      %v3265 = vmul.f32 %v3263, %v3264
      %v3266 = vsub.f32 1.0, %v3265
      %v3267 = vmul.f32 %v3264, %v3266
      %v3268 = vadd.f32 %v3264, %v3267
      %vm3269 = vweird.f32 %v3263
      %vm3270 = vweird.f32 %v3264
      %vm3271 = vmor %vm3269, %vm3270
      %v3272 = vsel %vm3271, %v3264, %v3268
      %v3273 = vand.u32 2147483647, %v3263
      %vm3274 = vcmp.eq.f32.partialorder %v3273, 8.507059e+37
      %v3275 = vand.u32 %v3263, 2147483648
      %v3276 = vor.u32 1.1754944e-38, %v3275
      %v3277 = vsel %vm3274, %v3276, %v3272
      %v3278 = vmul.f32 %v3253, %v3277
      %v3279 = vmin.f32 %v3278, 1.0
      %v3280 = vmax.f32 %v3279, -1.0
      %v3281 = vmul.f32 %v2992, %v2992
      %v3282 = vmin.f32 16.0, %v3281
      %v3283 = vmul.f32 %v3282, 2.1237322e-06
      %v3284 = vadd.f32 %v3283, 0.00028619796
      %v3285 = vmul.f32 %v3282, %v3284
      %v3286 = vadd.f32 %v3285, 0.0036580483
      %v3287 = vmul.f32 %v3282, %v3286
      %v3288 = vadd.f32 %v3287, 0.05243302
      %v3289 = vmul.f32 %v3282, %v3288
      %v3290 = vadd.f32 %v3289, 0.18741608
      %v3291 = vmul.f32 %v3282, %v3290
      %v3292 = vadd.f32 %v3291, 1.1283791
      %v3293 = vmul.f32 %v2992, %v3292
      %v3294 = vmul.f32 %v3282, 3.8918573e-05
      %v3295 = vadd.f32 %v3294, 0.001143296
      %v3296 = vmul.f32 %v3282, %v3295
      %v3297 = vadd.f32 %v3296, 0.014752088
      %v3298 = vmul.f32 %v3282, %v3297
      %v3299 = vadd.f32 %v3298, 0.112945676
      %v3300 = vmul.f32 %v3282, %v3299
      %v3301 = vadd.f32 %v3300, 0.4994258
      %v3302 = vmul.f32 %v3282, %v3301
      %v3303 = vadd.f32 %v3302, 1.0
      %v3304 = vrcp.pop %v3303
      %v3305 = vmul.f32 %v3303, %v3304
      %v3306 = vsub.f32 1.0, %v3305
      %v3307 = vmul.f32 %v3304, %v3306
      %v3308 = vadd.f32 %v3304, %v3307
      %vm3309 = vweird.f32 %v3303
      %vm3310 = vweird.f32 %v3304
      %vm3311 = vmor %vm3309, %vm3310
      %v3312 = vsel %vm3311, %v3304, %v3308
      %v3313 = vand.u32 2147483647, %v3303
      %vm3314 = vcmp.eq.f32.partialorder %v3313, 8.507059e+37
      %v3315 = vand.u32 %v3303, 2147483648
      %v3316 = vor.u32 1.1754944e-38, %v3315
      %v3317 = vsel %vm3314, %v3316, %v3312
      %v3318 = vmul.f32 %v3293, %v3317
      %v3319 = vmin.f32 %v3318, 1.0
      %v3320 = vmax.f32 %v3319, -1.0
      %v3321 = vmul.f32 %v2993, %v2993
      %v3322 = vmin.f32 16.0, %v3321
      %v3323 = vmul.f32 %v3322, 2.1237322e-06
      %v3324 = vadd.f32 %v3323, 0.00028619796
      %v3325 = vmul.f32 %v3322, %v3324
      %v3326 = vadd.f32 %v3325, 0.0036580483
      %v3327 = vmul.f32 %v3322, %v3326
      %v3328 = vadd.f32 %v3327, 0.05243302
      %v3329 = vmul.f32 %v3322, %v3328
      %v3330 = vadd.f32 %v3329, 0.18741608
      %v3331 = vmul.f32 %v3322, %v3330
      %v3332 = vadd.f32 %v3331, 1.1283791
      %v3333 = vmul.f32 %v2993, %v3332
      %v3334 = vmul.f32 %v3322, 3.8918573e-05
      %v3335 = vadd.f32 %v3334, 0.001143296
      %v3336 = vmul.f32 %v3322, %v3335
      %v3337 = vadd.f32 %v3336, 0.014752088
      %v3338 = vmul.f32 %v3322, %v3337
      %v3339 = vadd.f32 %v3338, 0.112945676
      %v3340 = vmul.f32 %v3322, %v3339
      %v3341 = vadd.f32 %v3340, 0.4994258
      %v3342 = vmul.f32 %v3322, %v3341
      %v3343 = vadd.f32 %v3342, 1.0
      %v3344 = vrcp.pop %v3343
      %v3345 = vmul.f32 %v3343, %v3344
      %v3346 = vsub.f32 1.0, %v3345
      %v3347 = vmul.f32 %v3344, %v3346
      %v3348 = vadd.f32 %v3344, %v3347
      %vm3349 = vweird.f32 %v3343
      %vm3350 = vweird.f32 %v3344
      %vm3351 = vmor %vm3349, %vm3350
      %v3352 = vsel %vm3351, %v3344, %v3348
      %v3353 = vand.u32 2147483647, %v3343
      %vm3354 = vcmp.eq.f32.partialorder %v3353, 8.507059e+37
      %v3355 = vand.u32 %v3343, 2147483648
      %v3356 = vor.u32 1.1754944e-38, %v3355
      %v3357 = vsel %vm3354, %v3356, %v3352
      %v3358 = vmul.f32 %v3333, %v3357
      %v3359 = vmin.f32 %v3358, 1.0
      %v3360 = vmax.f32 %v3359, -1.0
      %v3361 = vmul.f32 %v2994, %v2994
      %v3362 = vmin.f32 16.0, %v3361
      %v3363 = vmul.f32 %v3362, 2.1237322e-06
      %v3364 = vadd.f32 %v3363, 0.00028619796
      %v3365 = vmul.f32 %v3362, %v3364
      %v3366 = vadd.f32 %v3365, 0.0036580483
      %v3367 = vmul.f32 %v3362, %v3366
      %v3368 = vadd.f32 %v3367, 0.05243302
      %v3369 = vmul.f32 %v3362, %v3368
      %v3370 = vadd.f32 %v3369, 0.18741608
      %v3371 = vmul.f32 %v3362, %v3370
      %v3372 = vadd.f32 %v3371, 1.1283791
      %v3373 = vmul.f32 %v2994, %v3372
      %v3374 = vmul.f32 %v3362, 3.8918573e-05
      %v3375 = vadd.f32 %v3374, 0.001143296
      %v3376 = vmul.f32 %v3362, %v3375
      %v3377 = vadd.f32 %v3376, 0.014752088
      %v3378 = vmul.f32 %v3362, %v3377
      %v3379 = vadd.f32 %v3378, 0.112945676
      %v3380 = vmul.f32 %v3362, %v3379
      %v3381 = vadd.f32 %v3380, 0.4994258
      %v3382 = vmul.f32 %v3362, %v3381
      %v3383 = vadd.f32 %v3382, 1.0
      %v3384 = vrcp.pop %v3383
      %v3385 = vmul.f32 %v3383, %v3384
      %v3386 = vsub.f32 1.0, %v3385
      %v3387 = vmul.f32 %v3384, %v3386
      %v3388 = vadd.f32 %v3384, %v3387
      %vm3389 = vweird.f32 %v3383
      %vm3390 = vweird.f32 %v3384
      %vm3391 = vmor %vm3389, %vm3390
      %v3392 = vsel %vm3391, %v3384, %v3388
      %v3393 = vand.u32 2147483647, %v3383
      %vm3394 = vcmp.eq.f32.partialorder %v3393, 8.507059e+37
      %v3395 = vand.u32 %v3383, 2147483648
      %v3396 = vor.u32 1.1754944e-38, %v3395
      %v3397 = vsel %vm3394, %v3396, %v3392
      %v3398 = vmul.f32 %v3373, %v3397
      %v3399 = vmin.f32 %v3398, 1.0
      %v3400 = vmax.f32 %v3399, -1.0
      %v3401 = vmul.f32 %v2995, %v2995
      %v3402 = vmin.f32 16.0, %v3401
      %v3403 = vmul.f32 %v3402, 2.1237322e-06
      %v3404 = vadd.f32 %v3403, 0.00028619796
      %v3405 = vmul.f32 %v3402, %v3404
      %v3406 = vadd.f32 %v3405, 0.0036580483
      %v3407 = vmul.f32 %v3402, %v3406
      %v3408 = vadd.f32 %v3407, 0.05243302
      %v3409 = vmul.f32 %v3402, %v3408
      %v3410 = vadd.f32 %v3409, 0.18741608
      %v3411 = vmul.f32 %v3402, %v3410
      %v3412 = vadd.f32 %v3411, 1.1283791
      %v3413 = vmul.f32 %v2995, %v3412
      %v3414 = vmul.f32 %v3402, 3.8918573e-05
      %v3415 = vadd.f32 %v3414, 0.001143296
      %v3416 = vmul.f32 %v3402, %v3415
      %v3417 = vadd.f32 %v3416, 0.014752088
      %v3418 = vmul.f32 %v3402, %v3417
      %v3419 = vadd.f32 %v3418, 0.112945676
      %v3420 = vmul.f32 %v3402, %v3419
      %v3421 = vadd.f32 %v3420, 0.4994258
      %v3422 = vmul.f32 %v3402, %v3421
      %v3423 = vadd.f32 %v3422, 1.0
      %v3424 = vrcp.pop %v3423
      %v3425 = vmul.f32 %v3423, %v3424
      %v3426 = vsub.f32 1.0, %v3425
      %v3427 = vmul.f32 %v3424, %v3426
      %v3428 = vadd.f32 %v3424, %v3427
      %vm3429 = vweird.f32 %v3423
      %vm3430 = vweird.f32 %v3424
      %vm3431 = vmor %vm3429, %vm3430
      %v3432 = vsel %vm3431, %v3424, %v3428
      %v3433 = vand.u32 2147483647, %v3423
      %vm3434 = vcmp.eq.f32.partialorder %v3433, 8.507059e+37
      %v3435 = vand.u32 %v3423, 2147483648
      %v3436 = vor.u32 1.1754944e-38, %v3435
      %v3437 = vsel %vm3434, %v3436, %v3432
      %v3438 = vmul.f32 %v3413, %v3437
      %v3439 = vmin.f32 %v3438, 1.0
      %v3440 = vmax.f32 %v3439, -1.0
      %v3441 = vmul.f32 %v2996, %v2996
      %v3442 = vmin.f32 16.0, %v3441
      %v3443 = vmul.f32 %v3442, 2.1237322e-06
      %v3444 = vadd.f32 %v3443, 0.00028619796
      %v3445 = vmul.f32 %v3442, %v3444
      %v3446 = vadd.f32 %v3445, 0.0036580483
      %v3447 = vmul.f32 %v3442, %v3446
      %v3448 = vadd.f32 %v3447, 0.05243302
      %v3449 = vmul.f32 %v3442, %v3448
      %v3450 = vadd.f32 %v3449, 0.18741608
      %v3451 = vmul.f32 %v3442, %v3450
      %v3452 = vadd.f32 %v3451, 1.1283791
      %v3453 = vmul.f32 %v2996, %v3452
      %v3454 = vmul.f32 %v3442, 3.8918573e-05
      %v3455 = vadd.f32 %v3454, 0.001143296
      %v3456 = vmul.f32 %v3442, %v3455
      %v3457 = vadd.f32 %v3456, 0.014752088
      %v3458 = vmul.f32 %v3442, %v3457
      %v3459 = vadd.f32 %v3458, 0.112945676
      %v3460 = vmul.f32 %v3442, %v3459
      %v3461 = vadd.f32 %v3460, 0.4994258
      %v3462 = vmul.f32 %v3442, %v3461
      %v3463 = vadd.f32 %v3462, 1.0
      %v3464 = vrcp.pop %v3463
      %v3465 = vmul.f32 %v3463, %v3464
      %v3466 = vsub.f32 1.0, %v3465
      %v3467 = vmul.f32 %v3464, %v3466
      %v3468 = vadd.f32 %v3464, %v3467
      %vm3469 = vweird.f32 %v3463
      %vm3470 = vweird.f32 %v3464
      %vm3471 = vmor %vm3469, %vm3470
      %v3472 = vsel %vm3471, %v3464, %v3468
      %v3473 = vand.u32 2147483647, %v3463
      %vm3474 = vcmp.eq.f32.partialorder %v3473, 8.507059e+37
      %v3475 = vand.u32 %v3463, 2147483648
      %v3476 = vor.u32 1.1754944e-38, %v3475
      %v3477 = vsel %vm3474, %v3476, %v3472
      %v3478 = vmul.f32 %v3453, %v3477
      %v3479 = vmin.f32 %v3478, 1.0
      %v3480 = vmax.f32 %v3479, -1.0
      %v3481 = vmul.f32 %v2997, %v2997
      %v3482 = vmin.f32 16.0, %v3481
      %v3483 = vmul.f32 %v3482, 2.1237322e-06
      %v3484 = vadd.f32 %v3483, 0.00028619796
      %v3485 = vmul.f32 %v3482, %v3484
      %v3486 = vadd.f32 %v3485, 0.0036580483
      %v3487 = vmul.f32 %v3482, %v3486
      %v3488 = vadd.f32 %v3487, 0.05243302
      %v3489 = vmul.f32 %v3482, %v3488
      %v3490 = vadd.f32 %v3489, 0.18741608
      %v3491 = vmul.f32 %v3482, %v3490
      %v3492 = vadd.f32 %v3491, 1.1283791
      %v3493 = vmul.f32 %v2997, %v3492
      %v3494 = vmul.f32 %v3482, 3.8918573e-05
      %v3495 = vadd.f32 %v3494, 0.001143296
      %v3496 = vmul.f32 %v3482, %v3495
      %v3497 = vadd.f32 %v3496, 0.014752088
      %v3498 = vmul.f32 %v3482, %v3497
      %v3499 = vadd.f32 %v3498, 0.112945676
      %v3500 = vmul.f32 %v3482, %v3499
      %v3501 = vadd.f32 %v3500, 0.4994258
      %v3502 = vmul.f32 %v3482, %v3501
      %v3503 = vadd.f32 %v3502, 1.0
      %v3504 = vrcp.pop %v3503
      %v3505 = vmul.f32 %v3503, %v3504
      %v3506 = vsub.f32 1.0, %v3505
      %v3507 = vmul.f32 %v3504, %v3506
      %v3508 = vadd.f32 %v3504, %v3507
      %vm3509 = vweird.f32 %v3503
      %vm3510 = vweird.f32 %v3504
      %vm3511 = vmor %vm3509, %vm3510
      %v3512 = vsel %vm3511, %v3504, %v3508
      %v3513 = vand.u32 2147483647, %v3503
      %vm3514 = vcmp.eq.f32.partialorder %v3513, 8.507059e+37
      %v3515 = vand.u32 %v3503, 2147483648
      %v3516 = vor.u32 1.1754944e-38, %v3515
      %v3517 = vsel %vm3514, %v3516, %v3512
      %v3518 = vmul.f32 %v3493, %v3517
      %v3519 = vmin.f32 %v3518, 1.0
      %v3520 = vmax.f32 %v3519, -1.0
      %v3521 = vmul.f32 %v2998, %v2998
      %v3522 = vmin.f32 16.0, %v3521
      %v3523 = vmul.f32 %v3522, 2.1237322e-06
      %v3524 = vadd.f32 %v3523, 0.00028619796
      %v3525 = vmul.f32 %v3522, %v3524
      %v3526 = vadd.f32 %v3525, 0.0036580483
      %v3527 = vmul.f32 %v3522, %v3526
      %v3528 = vadd.f32 %v3527, 0.05243302
      %v3529 = vmul.f32 %v3522, %v3528
      %v3530 = vadd.f32 %v3529, 0.18741608
      %v3531 = vmul.f32 %v3522, %v3530
      %v3532 = vadd.f32 %v3531, 1.1283791
      %v3533 = vmul.f32 %v2998, %v3532
      %v3534 = vmul.f32 %v3522, 3.8918573e-05
      %v3535 = vadd.f32 %v3534, 0.001143296
      %v3536 = vmul.f32 %v3522, %v3535
      %v3537 = vadd.f32 %v3536, 0.014752088
      %v3538 = vmul.f32 %v3522, %v3537
      %v3539 = vadd.f32 %v3538, 0.112945676
      %v3540 = vmul.f32 %v3522, %v3539
      %v3541 = vadd.f32 %v3540, 0.4994258
      %v3542 = vmul.f32 %v3522, %v3541
      %v3543 = vadd.f32 %v3542, 1.0
      %v3544 = vrcp.pop %v3543
      %v3545 = vmul.f32 %v3543, %v3544
      %v3546 = vsub.f32 1.0, %v3545
      %v3547 = vmul.f32 %v3544, %v3546
      %v3548 = vadd.f32 %v3544, %v3547
      %vm3549 = vweird.f32 %v3543
      %vm3550 = vweird.f32 %v3544
      %vm3551 = vmor %vm3549, %vm3550
      %v3552 = vsel %vm3551, %v3544, %v3548
      %v3553 = vand.u32 2147483647, %v3543
      %vm3554 = vcmp.eq.f32.partialorder %v3553, 8.507059e+37
      %v3555 = vand.u32 %v3543, 2147483648
      %v3556 = vor.u32 1.1754944e-38, %v3555
      %v3557 = vsel %vm3554, %v3556, %v3552
      %v3558 = vmul.f32 %v3533, %v3557
      %v3559 = vmin.f32 %v3558, 1.0
      %v3560 = vmax.f32 %v3559, -1.0
      %v3561 = vmul.f32 %v2999, %v2999
      %v3562 = vmin.f32 16.0, %v3561
      %v3563 = vmul.f32 %v3562, 2.1237322e-06
      %v3564 = vadd.f32 %v3563, 0.00028619796
      %v3565 = vmul.f32 %v3562, %v3564
      %v3566 = vadd.f32 %v3565, 0.0036580483
      %v3567 = vmul.f32 %v3562, %v3566
      %v3568 = vadd.f32 %v3567, 0.05243302
      %v3569 = vmul.f32 %v3562, %v3568
      %v3570 = vadd.f32 %v3569, 0.18741608
      %v3571 = vmul.f32 %v3562, %v3570
      %v3572 = vadd.f32 %v3571, 1.1283791
      %v3573 = vmul.f32 %v2999, %v3572
      %v3574 = vmul.f32 %v3562, 3.8918573e-05
      %v3575 = vadd.f32 %v3574, 0.001143296
      %v3576 = vmul.f32 %v3562, %v3575
      %v3577 = vadd.f32 %v3576, 0.014752088
      %v3578 = vmul.f32 %v3562, %v3577
      %v3579 = vadd.f32 %v3578, 0.112945676
      %v3580 = vmul.f32 %v3562, %v3579
      %v3581 = vadd.f32 %v3580, 0.4994258
      %v3582 = vmul.f32 %v3562, %v3581
      %v3583 = vadd.f32 %v3582, 1.0
      %v3584 = vrcp.pop %v3583
      %v3585 = vmul.f32 %v3583, %v3584
      %v3586 = vsub.f32 1.0, %v3585
      %v3587 = vmul.f32 %v3584, %v3586
      %v3588 = vadd.f32 %v3584, %v3587
      %vm3589 = vweird.f32 %v3583
      %vm3590 = vweird.f32 %v3584
      %vm3591 = vmor %vm3589, %vm3590
      %v3592 = vsel %vm3591, %v3584, %v3588
      %v3593 = vand.u32 2147483647, %v3583
      %vm3594 = vcmp.eq.f32.partialorder %v3593, 8.507059e+37
      %v3595 = vand.u32 %v3583, 2147483648
      %v3596 = vor.u32 1.1754944e-38, %v3595
      %v3597 = vsel %vm3594, %v3596, %v3592
      %v3598 = vmul.f32 %v3573, %v3597
      %v3599 = vmin.f32 %v3598, 1.0
      %v3600 = vmax.f32 %v3599, -1.0
      %v3601 = vmul.f32 %v3000, %v3000
      %v3602 = vmin.f32 16.0, %v3601
      %v3603 = vmul.f32 %v3602, 2.1237322e-06
      %v3604 = vadd.f32 %v3603, 0.00028619796
      %v3605 = vmul.f32 %v3602, %v3604
      %v3606 = vadd.f32 %v3605, 0.0036580483
      %v3607 = vmul.f32 %v3602, %v3606
      %v3608 = vadd.f32 %v3607, 0.05243302
      %v3609 = vmul.f32 %v3602, %v3608
      %v3610 = vadd.f32 %v3609, 0.18741608
      %v3611 = vmul.f32 %v3602, %v3610
      %v3612 = vadd.f32 %v3611, 1.1283791
      %v3613 = vmul.f32 %v3000, %v3612
      %v3614 = vmul.f32 %v3602, 3.8918573e-05
      %v3615 = vadd.f32 %v3614, 0.001143296
      %v3616 = vmul.f32 %v3602, %v3615
      %v3617 = vadd.f32 %v3616, 0.014752088
      %v3618 = vmul.f32 %v3602, %v3617
      %v3619 = vadd.f32 %v3618, 0.112945676
      %v3620 = vmul.f32 %v3602, %v3619
      %v3621 = vadd.f32 %v3620, 0.4994258
      %v3622 = vmul.f32 %v3602, %v3621
      %v3623 = vadd.f32 %v3622, 1.0
      %v3624 = vrcp.pop %v3623
      %v3625 = vmul.f32 %v3623, %v3624
      %v3626 = vsub.f32 1.0, %v3625
      %v3627 = vmul.f32 %v3624, %v3626
      %v3628 = vadd.f32 %v3624, %v3627
      %vm3629 = vweird.f32 %v3623
      %vm3630 = vweird.f32 %v3624
      %vm3631 = vmor %vm3629, %vm3630
      %v3632 = vsel %vm3631, %v3624, %v3628
      %v3633 = vand.u32 2147483647, %v3623
      %vm3634 = vcmp.eq.f32.partialorder %v3633, 8.507059e+37
      %v3635 = vand.u32 %v3623, 2147483648
      %v3636 = vor.u32 1.1754944e-38, %v3635
      %v3637 = vsel %vm3634, %v3636, %v3632
      %v3638 = vmul.f32 %v3613, %v3637
      %v3639 = vmin.f32 %v3638, 1.0
      %v3640 = vmax.f32 %v3639, -1.0
      %v3641 = vadd.f32 %v3040, 1.0
      %v3642 = vadd.f32 %v3080, 1.0
      %v3643 = vadd.f32 %v3120, 1.0
      %v3644 = vadd.f32 %v3160, 1.0
      %v3645 = vadd.f32 %v3200, 1.0
      %v3646 = vadd.f32 %v3240, 1.0
      %v3647 = vadd.f32 %v3280, 1.0
      %v3648 = vadd.f32 %v3320, 1.0
      %v3649 = vadd.f32 %v3360, 1.0
      %v3650 = vadd.f32 %v3400, 1.0
      %v3651 = vadd.f32 %v3440, 1.0
      %v3652 = vadd.f32 %v3480, 1.0
      %v3653 = vadd.f32 %v3520, 1.0
      %v3654 = vadd.f32 %v3560, 1.0
      %v3655 = vadd.f32 %v3600, 1.0
      %v3656 = vadd.f32 %v3640, 1.0
      %v3657 = vmul.f32 %v2969, %v3641
      %v3658 = vmul.f32 %v2970, %v3642
      %v3659 = vmul.f32 %v2971, %v3643
      %v3660 = vmul.f32 %v2972, %v3644
      %v3661 = vmul.f32 %v2973, %v3645
      %v3662 = vmul.f32 %v2974, %v3646
      %v3663 = vmul.f32 %v2975, %v3647
      %v3664 = vmul.f32 %v2976, %v3648
      %v3665 = vmul.f32 %v2977, %v3649
      %v3666 = vmul.f32 %v2978, %v3650
      %v3667 = vmul.f32 %v2979, %v3651
      %v3668 = vmul.f32 %v2980, %v3652
      %v3669 = vmul.f32 %v2981, %v3653
      %v3670 = vmul.f32 %v2982, %v3654
      %v3671 = vmul.f32 %v2983, %v3655
      %v3672 = vmul.f32 %v2984, %v3656
      %v3673 = vpack.c.bf16 %v3659, %v3657
      %v3674 = vpack.c.bf16 %v3660, %v3658
      %v3675 = vpack.c.bf16 %v3663, %v3661
      %v3676 = vpack.c.bf16 %v3664, %v3662
      %v3677 = vpack.c.bf16 %v3667, %v3665
      %v3678 = vpack.c.bf16 %v3668, %v3666
      %v3679 = vpack.c.bf16 %v3671, %v3669
      %v3680 = vpack.c.bf16 %v3672, %v3670
      %v3681 = vld [vmem:[%s7] sm:$0xf]
      %v3682 = vld [vmem:[%s7 + $0x4] sm:$0xf]
      %v3683 = vld [vmem:[%s7 + $0x8] sm:$0xf]
      %v3684 = vld [vmem:[%s7 + $0xc] sm:$0xf]
      %v3685 = vld [vmem:[%s7 + $0x10] sm:$0xf]
      %v3686 = vld [vmem:[%s7 + $0x14] sm:$0xf]
      %v3687 = vld [vmem:[%s7 + $0x18] sm:$0xf]
      %v3688 = vld [vmem:[%s7 + $0x1c] sm:$0xf]
      %v3689 = vld [vmem:[%s7 + $0x20] sm:$0xf]
      %v3690 = vld [vmem:[%s7 + $0x24] sm:$0xf]
      %v3691 = vld [vmem:[%s7 + $0x28] sm:$0xf]
      %v3692 = vld [vmem:[%s7 + $0x2c] sm:$0xf]
      %v3693 = vld [vmem:[%s7 + $0x30] sm:$0xf]
      %v3694 = vld [vmem:[%s7 + $0x34] sm:$0xf]
      %v3695 = vld [vmem:[%s7 + $0x38] sm:$0xf]
      %v3696 = vld [vmem:[%s7 + $0x3c] sm:$0xf]
      %v3697 = vld [vmem:[%s7 + $0x40] sm:$0xf]
      %v3698 = vld [vmem:[%s7 + $0x44] sm:$0xf]
      %v3699 = vld [vmem:[%s7 + $0x48] sm:$0xf]
      %v3700 = vld [vmem:[%s7 + $0x4c] sm:$0xf]
      %v3701 = vld [vmem:[%s7 + $0x50] sm:$0xf]
      %v3702 = vld [vmem:[%s7 + $0x54] sm:$0xf]
      %v3703 = vld [vmem:[%s7 + $0x58] sm:$0xf]
      %v3704 = vld [vmem:[%s7 + $0x5c] sm:$0xf]
      %v3705 = vld [vmem:[%s7 + $0x60] sm:$0xf]
      %v3706 = vld [vmem:[%s7 + $0x64] sm:$0xf]
      %v3707 = vld [vmem:[%s7 + $0x68] sm:$0xf]
      %v3708 = vld [vmem:[%s7 + $0x6c] sm:$0xf]
      %v3709 = vld [vmem:[%s7 + $0x70] sm:$0xf]
      %v3710 = vld [vmem:[%s7 + $0x74] sm:$0xf]
      %v3711 = vld [vmem:[%s7 + $0x78] sm:$0xf]
      %v3712 = vld [vmem:[%s7 + $0x7c] sm:$0xf]
      %v3713 = vld [vmem:[%s8] sm:$0x1]
      %v3715 = vperm.slane %v3713, 0
      %v3749 = vunpack.c.l.b16 %v3681
      %v3750 = vunpack.c.l.b16 %v3682
      %v3751 = vunpack.c.l.b16 %v3683
      %v3752 = vunpack.c.l.b16 %v3684
      %v3753 = vunpack.c.l.b16 %v3685
      %v3754 = vunpack.c.l.b16 %v3686
      %v3755 = vunpack.c.l.b16 %v3687
      %v3756 = vunpack.c.l.b16 %v3688
      %v3757 = vunpack.c.l.b16 %v3689
      %v3758 = vunpack.c.l.b16 %v3690
      %v3759 = vunpack.c.l.b16 %v3691
      %v3760 = vunpack.c.l.b16 %v3692
      %v3761 = vunpack.c.l.b16 %v3693
      %v3762 = vunpack.c.l.b16 %v3694
      %v3763 = vunpack.c.l.b16 %v3695
      %v3764 = vunpack.c.l.b16 %v3696
      %v3765 = vunpack.c.l.b16 %v3697
      %v3766 = vunpack.c.l.b16 %v3698
      %v3767 = vunpack.c.l.b16 %v3699
      %v3768 = vunpack.c.l.b16 %v3700
      %v3769 = vunpack.c.l.b16 %v3701
      %v3770 = vunpack.c.l.b16 %v3702
      %v3771 = vunpack.c.l.b16 %v3703
      %v3772 = vunpack.c.l.b16 %v3704
      %v3773 = vunpack.c.l.b16 %v3705
      %v3774 = vunpack.c.l.b16 %v3706
      %v3775 = vunpack.c.l.b16 %v3707
      %v3776 = vunpack.c.l.b16 %v3708
      %v3777 = vunpack.c.l.b16 %v3709
      %v3778 = vunpack.c.l.b16 %v3710
      %v3779 = vunpack.c.l.b16 %v3711
      %v3780 = vunpack.c.l.b16 %v3712
      %v3781 = vpack.c.b16 %v3750, %v3749
      %v3782 = vpack.c.b16 %v3752, %v3751
      %v3783 = vpack.c.b16 %v3754, %v3753
      %v3784 = vpack.c.b16 %v3756, %v3755
      %v3785 = vpack.c.b16 %v3758, %v3757
      %v3786 = vpack.c.b16 %v3760, %v3759
      %v3787 = vpack.c.b16 %v3762, %v3761
      %v3788 = vpack.c.b16 %v3764, %v3763
      %v3789 = vpack.c.b16 %v3766, %v3765
      %v3790 = vpack.c.b16 %v3768, %v3767
      %v3791 = vpack.c.b16 %v3770, %v3769
      %v3792 = vpack.c.b16 %v3772, %v3771
      %v3793 = vpack.c.b16 %v3774, %v3773
      %v3794 = vpack.c.b16 %v3776, %v3775
      %v3795 = vpack.c.b16 %v3778, %v3777
      %v3796 = vpack.c.b16 %v3780, %v3779
      %3813 = vmatpush.bf16.msra.mxu0 %v3788
      %3814 = vmatpush.bf16.msra.mxu0 %v3787
      %3815 = vmatpush.bf16.msra.mxu0 %v3786
      %3816 = vmatpush.bf16.msra.mxu0 %v3785
      %3817 = vmatpush.bf16.msra.mxu0 %v3784
      %3818 = vmatpush.bf16.msra.mxu0 %v3783
      %3819 = vmatpush.bf16.msra.mxu0 %v3782
      %3820 = vmatpush.bf16.msra.mxu0 %v3781
      %3821 = vmatmul.bf16.gmra.mxu0 %v3673
      %v3822 = vpop.f32.mrf.mxu0
      %v3823 = vadd.f32 %v3715, %v3822
      %v3824 = vpop.f32.mrf.mxu0
      %v3825 = vadd.f32 %v3715, %v3824
      %3826 = vmatmul.bf16.gmra.mxu0 %v3675
      %v3827 = vpop.f32.mrf.mxu0
      %v3828 = vadd.f32 %v3715, %v3827
      %v3829 = vpop.f32.mrf.mxu0
      %v3830 = vadd.f32 %v3715, %v3829
      %3831 = vmatmul.bf16.gmra.mxu0 %v3677
      %v3832 = vpop.f32.mrf.mxu0
      %v3833 = vadd.f32 %v3715, %v3832
      %v3834 = vpop.f32.mrf.mxu0
      %v3835 = vadd.f32 %v3715, %v3834
      %3836 = vmatmul.bf16.gmra.mxu0 %v3679
      %v3837 = vpop.f32.mrf.mxu0
      %v3838 = vadd.f32 %v3715, %v3837
      %v3839 = vpop.f32.mrf.mxu0
      %v3840 = vadd.f32 %v3715, %v3839
      %3841 = vdwg.mxu0
      %3842 = vmatpush.bf16.msra.mxu0 %v3796
      %3843 = vmatpush.bf16.msra.mxu0 %v3795
      %3844 = vmatpush.bf16.msra.mxu0 %v3794
      %3845 = vmatpush.bf16.msra.mxu0 %v3793
      %3846 = vmatpush.bf16.msra.mxu0 %v3792
      %3847 = vmatpush.bf16.msra.mxu0 %v3791
      %3848 = vmatpush.bf16.msra.mxu0 %v3790
      %3849 = vmatpush.bf16.msra.mxu0 %v3789
      %3850 = vmatmul.bf16.gmra.mxu0 %v3674
      %v3851 = vpop.f32.mrf.mxu0
      %v3852 = vadd.f32 %v3823, %v3851
      %v3853 = vpop.f32.mrf.mxu0
      %v3854 = vadd.f32 %v3825, %v3853
      %3855 = vmatmul.bf16.gmra.mxu0 %v3676
      %v3856 = vpop.f32.mrf.mxu0
      %v3857 = vadd.f32 %v3828, %v3856
      %v3858 = vpop.f32.mrf.mxu0
      %v3859 = vadd.f32 %v3830, %v3858
      %3860 = vmatmul.bf16.gmra.mxu0 %v3678
      %v3861 = vpop.f32.mrf.mxu0
      %v3862 = vadd.f32 %v3833, %v3861
      %v3863 = vpop.f32.mrf.mxu0
      %v3864 = vadd.f32 %v3835, %v3863
      %3865 = vmatmul.bf16.gmra.mxu0 %v3680
      %v3866 = vpop.f32.mrf.mxu0
      %v3867 = vadd.f32 %v3838, %v3866
      %v3868 = vpop.f32.mrf.mxu0
      %v3869 = vadd.f32 %v3840, %v3868
      %3870 = vdwg.mxu0
      %v3871 = vadd.f32 %v2650, %v3852
      %v3872 = vadd.f32 %v2651, %v3854
      %v3873 = vadd.f32 %v2652, %v3857
      %v3874 = vadd.f32 %v2653, %v3859
      %v3875 = vadd.f32 %v2654, %v3862
      %v3876 = vadd.f32 %v2655, %v3864
      %v3877 = vadd.f32 %v2656, %v3867
      %v3878 = vadd.f32 %v2657, %v3869
      %3879 = vst.msk [vmem:[%s354] sm:$0xff] %vm2599, %v3871
      %3880 = vst.msk [vmem:[%s354 + $0x8] sm:$0xff] %vm2599, %v3872
      %3881 = vst.msk [vmem:[%s354 + $0x10] sm:$0xff] %vm2599, %v3873
      %3882 = vst.msk [vmem:[%s354 + $0x18] sm:$0xff] %vm2599, %v3874
      %3883 = vst.msk [vmem:[%s354 + $0x20] sm:$0xff] %vm2599, %v3875
      %3884 = vst.msk [vmem:[%s354 + $0x28] sm:$0xff] %vm2599, %v3876
      %3885 = vst.msk [vmem:[%s354 + $0x30] sm:$0xff] %vm2599, %v3877
      %3886 = vst.msk [vmem:[%s354 + $0x38] sm:$0xff] %vm2599, %v3878
      %s3887 = smul.u32 8, %s25
      %p3888 = scmp.lt.s32.totalorder %s24, 1
      %s3889 = scalar_select %p3888, %s24, 1
      %p3890 = scmp.lt.s32.totalorder %s3887, 15
      %s3891 = scalar_select %p3890, %s3887, 15
      %s3892 = smul.addr %s3889, 16
      %s3893 = sadd.s32 %s3891, %s3892
      %s3894 = smul.addr %s3893, 8
      %s3895 = scalar_lea.vmem %s9, %s3894
      // Predicated region
      $region61: #{tpu_custom_call.1} parent=55 // pred_check
        %p3896 = pneg %p246
      $region62: #{tpu_custom_call.1} parent=55 // pred_check_branch
        %3898 = sbr.rel (%p3896) target = $region64
      $region63: #{tpu_custom_call.1} parent=55 // pred_region
        %s3899 = smul.u32 8, %s25
      $region64: #{tpu_custom_call.1} parent=55 // pred_fallthru
        _
    $region56: #{tpu_custom_call.1} parent=5 // pred_fallthru
      _
    %p3900 = scmp.le.s32.totalorder 2, %s15
    // Predicated region
    $region65: #{tpu_custom_call.1} parent=5 // pred_check
      %p3901 = pneg %p3900
    $region66: #{tpu_custom_call.1} parent=5 // pred_check_branch
      %3903 = sbr.rel (%p3901) target = $region68
    $region67: #{tpu_custom_call.1} parent=5 // pred_region
      %s3904 = ssub.s32 %s15, 2
      // Predicated region
      $region69: #{tpu_custom_call.1} parent=67 // pred_check
        %p3905 = pneg %p252
      $region70: #{tpu_custom_call.1} parent=67 // pred_check_branch
        %3907 = sbr.rel (%p3905) target = $region72
      $region71: #{tpu_custom_call.1} parent=67 // pred_region
        %s3908 = smul.u32 8, %s27
        %p3909 = scmp.lt.s32.totalorder %s26, 1
        %s3910 = scalar_select %p3909, %s26, 1
        %p3911 = scmp.lt.s32.totalorder %s3908, 15
        %s3912 = scalar_select %p3911, %s3908, 15
        %s3913 = smul.addr %s3910, 16
        %s3914 = sadd.s32 %s3912, %s3913
        %s3915 = smul.addr %s3914, 8
        %s3916 = scalar_lea.vmem %s9, %s3915
      $region72: #{tpu_custom_call.1} parent=67 // pred_fallthru
        _
    $region68: #{tpu_custom_call.1} parent=5 // pred_fallthru
      _
  $region6: #{tpu_custom_call.1} parent=0 // loop_footer
    %s19 = sadd.s32 1, %s15
  $region7: #{tpu_custom_call.1} parent=0 // loop_footer_branch
    %14 = sbr.rel target = $region3
  $region8: #{tpu_custom_call.1} parent=0 // loop_exit
    _

</llo_original>
